<compile_context>
chip_gen: v7x
topology: tpu7x:2x2x1
jax: 0.10.0
libtpu: 0.0.40
codegen_flags: <defaults>
</compile_context>

<pallas_src>
import functools
import math

import jax
import jax.numpy as jnp
from jax.experimental import pallas as pl
from jax.experimental.pallas import tpu as pltpu

D_MODEL = 32
NHEAD = 4
DIM_HEAD = D_MODEL // NHEAD
DIM_FF = 64
NUM_LAYERS = 2
EPS = 1e-5  # PyTorch nn.LayerNorm default

# Packed-operand layout constants.
_MROWS = 4 * D_MODEL + DIM_FF       # rows per layer in the matrix slab (wqk,wv,wo,w1,w2)
_VROWS = 9                          # rows per layer in the vector slab
_VWIDTH = max(2 * D_MODEL, DIM_FF)  # lane width of both slabs (= 64)


# ----------------------------------------------------------------------------
# In-kernel helpers
# ----------------------------------------------------------------------------
def _layernorm(x, gamma, beta):
    # x: (N, D) fp32 ; gamma/beta: (1, D)
    mu = jnp.mean(x, axis=-1, keepdims=True)
    var = jnp.mean((x - mu) ** 2, axis=-1, keepdims=True)
    return (x - mu) * jax.lax.rsqrt(var + EPS) * gamma + beta


# ----------------------------------------------------------------------------
# Fused encoder kernel: whole batch, all layers, one invocation
# ----------------------------------------------------------------------------
def _encoder_kernel(src_ref, pos_ref, mats_ref, vecs_ref, o_ref, *,
                    num_layers, nhead, batch, apply_final_norm):
    BS, D = src_ref.shape            # (B*S, D), token row r = s*B + b (s-major)
    F = DIM_FF
    dh = D // nhead
    scale = 1.0 / math.sqrt(dh)

    x = src_ref[...].astype(jnp.float32)
    pos = pos_ref[...].astype(jnp.float32)
    vecs = vecs_ref[...]             # (num_layers*_VROWS + 2, _VWIDTH)

    # Constant additive mask confining attention to tokens of the same batch element
    # (token row r belongs to batch r % B).  Computed once, reused by every layer.
    row_b = jax.lax.broadcasted_iota(jnp.int32, (BS, BS), 0) % batch
    col_b = jax.lax.broadcasted_iota(jnp.int32, (BS, BS), 1) % batch
    xbatch_mask = jnp.where(row_b == col_b, 0.0, -1e30).astype(jnp.float32)
    # TODO(synk): attn_mask / src_key_padding_mask would be folded in here as extra
    # additive terms; they are None for this module configuration.

    for l in range(num_layers):      # static unroll; all weights resident in VMEM
        slab = mats_ref[l]                        # (_MROWS, 2D)
        wqk = slab[0:D, :]                        # (D, 2D)  = [Wq^T | Wk^T]
        wv = slab[D:2 * D, 0:D]                   # (D, D)   = Wv^T
        wo = slab[2 * D:3 * D, 0:D]               # (D, D)   = Wo^T
        w1 = slab[3 * D:4 * D, 0:F]               # (D, F)   = W1^T
        w2 = slab[4 * D:4 * D + F, 0:D]           # (F, D)   = W2^T
        vb = l * _VROWS
        bqk = vecs[vb + 0:vb + 1, 0:2 * D]        # (1, 2D)
        bv = vecs[vb + 1:vb + 2, 0:D]
        bo = vecs[vb + 2:vb + 3, 0:D]
        b1 = vecs[vb + 3:vb + 4, 0:F]
        b2 = vecs[vb + 4:vb + 5, 0:D]
        ln1g = vecs[vb + 5:vb + 6, 0:D]
        ln1b = vecs[vb + 6:vb + 7, 0:D]
        ln2g = vecs[vb + 7:vb + 8, 0:D]
        ln2b = vecs[vb + 8:vb + 9, 0:D]

        # ----- self-attention: q = k = x + pos, v = x (row-major, lane-dense) ------
        qk = jnp.dot(x + pos, wqk, preferred_element_type=jnp.float32) + bqk  # (BS,2D)
        v = jnp.dot(x, wv, preferred_element_type=jnp.float32) + bv           # (BS, D)

        # Phase 1: all head score matmuls (independent chains -> scheduler co-issues).
        scores = [
            jnp.dot(qk[:, h * dh:(h + 1) * dh],
                    qk[:, D + h * dh:D + (h + 1) * dh].T,
                    preferred_element_type=jnp.float32) * scale + xbatch_mask
            for h in range(nhead)
        ]
        # Phase 2: all softmaxes (exact normalization).
        probs = []
        for s in scores:
            s = s - jnp.max(s, axis=-1, keepdims=True)
            e = jnp.exp(s)
            probs.append(e / jnp.sum(e, axis=-1, keepdims=True))
        # Phase 3: PV matmuls + per-head output projection, accumulated (no concat).
        attn = jnp.zeros((BS, D), jnp.float32)
        for h in range(nhead):
            ctx = jnp.dot(probs[h], v[:, h * dh:(h + 1) * dh],
                          preferred_element_type=jnp.float32)                 # (BS,dh)
            attn = attn + jnp.dot(ctx, wo[h * dh:(h + 1) * dh, :],
                                  preferred_element_type=jnp.float32)         # (BS, D)
        attn = attn + bo
        x = _layernorm(x + attn, ln1g, ln1b)

        # ----- feed-forward ---------------------------------------------------------
        h1 = jnp.maximum(jnp.dot(x, w1, preferred_element_type=jnp.float32) + b1, 0.0)
        y = jnp.dot(h1, w2, preferred_element_type=jnp.float32) + b2
        x = _layernorm(x + y, ln2g, ln2b)

    if apply_final_norm:
        fr = num_layers * _VROWS
        x = _layernorm(x, vecs[fr:fr + 1, 0:D], vecs[fr + 1:fr + 2, 0:D])

    o_ref[...] = x.astype(o_ref.dtype)


# ----------------------------------------------------------------------------
# Host-side parameter packing + pallas_call wrapper
# ----------------------------------------------------------------------------
def _pack_params(params, final_norm):
    """Pack all layer weights into one matrix slab and one vector slab (2 DMAs)."""
    D, F = D_MODEL, DIM_FF
    mats = []
    for p in params:
        slab = jnp.zeros((_MROWS, 2 * D), jnp.float32)
        slab = slab.at[0:D, :].set(jnp.concatenate([p["wq"].T, p["wk"].T], axis=1))
        slab = slab.at[D:2 * D, 0:D].set(p["wv"].T)
        slab = slab.at[2 * D:3 * D, 0:D].set(p["wo"].T)
        slab = slab.at[3 * D:4 * D, 0:F].set(p["w1"].T)
        slab = slab.at[4 * D:4 * D + F, 0:D].set(p["w2"].T)
        mats.append(slab)
    mats = jnp.stack(mats)                                    # (L, _MROWS, 2D)

    def _row(vec):
        v = jnp.asarray(vec, jnp.float32).reshape(-1)
        return jnp.zeros((_VWIDTH,), jnp.float32).at[:v.shape[0]].set(v)

    rows = []
    for p in params:
        rows += [
            _row(jnp.concatenate([p["bq"].reshape(-1), p["bk"].reshape(-1)])),
            _row(p["bv"]), _row(p["bo"]), _row(p["b1"]), _row(p["b2"]),
            _row(p["ln1_g"]), _row(p["ln1_b"]), _row(p["ln2_g"]), _row(p["ln2_b"]),
        ]
    if final_norm is not None:
        rows += [_row(final_norm[0]), _row(final_norm[1])]
    else:
        rows += [_row(jnp.ones((D,), jnp.float32)),
                 _row(jnp.zeros((D,), jnp.float32))]
    vecs = jnp.stack(rows)                                    # (L*_VROWS + 2, _VWIDTH)
    return mats, vecs


def transformer_encoder_forward(src_sbd, pos_sbd, params, final_norm=None):
    """src/pos: (S, B, D) sequence-first, matching the PyTorch module."""
    S, B, D = src_sbd.shape
    mats, vecs = _pack_params(params, final_norm)

    # Free, contiguous reshapes only (no transposes / extra HBM round trips).
    src2d = src_sbd.reshape(S * B, D)
    pos2d = pos_sbd.reshape(S * B, D)

    kernel = functools.partial(
        _encoder_kernel, num_layers=len(params), nhead=NHEAD, batch=B,
        apply_final_norm=final_norm is not None)

    vmem = functools.partial(pl.BlockSpec, memory_space=pltpu.MemorySpace.VMEM)
    out2d = pl.pallas_call(
        kernel,
        out_shape=jax.ShapeDtypeStruct((S * B, D), src_sbd.dtype),
        in_specs=[vmem(), vmem(), vmem(), vmem()],
        out_specs=vmem(),
    )(src2d, pos2d, mats, vecs)
    return out2d.reshape(S, B, D)


# ----------------------------------------------------------------------------
# Deterministic parameter init + pure-JAX reference for verification
# ----------------------------------------------------------------------------
def init_params(key):
    def n(k, shape, s=0.1):
        return (s * jax.random.normal(k, shape)).astype(jnp.float32)

    layers = []
    for i in range(NUM_LAYERS):
        ks = jax.random.split(jax.random.fold_in(key, i), 16)
        layers.append(dict(
            wq=n(ks[0], (D_MODEL, D_MODEL)), bq=n(ks[1], (1, D_MODEL)),
            wk=n(ks[2], (D_MODEL, D_MODEL)), bk=n(ks[3], (1, D_MODEL)),
            wv=n(ks[4], (D_MODEL, D_MODEL)), bv=n(ks[5], (1, D_MODEL)),
            wo=n(ks[6], (D_MODEL, D_MODEL)), bo=n(ks[7], (1, D_MODEL)),
            w1=n(ks[8], (DIM_FF, D_MODEL)), b1=n(ks[9], (1, DIM_FF)),
            w2=n(ks[10], (D_MODEL, DIM_FF)), b2=n(ks[11], (1, D_MODEL)),
            ln1_g=1.0 + n(ks[12], (1, D_MODEL)), ln1_b=n(ks[13], (1, D_MODEL)),
            ln2_g=1.0 + n(ks[14], (1, D_MODEL)), ln2_b=n(ks[15], (1, D_MODEL)),
        ))
    kf1, kf2 = jax.random.split(jax.random.fold_in(key, 999))
    final_norm = (1.0 + n(kf1, (1, D_MODEL)), n(kf2, (1, D_MODEL)))
    return layers, final_norm


def _ref_layernorm(x, g, b):
    mu = jnp.mean(x, axis=-1, keepdims=True)
    var = jnp.mean((x - mu) ** 2, axis=-1, keepdims=True)
    return (x - mu) / jnp.sqrt(var + EPS) * g + b


def reference_forward(src_sbd, pos_sbd, params, final_norm):
    x = jnp.transpose(src_sbd, (1, 0, 2)).astype(jnp.float32)   # (B,S,D)
    pos = jnp.transpose(pos_sbd, (1, 0, 2)).astype(jnp.float32)
    B, S, D = x.shape
    dh = D // NHEAD
    for p in params:
        qk = x + pos
        q = qk @ p["wq"].T + p["bq"]
        k = qk @ p["wk"].T + p["bk"]
        v = x @ p["wv"].T + p["bv"]
        q = q.reshape(B, S, NHEAD, dh).transpose(0, 2, 1, 3)
        k = k.reshape(B, S, NHEAD, dh).transpose(0, 2, 1, 3)
        v = v.reshape(B, S, NHEAD, dh).transpose(0, 2, 1, 3)
        s = jnp.einsum("bhqd,bhkd->bhqk", q, k) / (dh ** 0.5)
        pattn = jax.nn.softmax(s, axis=-1)
        o = jnp.einsum("bhqk,bhkd->bhqd", pattn, v)
        o = o.transpose(0, 2, 1, 3).reshape(B, S, D) @ p["wo"].T + p["bo"]
        x = _ref_layernorm(x + o, p["ln1_g"], p["ln1_b"])
        h = jnp.maximum(x @ p["w1"].T + p["b1"], 0.0)
        y = h @ p["w2"].T + p["b2"]
        x = _ref_layernorm(x + y, p["ln2_g"], p["ln2_b"])
    if final_norm is not None:
        g, b = final_norm
        x = _ref_layernorm(x, g, b)
    return jnp.transpose(x, (1, 0, 2))


# ----------------------------------------------------------------------------
if __name__ == "__main__":
    key = jax.random.PRNGKey(0)
    k_src, k_pos, k_par = jax.random.split(key, 3)

    S, B = 8, 2
    src = jax.random.normal(k_src, (S, B, D_MODEL), jnp.float32)
    pos = jax.random.normal(k_pos, (S, B, D_MODEL), jnp.float32)

    params, final_norm = init_params(k_par)

    out = jax.block_until_ready(
        transformer_encoder_forward(src, pos, params, final_norm))
    ref = jax.block_until_ready(reference_forward(src, pos, params, final_norm))

    assert out.shape == (S, B, D_MODEL)
    err = float(jnp.max(jnp.abs(out - ref)))
    assert err < 1e-3, f"mismatch vs pure-JAX reference: {err}"

    print("KERNEL_OK")
</pallas_src>

<mosaic_0001>
module attributes {stable_mosaic.version = 11 : i64} {
  func.func @_encoder_kernel(%arg0: memref<16x32xf32, #tpu.memory_space<vmem>>, %arg1: memref<16x32xf32, #tpu.memory_space<vmem>>, %arg2: memref<2x192x64xf32, #tpu.memory_space<vmem>>, %arg3: memref<20x64xf32, #tpu.memory_space<vmem>>, %arg4: memref<16x32xf32, #tpu.memory_space<vmem>>) attributes {dimension_semantics = [], scalar_prefetch = 0 : i64, scratch_operands = 0 : i64, tpu.core_type = #tpu.core_type<tc>} {
    %c0 = arith.constant 0 : index
    %c0_0 = arith.constant 0 : index
    %0 = vector.load %arg0[%c0, %c0_0] : memref<16x32xf32, #tpu.memory_space<vmem>>, vector<16x32xf32>
    %c0_1 = arith.constant 0 : index
    %c0_2 = arith.constant 0 : index
    %1 = vector.load %arg1[%c0_1, %c0_2] : memref<16x32xf32, #tpu.memory_space<vmem>>, vector<16x32xf32>
    %c0_3 = arith.constant 0 : index
    %c0_4 = arith.constant 0 : index
    %2 = vector.load %arg3[%c0_3, %c0_4] : memref<20x64xf32, #tpu.memory_space<vmem>>, vector<20x64xf32>
    %3 = tpu.iota {dimensions = array<i32: 0>} : vector<16x16xi32>
    %c2_i32 = arith.constant 2 : i32
    %c0_i32 = arith.constant 0 : i32
    %4 = arith.cmpi eq, %c2_i32, %c0_i32 : i32
    %c1_i32 = arith.constant 1 : i32
    %5 = arith.select %4, %c1_i32, %c2_i32 : i32
    %6 = vector.broadcast %5 : i32 to vector<16x16xi32>
    %7 = arith.remsi %3, %6 : vector<16x16xi32>
    %c0_i32_5 = arith.constant 0 : i32
    %8 = vector.broadcast %c0_i32_5 : i32 to vector<16x16xi32>
    %9 = arith.cmpi ne, %7, %8 : vector<16x16xi32>
    %c0_i32_6 = arith.constant 0 : i32
    %10 = vector.broadcast %c0_i32_6 : i32 to vector<16x16xi32>
    %11 = arith.cmpi slt, %7, %10 : vector<16x16xi32>
    %c0_i32_7 = arith.constant 0 : i32
    %12 = arith.cmpi slt, %5, %c0_i32_7 : i32
    %13 = vector.broadcast %12 : i1 to vector<16x16xi1>
    %14 = vector.broadcast %13 : vector<16x16xi1> to vector<16x16xi1>
    %15 = arith.xori %11, %14 : vector<16x16xi1>
    %16 = arith.andi %15, %9 : vector<16x16xi1>
    %17 = vector.broadcast %5 : i32 to vector<16x16xi32>
    %18 = arith.addi %7, %17 : vector<16x16xi32>
    %19 = arith.select %16, %18, %7 : vector<16x16xi1>, vector<16x16xi32>
    %20 = tpu.iota {dimensions = array<i32: 1>} : vector<16x16xi32>
    %c2_i32_8 = arith.constant 2 : i32
    %c0_i32_9 = arith.constant 0 : i32
    %21 = arith.cmpi eq, %c2_i32_8, %c0_i32_9 : i32
    %c1_i32_10 = arith.constant 1 : i32
    %22 = arith.select %21, %c1_i32_10, %c2_i32_8 : i32
    %23 = vector.broadcast %22 : i32 to vector<16x16xi32>
    %24 = arith.remsi %20, %23 : vector<16x16xi32>
    %c0_i32_11 = arith.constant 0 : i32
    %25 = vector.broadcast %c0_i32_11 : i32 to vector<16x16xi32>
    %26 = arith.cmpi ne, %24, %25 : vector<16x16xi32>
    %c0_i32_12 = arith.constant 0 : i32
    %27 = vector.broadcast %c0_i32_12 : i32 to vector<16x16xi32>
    %28 = arith.cmpi slt, %24, %27 : vector<16x16xi32>
    %c0_i32_13 = arith.constant 0 : i32
    %29 = arith.cmpi slt, %22, %c0_i32_13 : i32
    %30 = vector.broadcast %29 : i1 to vector<16x16xi1>
    %31 = vector.broadcast %30 : vector<16x16xi1> to vector<16x16xi1>
    %32 = arith.xori %28, %31 : vector<16x16xi1>
    %33 = arith.andi %32, %26 : vector<16x16xi1>
    %34 = vector.broadcast %22 : i32 to vector<16x16xi32>
    %35 = arith.addi %24, %34 : vector<16x16xi32>
    %36 = arith.select %33, %35, %24 : vector<16x16xi1>, vector<16x16xi32>
    %37 = arith.cmpi eq, %19, %36 : vector<16x16xi32>
    %cst = arith.constant 0.000000e+00 : f32
    %cst_14 = arith.constant -1.000000e+30 : f32
    %38 = vector.broadcast %cst : f32 to vector<16x16xf32>
    %39 = vector.broadcast %cst_14 : f32 to vector<16x16xf32>
    %40 = arith.select %37, %38, %39 : vector<16x16xi1>, vector<16x16xf32>
    %c0_15 = arith.constant 0 : index
    %c0_16 = arith.constant 0 : index
    %c0_17 = arith.constant 0 : index
    %41 = vector.load %arg2[%c0_15, %c0_16, %c0_17] : memref<2x192x64xf32, #tpu.memory_space<vmem>>, vector<1x192x64xf32>
    %42 = vector.shape_cast %41 : vector<1x192x64xf32> to vector<192x64xf32>
    %43 = vector.extract_strided_slice %42 {offsets = [0, 0], sizes = [32, 64], strides = [1, 1]} : vector<192x64xf32> to vector<32x64xf32>
    %44 = vector.extract_strided_slice %42 {offsets = [32, 0], sizes = [32, 32], strides = [1, 1]} : vector<192x64xf32> to vector<32x32xf32>
    %45 = vector.extract_strided_slice %42 {offsets = [64, 0], sizes = [32, 32], strides = [1, 1]} : vector<192x64xf32> to vector<32x32xf32>
    %46 = vector.extract_strided_slice %42 {offsets = [96, 0], sizes = [32, 64], strides = [1, 1]} : vector<192x64xf32> to vector<32x64xf32>
    %47 = vector.extract_strided_slice %42 {offsets = [128, 0], sizes = [64, 32], strides = [1, 1]} : vector<192x64xf32> to vector<64x32xf32>
    %48 = vector.extract_strided_slice %2 {offsets = [0, 0], sizes = [1, 64], strides = [1, 1]} : vector<20x64xf32> to vector<1x64xf32>
    %49 = vector.extract_strided_slice %2 {offsets = [1, 0], sizes = [1, 32], strides = [1, 1]} : vector<20x64xf32> to vector<1x32xf32>
    %50 = vector.extract_strided_slice %2 {offsets = [2, 0], sizes = [1, 32], strides = [1, 1]} : vector<20x64xf32> to vector<1x32xf32>
    %51 = vector.extract_strided_slice %2 {offsets = [3, 0], sizes = [1, 64], strides = [1, 1]} : vector<20x64xf32> to vector<1x64xf32>
    %52 = vector.extract_strided_slice %2 {offsets = [4, 0], sizes = [1, 32], strides = [1, 1]} : vector<20x64xf32> to vector<1x32xf32>
    %53 = vector.extract_strided_slice %2 {offsets = [5, 0], sizes = [1, 32], strides = [1, 1]} : vector<20x64xf32> to vector<1x32xf32>
    %54 = vector.extract_strided_slice %2 {offsets = [6, 0], sizes = [1, 32], strides = [1, 1]} : vector<20x64xf32> to vector<1x32xf32>
    %55 = vector.extract_strided_slice %2 {offsets = [7, 0], sizes = [1, 32], strides = [1, 1]} : vector<20x64xf32> to vector<1x32xf32>
    %56 = vector.extract_strided_slice %2 {offsets = [8, 0], sizes = [1, 32], strides = [1, 1]} : vector<20x64xf32> to vector<1x32xf32>
    %57 = arith.addf %0, %1 : vector<16x32xf32>
    %cst_18 = arith.constant dense<0.000000e+00> : vector<16x64xf32>
    %58 = tpu.matmul %57, %43, %cst_18 {dimension_numbers = #tpu.dot_dimension_numbers<[1], [0], [0], [1], [0, 0, 1, 1], [], []>} : vector<16x32xf32>, vector<32x64xf32>, vector<16x64xf32> -> vector<16x64xf32>
    %59 = vector.broadcast %48 : vector<1x64xf32> to vector<16x64xf32>
    %60 = arith.addf %58, %59 : vector<16x64xf32>
    %cst_19 = arith.constant dense<0.000000e+00> : vector<16x32xf32>
    %61 = tpu.matmul %0, %44, %cst_19 {dimension_numbers = #tpu.dot_dimension_numbers<[1], [0], [0], [1], [0, 0, 1, 1], [], []>} : vector<16x32xf32>, vector<32x32xf32>, vector<16x32xf32> -> vector<16x32xf32>
    %62 = vector.broadcast %49 : vector<1x32xf32> to vector<16x32xf32>
    %63 = arith.addf %61, %62 : vector<16x32xf32>
    %64 = vector.extract_strided_slice %60 {offsets = [0, 0], sizes = [16, 8], strides = [1, 1]} : vector<16x64xf32> to vector<16x8xf32>
    %65 = vector.extract_strided_slice %60 {offsets = [0, 32], sizes = [16, 8], strides = [1, 1]} : vector<16x64xf32> to vector<16x8xf32>
    %66 = tpu.transpose %65, [1, 0] : vector<16x8xf32> -> vector<8x16xf32>
    %cst_20 = arith.constant dense<0.000000e+00> : vector<16x16xf32>
    %67 = tpu.matmul %64, %66, %cst_20 {dimension_numbers = #tpu.dot_dimension_numbers<[1], [0], [0], [1], [0, 0, 1, 1], [], []>} : vector<16x8xf32>, vector<8x16xf32>, vector<16x16xf32> -> vector<16x16xf32>
    %cst_21 = arith.constant 0.353553385 : f32
    %68 = vector.broadcast %cst_21 : f32 to vector<16x16xf32>
    %69 = arith.mulf %67, %68 : vector<16x16xf32>
    %70 = arith.addf %69, %40 : vector<16x16xf32>
    %71 = vector.extract_strided_slice %60 {offsets = [0, 8], sizes = [16, 8], strides = [1, 1]} : vector<16x64xf32> to vector<16x8xf32>
    %72 = vector.extract_strided_slice %60 {offsets = [0, 40], sizes = [16, 8], strides = [1, 1]} : vector<16x64xf32> to vector<16x8xf32>
    %73 = tpu.transpose %72, [1, 0] : vector<16x8xf32> -> vector<8x16xf32>
    %cst_22 = arith.constant dense<0.000000e+00> : vector<16x16xf32>
    %74 = tpu.matmul %71, %73, %cst_22 {dimension_numbers = #tpu.dot_dimension_numbers<[1], [0], [0], [1], [0, 0, 1, 1], [], []>} : vector<16x8xf32>, vector<8x16xf32>, vector<16x16xf32> -> vector<16x16xf32>
    %cst_23 = arith.constant 0.353553385 : f32
    %75 = vector.broadcast %cst_23 : f32 to vector<16x16xf32>
    %76 = arith.mulf %74, %75 : vector<16x16xf32>
    %77 = arith.addf %76, %40 : vector<16x16xf32>
    %78 = vector.extract_strided_slice %60 {offsets = [0, 16], sizes = [16, 8], strides = [1, 1]} : vector<16x64xf32> to vector<16x8xf32>
    %79 = vector.extract_strided_slice %60 {offsets = [0, 48], sizes = [16, 8], strides = [1, 1]} : vector<16x64xf32> to vector<16x8xf32>
    %80 = tpu.transpose %79, [1, 0] : vector<16x8xf32> -> vector<8x16xf32>
    %cst_24 = arith.constant dense<0.000000e+00> : vector<16x16xf32>
    %81 = tpu.matmul %78, %80, %cst_24 {dimension_numbers = #tpu.dot_dimension_numbers<[1], [0], [0], [1], [0, 0, 1, 1], [], []>} : vector<16x8xf32>, vector<8x16xf32>, vector<16x16xf32> -> vector<16x16xf32>
    %cst_25 = arith.constant 0.353553385 : f32
    %82 = vector.broadcast %cst_25 : f32 to vector<16x16xf32>
    %83 = arith.mulf %81, %82 : vector<16x16xf32>
    %84 = arith.addf %83, %40 : vector<16x16xf32>
    %85 = vector.extract_strided_slice %60 {offsets = [0, 24], sizes = [16, 8], strides = [1, 1]} : vector<16x64xf32> to vector<16x8xf32>
    %86 = vector.extract_strided_slice %60 {offsets = [0, 56], sizes = [16, 8], strides = [1, 1]} : vector<16x64xf32> to vector<16x8xf32>
    %87 = tpu.transpose %86, [1, 0] : vector<16x8xf32> -> vector<8x16xf32>
    %cst_26 = arith.constant dense<0.000000e+00> : vector<16x16xf32>
    %88 = tpu.matmul %85, %87, %cst_26 {dimension_numbers = #tpu.dot_dimension_numbers<[1], [0], [0], [1], [0, 0, 1, 1], [], []>} : vector<16x8xf32>, vector<8x16xf32>, vector<16x16xf32> -> vector<16x16xf32>
    %cst_27 = arith.constant 0.353553385 : f32
    %89 = vector.broadcast %cst_27 : f32 to vector<16x16xf32>
    %90 = arith.mulf %88, %89 : vector<16x16xf32>
    %91 = arith.addf %90, %40 : vector<16x16xf32>
    %cst_28 = arith.constant dense<0xFF800000> : vector<16xf32>
    %92 = vector.multi_reduction <maximumf>, %70, %cst_28 [1] : vector<16x16xf32> to vector<16xf32>
    %93 = vector.shape_cast %92 : vector<16xf32> to vector<16x1xf32>
    %94 = vector.broadcast %93 : vector<16x1xf32> to vector<16x16xf32>
    %95 = arith.subf %70, %94 : vector<16x16xf32>
    %96 = math.exp %95 : vector<16x16xf32>
    %cst_29 = arith.constant dense<0.000000e+00> : vector<16xf32>
    %97 = vector.multi_reduction <add>, %96, %cst_29 [1] : vector<16x16xf32> to vector<16xf32>
    %98 = vector.shape_cast %97 : vector<16xf32> to vector<16x1xf32>
    %99 = vector.broadcast %98 : vector<16x1xf32> to vector<16x16xf32>
    %100 = arith.divf %96, %99 : vector<16x16xf32>
    %cst_30 = arith.constant dense<0xFF800000> : vector<16xf32>
    %101 = vector.multi_reduction <maximumf>, %77, %cst_30 [1] : vector<16x16xf32> to vector<16xf32>
    %102 = vector.shape_cast %101 : vector<16xf32> to vector<16x1xf32>
    %103 = vector.broadcast %102 : vector<16x1xf32> to vector<16x16xf32>
    %104 = arith.subf %77, %103 : vector<16x16xf32>
    %105 = math.exp %104 : vector<16x16xf32>
    %cst_31 = arith.constant dense<0.000000e+00> : vector<16xf32>
    %106 = vector.multi_reduction <add>, %105, %cst_31 [1] : vector<16x16xf32> to vector<16xf32>
    %107 = vector.shape_cast %106 : vector<16xf32> to vector<16x1xf32>
    %108 = vector.broadcast %107 : vector<16x1xf32> to vector<16x16xf32>
    %109 = arith.divf %105, %108 : vector<16x16xf32>
    %cst_32 = arith.constant dense<0xFF800000> : vector<16xf32>
    %110 = vector.multi_reduction <maximumf>, %84, %cst_32 [1] : vector<16x16xf32> to vector<16xf32>
    %111 = vector.shape_cast %110 : vector<16xf32> to vector<16x1xf32>
    %112 = vector.broadcast %111 : vector<16x1xf32> to vector<16x16xf32>
    %113 = arith.subf %84, %112 : vector<16x16xf32>
    %114 = math.exp %113 : vector<16x16xf32>
    %cst_33 = arith.constant dense<0.000000e+00> : vector<16xf32>
    %115 = vector.multi_reduction <add>, %114, %cst_33 [1] : vector<16x16xf32> to vector<16xf32>
    %116 = vector.shape_cast %115 : vector<16xf32> to vector<16x1xf32>
    %117 = vector.broadcast %116 : vector<16x1xf32> to vector<16x16xf32>
    %118 = arith.divf %114, %117 : vector<16x16xf32>
    %cst_34 = arith.constant dense<0xFF800000> : vector<16xf32>
    %119 = vector.multi_reduction <maximumf>, %91, %cst_34 [1] : vector<16x16xf32> to vector<16xf32>
    %120 = vector.shape_cast %119 : vector<16xf32> to vector<16x1xf32>
    %121 = vector.broadcast %120 : vector<16x1xf32> to vector<16x16xf32>
    %122 = arith.subf %91, %121 : vector<16x16xf32>
    %123 = math.exp %122 : vector<16x16xf32>
    %cst_35 = arith.constant dense<0.000000e+00> : vector<16xf32>
    %124 = vector.multi_reduction <add>, %123, %cst_35 [1] : vector<16x16xf32> to vector<16xf32>
    %125 = vector.shape_cast %124 : vector<16xf32> to vector<16x1xf32>
    %126 = vector.broadcast %125 : vector<16x1xf32> to vector<16x16xf32>
    %127 = arith.divf %123, %126 : vector<16x16xf32>
    %cst_36 = arith.constant 0.000000e+00 : f32
    %128 = vector.broadcast %cst_36 : f32 to vector<16x32xf32>
    %129 = vector.extract_strided_slice %63 {offsets = [0, 0], sizes = [16, 8], strides = [1, 1]} : vector<16x32xf32> to vector<16x8xf32>
    %cst_37 = arith.constant dense<0.000000e+00> : vector<16x8xf32>
    %130 = tpu.matmul %100, %129, %cst_37 {dimension_numbers = #tpu.dot_dimension_numbers<[1], [0], [0], [1], [0, 0, 1, 1], [], []>} : vector<16x16xf32>, vector<16x8xf32>, vector<16x8xf32> -> vector<16x8xf32>
    %131 = vector.extract_strided_slice %45 {offsets = [0, 0], sizes = [8, 32], strides = [1, 1]} : vector<32x32xf32> to vector<8x32xf32>
    %cst_38 = arith.constant dense<0.000000e+00> : vector<16x32xf32>
    %132 = tpu.matmul %130, %131, %cst_38 {dimension_numbers = #tpu.dot_dimension_numbers<[1], [0], [0], [1], [0, 0, 1, 1], [], []>} : vector<16x8xf32>, vector<8x32xf32>, vector<16x32xf32> -> vector<16x32xf32>
    %133 = arith.addf %128, %132 : vector<16x32xf32>
    %134 = vector.extract_strided_slice %63 {offsets = [0, 8], sizes = [16, 8], strides = [1, 1]} : vector<16x32xf32> to vector<16x8xf32>
    %cst_39 = arith.constant dense<0.000000e+00> : vector<16x8xf32>
    %135 = tpu.matmul %109, %134, %cst_39 {dimension_numbers = #tpu.dot_dimension_numbers<[1], [0], [0], [1], [0, 0, 1, 1], [], []>} : vector<16x16xf32>, vector<16x8xf32>, vector<16x8xf32> -> vector<16x8xf32>
    %136 = vector.extract_strided_slice %45 {offsets = [8, 0], sizes = [8, 32], strides = [1, 1]} : vector<32x32xf32> to vector<8x32xf32>
    %cst_40 = arith.constant dense<0.000000e+00> : vector<16x32xf32>
    %137 = tpu.matmul %135, %136, %cst_40 {dimension_numbers = #tpu.dot_dimension_numbers<[1], [0], [0], [1], [0, 0, 1, 1], [], []>} : vector<16x8xf32>, vector<8x32xf32>, vector<16x32xf32> -> vector<16x32xf32>
    %138 = arith.addf %133, %137 : vector<16x32xf32>
    %139 = vector.extract_strided_slice %63 {offsets = [0, 16], sizes = [16, 8], strides = [1, 1]} : vector<16x32xf32> to vector<16x8xf32>
    %cst_41 = arith.constant dense<0.000000e+00> : vector<16x8xf32>
    %140 = tpu.matmul %118, %139, %cst_41 {dimension_numbers = #tpu.dot_dimension_numbers<[1], [0], [0], [1], [0, 0, 1, 1], [], []>} : vector<16x16xf32>, vector<16x8xf32>, vector<16x8xf32> -> vector<16x8xf32>
    %141 = vector.extract_strided_slice %45 {offsets = [16, 0], sizes = [8, 32], strides = [1, 1]} : vector<32x32xf32> to vector<8x32xf32>
    %cst_42 = arith.constant dense<0.000000e+00> : vector<16x32xf32>
    %142 = tpu.matmul %140, %141, %cst_42 {dimension_numbers = #tpu.dot_dimension_numbers<[1], [0], [0], [1], [0, 0, 1, 1], [], []>} : vector<16x8xf32>, vector<8x32xf32>, vector<16x32xf32> -> vector<16x32xf32>
    %143 = arith.addf %138, %142 : vector<16x32xf32>
    %144 = vector.extract_strided_slice %63 {offsets = [0, 24], sizes = [16, 8], strides = [1, 1]} : vector<16x32xf32> to vector<16x8xf32>
    %cst_43 = arith.constant dense<0.000000e+00> : vector<16x8xf32>
    %145 = tpu.matmul %127, %144, %cst_43 {dimension_numbers = #tpu.dot_dimension_numbers<[1], [0], [0], [1], [0, 0, 1, 1], [], []>} : vector<16x16xf32>, vector<16x8xf32>, vector<16x8xf32> -> vector<16x8xf32>
    %146 = vector.extract_strided_slice %45 {offsets = [24, 0], sizes = [8, 32], strides = [1, 1]} : vector<32x32xf32> to vector<8x32xf32>
    %cst_44 = arith.constant dense<0.000000e+00> : vector<16x32xf32>
    %147 = tpu.matmul %145, %146, %cst_44 {dimension_numbers = #tpu.dot_dimension_numbers<[1], [0], [0], [1], [0, 0, 1, 1], [], []>} : vector<16x8xf32>, vector<8x32xf32>, vector<16x32xf32> -> vector<16x32xf32>
    %148 = arith.addf %143, %147 : vector<16x32xf32>
    %149 = vector.broadcast %50 : vector<1x32xf32> to vector<16x32xf32>
    %150 = arith.addf %148, %149 : vector<16x32xf32>
    %151 = arith.addf %0, %150 : vector<16x32xf32>
    %cst_45 = arith.constant dense<0.000000e+00> : vector<16xf32>
    %152 = vector.multi_reduction <add>, %151, %cst_45 [1] : vector<16x32xf32> to vector<16xf32>
    %153 = vector.shape_cast %152 : vector<16xf32> to vector<16x1xf32>
    %cst_46 = arith.constant 3.200000e+01 : f32
    %154 = vector.broadcast %cst_46 : f32 to vector<16x1xf32>
    %155 = arith.divf %153, %154 : vector<16x1xf32>
    %156 = vector.broadcast %155 : vector<16x1xf32> to vector<16x32xf32>
    %157 = arith.subf %151, %156 : vector<16x32xf32>
    %158 = arith.mulf %157, %157 : vector<16x32xf32>
    %cst_47 = arith.constant dense<0.000000e+00> : vector<16xf32>
    %159 = vector.multi_reduction <add>, %158, %cst_47 [1] : vector<16x32xf32> to vector<16xf32>
    %160 = vector.shape_cast %159 : vector<16xf32> to vector<16x1xf32>
    %cst_48 = arith.constant 3.200000e+01 : f32
    %161 = vector.broadcast %cst_48 : f32 to vector<16x1xf32>
    %162 = arith.divf %160, %161 : vector<16x1xf32>
    %163 = vector.broadcast %155 : vector<16x1xf32> to vector<16x32xf32>
    %164 = arith.subf %151, %163 : vector<16x32xf32>
    %cst_49 = arith.constant 9.99999974E-6 : f32
    %165 = vector.broadcast %cst_49 : f32 to vector<16x1xf32>
    %166 = arith.addf %162, %165 : vector<16x1xf32>
    %167 = math.rsqrt %166 : vector<16x1xf32>
    %168 = vector.broadcast %167 : vector<16x1xf32> to vector<16x32xf32>
    %169 = arith.mulf %164, %168 : vector<16x32xf32>
    %170 = vector.broadcast %53 : vector<1x32xf32> to vector<16x32xf32>
    %171 = arith.mulf %169, %170 : vector<16x32xf32>
    %172 = vector.broadcast %54 : vector<1x32xf32> to vector<16x32xf32>
    %173 = arith.addf %171, %172 : vector<16x32xf32>
    %cst_50 = arith.constant dense<0.000000e+00> : vector<16x64xf32>
    %174 = tpu.matmul %173, %46, %cst_50 {dimension_numbers = #tpu.dot_dimension_numbers<[1], [0], [0], [1], [0, 0, 1, 1], [], []>} : vector<16x32xf32>, vector<32x64xf32>, vector<16x64xf32> -> vector<16x64xf32>
    %175 = vector.broadcast %51 : vector<1x64xf32> to vector<16x64xf32>
    %176 = arith.addf %174, %175 : vector<16x64xf32>
    %cst_51 = arith.constant 0.000000e+00 : f32
    %177 = vector.broadcast %cst_51 : f32 to vector<16x64xf32>
    %178 = arith.maximumf %176, %177 : vector<16x64xf32>
    %cst_52 = arith.constant dense<0.000000e+00> : vector<16x32xf32>
    %179 = tpu.matmul %178, %47, %cst_52 {dimension_numbers = #tpu.dot_dimension_numbers<[1], [0], [0], [1], [0, 0, 1, 1], [], []>} : vector<16x64xf32>, vector<64x32xf32>, vector<16x32xf32> -> vector<16x32xf32>
    %180 = vector.broadcast %52 : vector<1x32xf32> to vector<16x32xf32>
    %181 = arith.addf %179, %180 : vector<16x32xf32>
    %182 = arith.addf %173, %181 : vector<16x32xf32>
    %cst_53 = arith.constant dense<0.000000e+00> : vector<16xf32>
    %183 = vector.multi_reduction <add>, %182, %cst_53 [1] : vector<16x32xf32> to vector<16xf32>
    %184 = vector.shape_cast %183 : vector<16xf32> to vector<16x1xf32>
    %cst_54 = arith.constant 3.200000e+01 : f32
    %185 = vector.broadcast %cst_54 : f32 to vector<16x1xf32>
    %186 = arith.divf %184, %185 : vector<16x1xf32>
    %187 = vector.broadcast %186 : vector<16x1xf32> to vector<16x32xf32>
    %188 = arith.subf %182, %187 : vector<16x32xf32>
    %189 = arith.mulf %188, %188 : vector<16x32xf32>
    %cst_55 = arith.constant dense<0.000000e+00> : vector<16xf32>
    %190 = vector.multi_reduction <add>, %189, %cst_55 [1] : vector<16x32xf32> to vector<16xf32>
    %191 = vector.shape_cast %190 : vector<16xf32> to vector<16x1xf32>
    %cst_56 = arith.constant 3.200000e+01 : f32
    %192 = vector.broadcast %cst_56 : f32 to vector<16x1xf32>
    %193 = arith.divf %191, %192 : vector<16x1xf32>
    %194 = vector.broadcast %186 : vector<16x1xf32> to vector<16x32xf32>
    %195 = arith.subf %182, %194 : vector<16x32xf32>
    %cst_57 = arith.constant 9.99999974E-6 : f32
    %196 = vector.broadcast %cst_57 : f32 to vector<16x1xf32>
    %197 = arith.addf %193, %196 : vector<16x1xf32>
    %198 = math.rsqrt %197 : vector<16x1xf32>
    %199 = vector.broadcast %198 : vector<16x1xf32> to vector<16x32xf32>
    %200 = arith.mulf %195, %199 : vector<16x32xf32>
    %201 = vector.broadcast %55 : vector<1x32xf32> to vector<16x32xf32>
    %202 = arith.mulf %200, %201 : vector<16x32xf32>
    %203 = vector.broadcast %56 : vector<1x32xf32> to vector<16x32xf32>
    %204 = arith.addf %202, %203 : vector<16x32xf32>
    %c1 = arith.constant 1 : index
    %c0_58 = arith.constant 0 : index
    %c0_59 = arith.constant 0 : index
    %205 = vector.load %arg2[%c1, %c0_58, %c0_59] : memref<2x192x64xf32, #tpu.memory_space<vmem>>, vector<1x192x64xf32>
    %206 = vector.shape_cast %205 : vector<1x192x64xf32> to vector<192x64xf32>
    %207 = vector.extract_strided_slice %206 {offsets = [0, 0], sizes = [32, 64], strides = [1, 1]} : vector<192x64xf32> to vector<32x64xf32>
    %208 = vector.extract_strided_slice %206 {offsets = [32, 0], sizes = [32, 32], strides = [1, 1]} : vector<192x64xf32> to vector<32x32xf32>
    %209 = vector.extract_strided_slice %206 {offsets = [64, 0], sizes = [32, 32], strides = [1, 1]} : vector<192x64xf32> to vector<32x32xf32>
    %210 = vector.extract_strided_slice %206 {offsets = [96, 0], sizes = [32, 64], strides = [1, 1]} : vector<192x64xf32> to vector<32x64xf32>
    %211 = vector.extract_strided_slice %206 {offsets = [128, 0], sizes = [64, 32], strides = [1, 1]} : vector<192x64xf32> to vector<64x32xf32>
    %212 = vector.extract_strided_slice %2 {offsets = [9, 0], sizes = [1, 64], strides = [1, 1]} : vector<20x64xf32> to vector<1x64xf32>
    %213 = vector.extract_strided_slice %2 {offsets = [10, 0], sizes = [1, 32], strides = [1, 1]} : vector<20x64xf32> to vector<1x32xf32>
    %214 = vector.extract_strided_slice %2 {offsets = [11, 0], sizes = [1, 32], strides = [1, 1]} : vector<20x64xf32> to vector<1x32xf32>
    %215 = vector.extract_strided_slice %2 {offsets = [12, 0], sizes = [1, 64], strides = [1, 1]} : vector<20x64xf32> to vector<1x64xf32>
    %216 = vector.extract_strided_slice %2 {offsets = [13, 0], sizes = [1, 32], strides = [1, 1]} : vector<20x64xf32> to vector<1x32xf32>
    %217 = vector.extract_strided_slice %2 {offsets = [14, 0], sizes = [1, 32], strides = [1, 1]} : vector<20x64xf32> to vector<1x32xf32>
    %218 = vector.extract_strided_slice %2 {offsets = [15, 0], sizes = [1, 32], strides = [1, 1]} : vector<20x64xf32> to vector<1x32xf32>
    %219 = vector.extract_strided_slice %2 {offsets = [16, 0], sizes = [1, 32], strides = [1, 1]} : vector<20x64xf32> to vector<1x32xf32>
    %220 = vector.extract_strided_slice %2 {offsets = [17, 0], sizes = [1, 32], strides = [1, 1]} : vector<20x64xf32> to vector<1x32xf32>
    %221 = arith.addf %204, %1 : vector<16x32xf32>
    %cst_60 = arith.constant dense<0.000000e+00> : vector<16x64xf32>
    %222 = tpu.matmul %221, %207, %cst_60 {dimension_numbers = #tpu.dot_dimension_numbers<[1], [0], [0], [1], [0, 0, 1, 1], [], []>} : vector<16x32xf32>, vector<32x64xf32>, vector<16x64xf32> -> vector<16x64xf32>
    %223 = vector.broadcast %212 : vector<1x64xf32> to vector<16x64xf32>
    %224 = arith.addf %222, %223 : vector<16x64xf32>
    %cst_61 = arith.constant dense<0.000000e+00> : vector<16x32xf32>
    %225 = tpu.matmul %204, %208, %cst_61 {dimension_numbers = #tpu.dot_dimension_numbers<[1], [0], [0], [1], [0, 0, 1, 1], [], []>} : vector<16x32xf32>, vector<32x32xf32>, vector<16x32xf32> -> vector<16x32xf32>
    %226 = vector.broadcast %213 : vector<1x32xf32> to vector<16x32xf32>
    %227 = arith.addf %225, %226 : vector<16x32xf32>
    %228 = vector.extract_strided_slice %224 {offsets = [0, 0], sizes = [16, 8], strides = [1, 1]} : vector<16x64xf32> to vector<16x8xf32>
    %229 = vector.extract_strided_slice %224 {offsets = [0, 32], sizes = [16, 8], strides = [1, 1]} : vector<16x64xf32> to vector<16x8xf32>
    %230 = tpu.transpose %229, [1, 0] : vector<16x8xf32> -> vector<8x16xf32>
    %cst_62 = arith.constant dense<0.000000e+00> : vector<16x16xf32>
    %231 = tpu.matmul %228, %230, %cst_62 {dimension_numbers = #tpu.dot_dimension_numbers<[1], [0], [0], [1], [0, 0, 1, 1], [], []>} : vector<16x8xf32>, vector<8x16xf32>, vector<16x16xf32> -> vector<16x16xf32>
    %cst_63 = arith.constant 0.353553385 : f32
    %232 = vector.broadcast %cst_63 : f32 to vector<16x16xf32>
    %233 = arith.mulf %231, %232 : vector<16x16xf32>
    %234 = arith.addf %233, %40 : vector<16x16xf32>
    %235 = vector.extract_strided_slice %224 {offsets = [0, 8], sizes = [16, 8], strides = [1, 1]} : vector<16x64xf32> to vector<16x8xf32>
    %236 = vector.extract_strided_slice %224 {offsets = [0, 40], sizes = [16, 8], strides = [1, 1]} : vector<16x64xf32> to vector<16x8xf32>
    %237 = tpu.transpose %236, [1, 0] : vector<16x8xf32> -> vector<8x16xf32>
    %cst_64 = arith.constant dense<0.000000e+00> : vector<16x16xf32>
    %238 = tpu.matmul %235, %237, %cst_64 {dimension_numbers = #tpu.dot_dimension_numbers<[1], [0], [0], [1], [0, 0, 1, 1], [], []>} : vector<16x8xf32>, vector<8x16xf32>, vector<16x16xf32> -> vector<16x16xf32>
    %cst_65 = arith.constant 0.353553385 : f32
    %239 = vector.broadcast %cst_65 : f32 to vector<16x16xf32>
    %240 = arith.mulf %238, %239 : vector<16x16xf32>
    %241 = arith.addf %240, %40 : vector<16x16xf32>
    %242 = vector.extract_strided_slice %224 {offsets = [0, 16], sizes = [16, 8], strides = [1, 1]} : vector<16x64xf32> to vector<16x8xf32>
    %243 = vector.extract_strided_slice %224 {offsets = [0, 48], sizes = [16, 8], strides = [1, 1]} : vector<16x64xf32> to vector<16x8xf32>
    %244 = tpu.transpose %243, [1, 0] : vector<16x8xf32> -> vector<8x16xf32>
    %cst_66 = arith.constant dense<0.000000e+00> : vector<16x16xf32>
    %245 = tpu.matmul %242, %244, %cst_66 {dimension_numbers = #tpu.dot_dimension_numbers<[1], [0], [0], [1], [0, 0, 1, 1], [], []>} : vector<16x8xf32>, vector<8x16xf32>, vector<16x16xf32> -> vector<16x16xf32>
    %cst_67 = arith.constant 0.353553385 : f32
    %246 = vector.broadcast %cst_67 : f32 to vector<16x16xf32>
    %247 = arith.mulf %245, %246 : vector<16x16xf32>
    %248 = arith.addf %247, %40 : vector<16x16xf32>
    %249 = vector.extract_strided_slice %224 {offsets = [0, 24], sizes = [16, 8], strides = [1, 1]} : vector<16x64xf32> to vector<16x8xf32>
    %250 = vector.extract_strided_slice %224 {offsets = [0, 56], sizes = [16, 8], strides = [1, 1]} : vector<16x64xf32> to vector<16x8xf32>
    %251 = tpu.transpose %250, [1, 0] : vector<16x8xf32> -> vector<8x16xf32>
    %cst_68 = arith.constant dense<0.000000e+00> : vector<16x16xf32>
    %252 = tpu.matmul %249, %251, %cst_68 {dimension_numbers = #tpu.dot_dimension_numbers<[1], [0], [0], [1], [0, 0, 1, 1], [], []>} : vector<16x8xf32>, vector<8x16xf32>, vector<16x16xf32> -> vector<16x16xf32>
    %cst_69 = arith.constant 0.353553385 : f32
    %253 = vector.broadcast %cst_69 : f32 to vector<16x16xf32>
    %254 = arith.mulf %252, %253 : vector<16x16xf32>
    %255 = arith.addf %254, %40 : vector<16x16xf32>
    %cst_70 = arith.constant dense<0xFF800000> : vector<16xf32>
    %256 = vector.multi_reduction <maximumf>, %234, %cst_70 [1] : vector<16x16xf32> to vector<16xf32>
    %257 = vector.shape_cast %256 : vector<16xf32> to vector<16x1xf32>
    %258 = vector.broadcast %257 : vector<16x1xf32> to vector<16x16xf32>
    %259 = arith.subf %234, %258 : vector<16x16xf32>
    %260 = math.exp %259 : vector<16x16xf32>
    %cst_71 = arith.constant dense<0.000000e+00> : vector<16xf32>
    %261 = vector.multi_reduction <add>, %260, %cst_71 [1] : vector<16x16xf32> to vector<16xf32>
    %262 = vector.shape_cast %261 : vector<16xf32> to vector<16x1xf32>
    %263 = vector.broadcast %262 : vector<16x1xf32> to vector<16x16xf32>
    %264 = arith.divf %260, %263 : vector<16x16xf32>
    %cst_72 = arith.constant dense<0xFF800000> : vector<16xf32>
    %265 = vector.multi_reduction <maximumf>, %241, %cst_72 [1] : vector<16x16xf32> to vector<16xf32>
    %266 = vector.shape_cast %265 : vector<16xf32> to vector<16x1xf32>
    %267 = vector.broadcast %266 : vector<16x1xf32> to vector<16x16xf32>
    %268 = arith.subf %241, %267 : vector<16x16xf32>
    %269 = math.exp %268 : vector<16x16xf32>
    %cst_73 = arith.constant dense<0.000000e+00> : vector<16xf32>
    %270 = vector.multi_reduction <add>, %269, %cst_73 [1] : vector<16x16xf32> to vector<16xf32>
    %271 = vector.shape_cast %270 : vector<16xf32> to vector<16x1xf32>
    %272 = vector.broadcast %271 : vector<16x1xf32> to vector<16x16xf32>
    %273 = arith.divf %269, %272 : vector<16x16xf32>
    %cst_74 = arith.constant dense<0xFF800000> : vector<16xf32>
    %274 = vector.multi_reduction <maximumf>, %248, %cst_74 [1] : vector<16x16xf32> to vector<16xf32>
    %275 = vector.shape_cast %274 : vector<16xf32> to vector<16x1xf32>
    %276 = vector.broadcast %275 : vector<16x1xf32> to vector<16x16xf32>
    %277 = arith.subf %248, %276 : vector<16x16xf32>
    %278 = math.exp %277 : vector<16x16xf32>
    %cst_75 = arith.constant dense<0.000000e+00> : vector<16xf32>
    %279 = vector.multi_reduction <add>, %278, %cst_75 [1] : vector<16x16xf32> to vector<16xf32>
    %280 = vector.shape_cast %279 : vector<16xf32> to vector<16x1xf32>
    %281 = vector.broadcast %280 : vector<16x1xf32> to vector<16x16xf32>
    %282 = arith.divf %278, %281 : vector<16x16xf32>
    %cst_76 = arith.constant dense<0xFF800000> : vector<16xf32>
    %283 = vector.multi_reduction <maximumf>, %255, %cst_76 [1] : vector<16x16xf32> to vector<16xf32>
    %284 = vector.shape_cast %283 : vector<16xf32> to vector<16x1xf32>
    %285 = vector.broadcast %284 : vector<16x1xf32> to vector<16x16xf32>
    %286 = arith.subf %255, %285 : vector<16x16xf32>
    %287 = math.exp %286 : vector<16x16xf32>
    %cst_77 = arith.constant dense<0.000000e+00> : vector<16xf32>
    %288 = vector.multi_reduction <add>, %287, %cst_77 [1] : vector<16x16xf32> to vector<16xf32>
    %289 = vector.shape_cast %288 : vector<16xf32> to vector<16x1xf32>
    %290 = vector.broadcast %289 : vector<16x1xf32> to vector<16x16xf32>
    %291 = arith.divf %287, %290 : vector<16x16xf32>
    %cst_78 = arith.constant 0.000000e+00 : f32
    %292 = vector.broadcast %cst_78 : f32 to vector<16x32xf32>
    %293 = vector.extract_strided_slice %227 {offsets = [0, 0], sizes = [16, 8], strides = [1, 1]} : vector<16x32xf32> to vector<16x8xf32>
    %cst_79 = arith.constant dense<0.000000e+00> : vector<16x8xf32>
    %294 = tpu.matmul %264, %293, %cst_79 {dimension_numbers = #tpu.dot_dimension_numbers<[1], [0], [0], [1], [0, 0, 1, 1], [], []>} : vector<16x16xf32>, vector<16x8xf32>, vector<16x8xf32> -> vector<16x8xf32>
    %295 = vector.extract_strided_slice %209 {offsets = [0, 0], sizes = [8, 32], strides = [1, 1]} : vector<32x32xf32> to vector<8x32xf32>
    %cst_80 = arith.constant dense<0.000000e+00> : vector<16x32xf32>
    %296 = tpu.matmul %294, %295, %cst_80 {dimension_numbers = #tpu.dot_dimension_numbers<[1], [0], [0], [1], [0, 0, 1, 1], [], []>} : vector<16x8xf32>, vector<8x32xf32>, vector<16x32xf32> -> vector<16x32xf32>
    %297 = arith.addf %292, %296 : vector<16x32xf32>
    %298 = vector.extract_strided_slice %227 {offsets = [0, 8], sizes = [16, 8], strides = [1, 1]} : vector<16x32xf32> to vector<16x8xf32>
    %cst_81 = arith.constant dense<0.000000e+00> : vector<16x8xf32>
    %299 = tpu.matmul %273, %298, %cst_81 {dimension_numbers = #tpu.dot_dimension_numbers<[1], [0], [0], [1], [0, 0, 1, 1], [], []>} : vector<16x16xf32>, vector<16x8xf32>, vector<16x8xf32> -> vector<16x8xf32>
    %300 = vector.extract_strided_slice %209 {offsets = [8, 0], sizes = [8, 32], strides = [1, 1]} : vector<32x32xf32> to vector<8x32xf32>
    %cst_82 = arith.constant dense<0.000000e+00> : vector<16x32xf32>
    %301 = tpu.matmul %299, %300, %cst_82 {dimension_numbers = #tpu.dot_dimension_numbers<[1], [0], [0], [1], [0, 0, 1, 1], [], []>} : vector<16x8xf32>, vector<8x32xf32>, vector<16x32xf32> -> vector<16x32xf32>
    %302 = arith.addf %297, %301 : vector<16x32xf32>
    %303 = vector.extract_strided_slice %227 {offsets = [0, 16], sizes = [16, 8], strides = [1, 1]} : vector<16x32xf32> to vector<16x8xf32>
    %cst_83 = arith.constant dense<0.000000e+00> : vector<16x8xf32>
    %304 = tpu.matmul %282, %303, %cst_83 {dimension_numbers = #tpu.dot_dimension_numbers<[1], [0], [0], [1], [0, 0, 1, 1], [], []>} : vector<16x16xf32>, vector<16x8xf32>, vector<16x8xf32> -> vector<16x8xf32>
    %305 = vector.extract_strided_slice %209 {offsets = [16, 0], sizes = [8, 32], strides = [1, 1]} : vector<32x32xf32> to vector<8x32xf32>
    %cst_84 = arith.constant dense<0.000000e+00> : vector<16x32xf32>
    %306 = tpu.matmul %304, %305, %cst_84 {dimension_numbers = #tpu.dot_dimension_numbers<[1], [0], [0], [1], [0, 0, 1, 1], [], []>} : vector<16x8xf32>, vector<8x32xf32>, vector<16x32xf32> -> vector<16x32xf32>
    %307 = arith.addf %302, %306 : vector<16x32xf32>
    %308 = vector.extract_strided_slice %227 {offsets = [0, 24], sizes = [16, 8], strides = [1, 1]} : vector<16x32xf32> to vector<16x8xf32>
    %cst_85 = arith.constant dense<0.000000e+00> : vector<16x8xf32>
    %309 = tpu.matmul %291, %308, %cst_85 {dimension_numbers = #tpu.dot_dimension_numbers<[1], [0], [0], [1], [0, 0, 1, 1], [], []>} : vector<16x16xf32>, vector<16x8xf32>, vector<16x8xf32> -> vector<16x8xf32>
    %310 = vector.extract_strided_slice %209 {offsets = [24, 0], sizes = [8, 32], strides = [1, 1]} : vector<32x32xf32> to vector<8x32xf32>
    %cst_86 = arith.constant dense<0.000000e+00> : vector<16x32xf32>
    %311 = tpu.matmul %309, %310, %cst_86 {dimension_numbers = #tpu.dot_dimension_numbers<[1], [0], [0], [1], [0, 0, 1, 1], [], []>} : vector<16x8xf32>, vector<8x32xf32>, vector<16x32xf32> -> vector<16x32xf32>
    %312 = arith.addf %307, %311 : vector<16x32xf32>
    %313 = vector.broadcast %214 : vector<1x32xf32> to vector<16x32xf32>
    %314 = arith.addf %312, %313 : vector<16x32xf32>
    %315 = arith.addf %204, %314 : vector<16x32xf32>
    %cst_87 = arith.constant dense<0.000000e+00> : vector<16xf32>
    %316 = vector.multi_reduction <add>, %315, %cst_87 [1] : vector<16x32xf32> to vector<16xf32>
    %317 = vector.shape_cast %316 : vector<16xf32> to vector<16x1xf32>
    %cst_88 = arith.constant 3.200000e+01 : f32
    %318 = vector.broadcast %cst_88 : f32 to vector<16x1xf32>
    %319 = arith.divf %317, %318 : vector<16x1xf32>
    %320 = vector.broadcast %319 : vector<16x1xf32> to vector<16x32xf32>
    %321 = arith.subf %315, %320 : vector<16x32xf32>
    %322 = arith.mulf %321, %321 : vector<16x32xf32>
    %cst_89 = arith.constant dense<0.000000e+00> : vector<16xf32>
    %323 = vector.multi_reduction <add>, %322, %cst_89 [1] : vector<16x32xf32> to vector<16xf32>
    %324 = vector.shape_cast %323 : vector<16xf32> to vector<16x1xf32>
    %cst_90 = arith.constant 3.200000e+01 : f32
    %325 = vector.broadcast %cst_90 : f32 to vector<16x1xf32>
    %326 = arith.divf %324, %325 : vector<16x1xf32>
    %327 = vector.broadcast %319 : vector<16x1xf32> to vector<16x32xf32>
    %328 = arith.subf %315, %327 : vector<16x32xf32>
    %cst_91 = arith.constant 9.99999974E-6 : f32
    %329 = vector.broadcast %cst_91 : f32 to vector<16x1xf32>
    %330 = arith.addf %326, %329 : vector<16x1xf32>
    %331 = math.rsqrt %330 : vector<16x1xf32>
    %332 = vector.broadcast %331 : vector<16x1xf32> to vector<16x32xf32>
    %333 = arith.mulf %328, %332 : vector<16x32xf32>
    %334 = vector.broadcast %217 : vector<1x32xf32> to vector<16x32xf32>
    %335 = arith.mulf %333, %334 : vector<16x32xf32>
    %336 = vector.broadcast %218 : vector<1x32xf32> to vector<16x32xf32>
    %337 = arith.addf %335, %336 : vector<16x32xf32>
    %cst_92 = arith.constant dense<0.000000e+00> : vector<16x64xf32>
    %338 = tpu.matmul %337, %210, %cst_92 {dimension_numbers = #tpu.dot_dimension_numbers<[1], [0], [0], [1], [0, 0, 1, 1], [], []>} : vector<16x32xf32>, vector<32x64xf32>, vector<16x64xf32> -> vector<16x64xf32>
    %339 = vector.broadcast %215 : vector<1x64xf32> to vector<16x64xf32>
    %340 = arith.addf %338, %339 : vector<16x64xf32>
    %cst_93 = arith.constant 0.000000e+00 : f32
    %341 = vector.broadcast %cst_93 : f32 to vector<16x64xf32>
    %342 = arith.maximumf %340, %341 : vector<16x64xf32>
    %cst_94 = arith.constant dense<0.000000e+00> : vector<16x32xf32>
    %343 = tpu.matmul %342, %211, %cst_94 {dimension_numbers = #tpu.dot_dimension_numbers<[1], [0], [0], [1], [0, 0, 1, 1], [], []>} : vector<16x64xf32>, vector<64x32xf32>, vector<16x32xf32> -> vector<16x32xf32>
    %344 = vector.broadcast %216 : vector<1x32xf32> to vector<16x32xf32>
    %345 = arith.addf %343, %344 : vector<16x32xf32>
    %346 = arith.addf %337, %345 : vector<16x32xf32>
    %cst_95 = arith.constant dense<0.000000e+00> : vector<16xf32>
    %347 = vector.multi_reduction <add>, %346, %cst_95 [1] : vector<16x32xf32> to vector<16xf32>
    %348 = vector.shape_cast %347 : vector<16xf32> to vector<16x1xf32>
    %cst_96 = arith.constant 3.200000e+01 : f32
    %349 = vector.broadcast %cst_96 : f32 to vector<16x1xf32>
    %350 = arith.divf %348, %349 : vector<16x1xf32>
    %351 = vector.broadcast %350 : vector<16x1xf32> to vector<16x32xf32>
    %352 = arith.subf %346, %351 : vector<16x32xf32>
    %353 = arith.mulf %352, %352 : vector<16x32xf32>
    %cst_97 = arith.constant dense<0.000000e+00> : vector<16xf32>
    %354 = vector.multi_reduction <add>, %353, %cst_97 [1] : vector<16x32xf32> to vector<16xf32>
    %355 = vector.shape_cast %354 : vector<16xf32> to vector<16x1xf32>
    %cst_98 = arith.constant 3.200000e+01 : f32
    %356 = vector.broadcast %cst_98 : f32 to vector<16x1xf32>
    %357 = arith.divf %355, %356 : vector<16x1xf32>
    %358 = vector.broadcast %350 : vector<16x1xf32> to vector<16x32xf32>
    %359 = arith.subf %346, %358 : vector<16x32xf32>
    %cst_99 = arith.constant 9.99999974E-6 : f32
    %360 = vector.broadcast %cst_99 : f32 to vector<16x1xf32>
    %361 = arith.addf %357, %360 : vector<16x1xf32>
    %362 = math.rsqrt %361 : vector<16x1xf32>
    %363 = vector.broadcast %362 : vector<16x1xf32> to vector<16x32xf32>
    %364 = arith.mulf %359, %363 : vector<16x32xf32>
    %365 = vector.broadcast %219 : vector<1x32xf32> to vector<16x32xf32>
    %366 = arith.mulf %364, %365 : vector<16x32xf32>
    %367 = vector.broadcast %220 : vector<1x32xf32> to vector<16x32xf32>
    %368 = arith.addf %366, %367 : vector<16x32xf32>
    %369 = vector.extract_strided_slice %2 {offsets = [18, 0], sizes = [1, 32], strides = [1, 1]} : vector<20x64xf32> to vector<1x32xf32>
    %370 = vector.extract_strided_slice %2 {offsets = [19, 0], sizes = [1, 32], strides = [1, 1]} : vector<20x64xf32> to vector<1x32xf32>
    %cst_100 = arith.constant dense<0.000000e+00> : vector<16xf32>
    %371 = vector.multi_reduction <add>, %368, %cst_100 [1] : vector<16x32xf32> to vector<16xf32>
    %372 = vector.shape_cast %371 : vector<16xf32> to vector<16x1xf32>
    %cst_101 = arith.constant 3.200000e+01 : f32
    %373 = vector.broadcast %cst_101 : f32 to vector<16x1xf32>
    %374 = arith.divf %372, %373 : vector<16x1xf32>
    %375 = vector.broadcast %374 : vector<16x1xf32> to vector<16x32xf32>
    %376 = arith.subf %368, %375 : vector<16x32xf32>
    %377 = arith.mulf %376, %376 : vector<16x32xf32>
    %cst_102 = arith.constant dense<0.000000e+00> : vector<16xf32>
    %378 = vector.multi_reduction <add>, %377, %cst_102 [1] : vector<16x32xf32> to vector<16xf32>
    %379 = vector.shape_cast %378 : vector<16xf32> to vector<16x1xf32>
    %cst_103 = arith.constant 3.200000e+01 : f32
    %380 = vector.broadcast %cst_103 : f32 to vector<16x1xf32>
    %381 = arith.divf %379, %380 : vector<16x1xf32>
    %382 = vector.broadcast %374 : vector<16x1xf32> to vector<16x32xf32>
    %383 = arith.subf %368, %382 : vector<16x32xf32>
    %cst_104 = arith.constant 9.99999974E-6 : f32
    %384 = vector.broadcast %cst_104 : f32 to vector<16x1xf32>
    %385 = arith.addf %381, %384 : vector<16x1xf32>
    %386 = math.rsqrt %385 : vector<16x1xf32>
    %387 = vector.broadcast %386 : vector<16x1xf32> to vector<16x32xf32>
    %388 = arith.mulf %383, %387 : vector<16x32xf32>
    %389 = vector.broadcast %369 : vector<1x32xf32> to vector<16x32xf32>
    %390 = arith.mulf %388, %389 : vector<16x32xf32>
    %391 = vector.broadcast %370 : vector<1x32xf32> to vector<16x32xf32>
    %392 = arith.addf %390, %391 : vector<16x32xf32>
    %c0_105 = arith.constant 0 : index
    %c0_106 = arith.constant 0 : index
    %393 = vector.load %arg4[%c0_105, %c0_106] : memref<16x32xf32, #tpu.memory_space<vmem>>, vector<16x32xf32>
    tpu.vector_store %arg4[%c0_105, %c0_106], %392 {strides = array<i32>} : memref<16x32xf32, #tpu.memory_space<vmem>>, vector<16x32xf32>,
    return
  }
}

</mosaic_0001>

<llo_original>
// kernel: tpu_custom_call.1
$region0: #{tpu_custom_call.1}
  #allocation0 [shape = 'u32[]', space=smem, size = 0x4, offset = 0x4, fixed_abs, tag = 'smem constant byte address 0x4 - core index']
  #allocation1 [shape = 'u32[144,128]{1,0:T(1,128)}', space=vmem, size = 0x12000, scoped, tag = 'internal scratch']
  %s0 = inlined_call_operand.vmem [shape: f32[16,32], index: 0, kind: input, shape index: {}]
  %s1 = inlined_call_operand.vmem [shape: f32[16,32], index: 1, kind: input, shape index: {}]
  %s2 = inlined_call_operand.vmem [shape: f32[2,192,64], index: 2, kind: input, shape index: {}]
  %s3 = inlined_call_operand.vmem [shape: f32[20,64], index: 3, kind: input, shape index: {}]
  %s4 = inlined_call_operand.hbm [shape: f32[16,32], index: 4, kind: output, shape index: {}]
  %s5 = sld [smem:[#allocation0]]
  $region26: #{tpu_custom_call.1} parent=0
    _
  %s7 = ssub.s32 1, %s5
  %s8 = scalar_select 0, %s7, %s5
  $region1: #{tpu_custom_call.1} parent=0
    #allocation2 [shape = 'u8[8192]{0}', space=vmem, size = 0x2000, scoped, tag = 'output window, operand 0, single buffered']
    #allocation3 [shape = 's32[1]{0}', space=sflag, size = 0x4, scoped, tag = 'scoped memory for tpu_custom_call.1']
    %9 = vsyncpa [#allocation3], 0
    // Predicated region
    $region2: #{tpu_custom_call.1} parent=1 // pred_check
      _
    $region3: #{tpu_custom_call.1} parent=1 // pred_check_branch
      %11 = sbr.rel (0) target = $region5
    $region4: #{tpu_custom_call.1} parent=1 // pred_region
      _
    $region5: #{tpu_custom_call.1} parent=1 // pred_fallthru
      _
    // Predicated region
    $region6: #{tpu_custom_call.1} parent=1 // pred_check
      _
    $region7: #{tpu_custom_call.1} parent=1 // pred_check_branch
      %13 = sbr.rel (0) target = $region9
    $region8: #{tpu_custom_call.1} parent=1 // pred_region
      _
    $region9: #{tpu_custom_call.1} parent=1 // pred_fallthru
      _
    // Predicated region
    $region10: #{tpu_custom_call.1} parent=1 // pred_check
      _
    $region11: #{tpu_custom_call.1} parent=1 // pred_check_branch
      %15 = sbr.rel (0) target = $region13
    $region12: #{tpu_custom_call.1} parent=1 // pred_region
      _
    $region13: #{tpu_custom_call.1} parent=1 // pred_fallthru
      _
    // Predicated region
    $region14: #{tpu_custom_call.1} parent=1 // pred_check
      _
    $region15: #{tpu_custom_call.1} parent=1 // pred_check_branch
      %17 = sbr.rel (0) target = $region17
    $region16: #{tpu_custom_call.1} parent=1 // pred_region
      _
    $region17: #{tpu_custom_call.1} parent=1 // pred_fallthru
      _
    %v18 = vld [vmem:[%s0] sm:$0xff]
    %v19 = vld [vmem:[%s0 + $0x8] sm:$0xff]
    %v20 = vld [vmem:[%s1] sm:$0xff]
    %v21 = vld [vmem:[%s1 + $0x8] sm:$0xff]
    %v22 = vld [vmem:[%s3] sm:$0xff]
    %v23 = vld [vmem:[%s3 + $0x8] sm:$0xff]
    %v24 = vld [vmem:[%s3 + $0x10] sm:$0xf]
    %v25 = vlaneseq
    %v26 = vshrl.u32 %v25, 7
    %v27 = vadd.s32 %v26, 8
    %vm28 = vcmp.lt.s32.totalorder %v26, 0
    %v29 = vsub.s32 0, %v26
    %v30 = vsel %vm28, %v29, %v26
    %v31 = vshrl.u32 %v30, 1
    %v32 = vand.u32 %v30, 1
    %v33 = vsub.s32 0, %v32
    %v34 = vsel %vm28, %v33, %v32
    %vm35 = vcmp.lt.s32.totalorder %v27, 0
    %v36 = vsub.s32 0, %v27
    %v37 = vsel %vm35, %v36, %v27
    %v38 = vshrl.u32 %v37, 1
    %v39 = vand.u32 %v37, 1
    %v40 = vsub.s32 0, %v39
    %v41 = vsel %vm35, %v40, %v39
    %vm42 = vcmp.ne.s32.totalorder %v34, 0
    %vm43 = vcmp.ne.s32.totalorder %v41, 0
    %vm44 = vcmp.lt.s32.totalorder %v34, 0
    %vm45 = vcmp.lt.s32.totalorder %v41, 0
    %vm46 = vmand %vm44, %vm42
    %vm47 = vmand %vm45, %vm43
    %v48 = vadd.s32 %v34, 2
    %v49 = vadd.s32 %v41, 2
    %v50 = vsel %vm46, %v48, %v34
    %v51 = vsel %vm47, %v49, %v41
    %v52 = vlaneseq
    %v53 = vand.u32 %v52, 127
    %vm54 = vcmp.lt.s32.totalorder %v53, 0
    %v55 = vsub.s32 0, %v53
    %v56 = vsel %vm54, %v55, %v53
    %v57 = vshrl.u32 %v56, 1
    %v58 = vand.u32 %v56, 1
    %v59 = vsub.s32 0, %v58
    %v60 = vsel %vm54, %v59, %v58
    %vm61 = vcmp.ne.s32.totalorder %v60, 0
    %vm62 = vcmp.lt.s32.totalorder %v60, 0
    %vm63 = vmand %vm62, %vm61
    %v64 = vadd.s32 %v60, 2
    %v65 = vsel %vm63, %v64, %v60
    %vm66 = vcmp.eq.s32.totalorder %v50, %v65
    %vm67 = vcmp.eq.s32.totalorder %v51, %v65
    %v68 = vsel %vm66, 0.0, -1e+30
    %v69 = vsel %vm67, 0.0, -1e+30
    %v70 = vld [vmem:[%s2] sm:$0xff]
    %v71 = vld [vmem:[%s2 + $0x8] sm:$0xff]
    %v72 = vld [vmem:[%s2 + $0x10] sm:$0xff]
    %v73 = vld [vmem:[%s2 + $0x18] sm:$0xff]
    %v74 = vld [vmem:[%s2 + $0x20] sm:$0xff]
    %v75 = vld [vmem:[%s2 + $0x28] sm:$0xff]
    %v76 = vld [vmem:[%s2 + $0x30] sm:$0xff]
    %v77 = vld [vmem:[%s2 + $0x38] sm:$0xff]
    %v78 = vld [vmem:[%s2 + $0x40] sm:$0xff]
    %v79 = vld [vmem:[%s2 + $0x48] sm:$0xff]
    %v80 = vld [vmem:[%s2 + $0x50] sm:$0xff]
    %v81 = vld [vmem:[%s2 + $0x58] sm:$0xff]
    %v82 = vld [vmem:[%s2 + $0x60] sm:$0xff]
    %v83 = vld [vmem:[%s2 + $0x68] sm:$0xff]
    %v84 = vld [vmem:[%s2 + $0x70] sm:$0xff]
    %v85 = vld [vmem:[%s2 + $0x78] sm:$0xff]
    %v86 = vld [vmem:[%s2 + $0x80] sm:$0xff]
    %v87 = vld [vmem:[%s2 + $0x88] sm:$0xff]
    %v88 = vld [vmem:[%s2 + $0x90] sm:$0xff]
    %v89 = vld [vmem:[%s2 + $0x98] sm:$0xff]
    %v90 = vld [vmem:[%s2 + $0xa0] sm:$0xff]
    %v91 = vld [vmem:[%s2 + $0xa8] sm:$0xff]
    %v92 = vld [vmem:[%s2 + $0xb0] sm:$0xff]
    %v93 = vld [vmem:[%s2 + $0xb8] sm:$0xff]
    %v94 = vadd.f32 %v18, %v20
    %v95 = vadd.f32 %v19, %v21
    %v96 = vlaneseq
    %v97 = vshrl.u32 %v96, 7
    %v98 = vsub.s32 0, %v97
    %v99 = vrot.slane %v22, %v98
    %vm100 = vcmask 261120
    %v102 = vsel %vm100, %v94, 0
    %v105 = vsel %vm100, %v95, 0
    %107 = vmatprep.subr.mxu0 0.0
    %108 = vmatpush1.msra.mxu0 %v70
    %109 = vmatprep.subr.mxu0 0.0
    %110 = vmatpush1.msra.mxu0 %v71
    %111 = vmatprep.subr.mxu0 0.0
    %112 = vmatpush1.msra.mxu0 %v72
    %113 = vmatprep.subr.mxu0 0.0
    %114 = vmatpush1.msra.mxu0 %v73
    %115 = vmatprep.subr.mxu0 0.0
    %116 = vmatpush1.msra.mxu0 0.0
    %117 = vmatprep.subr.mxu0 0.0
    %118 = vmatpush1.msra.mxu0 0.0
    %119 = vmatprep.subr.mxu0 0.0
    %120 = vmatpush1.msra.mxu0 0.0
    %121 = vmatprep.subr.mxu0 0.0
    %122 = vmatpush1.msra.mxu0 0.0
    %123 = vmatprep.subr.mxu0 0.0
    %124 = vmatpush1.msra.mxu0 0.0
    %125 = vmatprep.subr.mxu0 0.0
    %126 = vmatpush1.msra.mxu0 0.0
    %127 = vmatprep.subr.mxu0 0.0
    %128 = vmatpush1.msra.mxu0 0.0
    %129 = vmatprep.subr.mxu0 0.0
    %130 = vmatpush1.msra.mxu0 0.0
    %131 = vmatprep.subr.mxu0 0.0
    %132 = vmatpush1.msra.mxu0 0.0
    %133 = vmatprep.subr.mxu0 0.0
    %134 = vmatpush1.msra.mxu0 0.0
    %135 = vmatprep.subr.mxu0 0.0
    %136 = vmatpush1.msra.mxu0 0.0
    %137 = vmatprep.subr.mxu0 0.0
    %138 = vmatpush1.msra.mxu0 0.0
    %139 = vmatprep.subr.mxu0 0.0
    %140 = vmatpush1.msra.mxu0 0.0
    %141 = vmatprep.subr.mxu0 0.0
    %142 = vmatpush1.msra.mxu0 0.0
    %143 = vmatprep.subr.mxu0 0.0
    %144 = vmatpush1.msra.mxu0 0.0
    %145 = vmatprep.subr.mxu0 0.0
    %146 = vmatpush1.msra.mxu0 0.0
    %147 = vmatprep.subr.mxu0 0.0
    %148 = vmatpush1.msra.mxu0 0.0
    %149 = vmatprep.subr.mxu0 0.0
    %150 = vmatpush1.msra.mxu0 0.0
    %151 = vmatprep.subr.mxu0 0.0
    %152 = vmatpush1.msra.mxu0 0.0
    %153 = vmatprep.subr.mxu0 0.0
    %154 = vmatpush1.msra.mxu0 0.0
    %155 = vmatprep.subr.mxu0 0.0
    %156 = vmatpush1.msra.mxu0 0.0
    %157 = vmatprep.subr.mxu0 0.0
    %158 = vmatpush1.msra.mxu0 0.0
    %159 = vmatprep.subr.mxu0 0.0
    %160 = vmatpush1.msra.mxu0 0.0
    %161 = vmatprep.subr.mxu0 0.0
    %162 = vmatpush1.msra.mxu0 0.0
    %163 = vmatprep.subr.mxu0 0.0
    %164 = vmatpush1.msra.mxu0 0.0
    %165 = vmatprep.subr.mxu0 0.0
    %166 = vmatpush1.msra.mxu0 0.0
    %167 = vmatprep.subr.mxu0 0.0
    %168 = vmatpush1.msra.mxu0 0.0
    %169 = vmatprep.subr.mxu0 0.0
    %170 = vmatpush1.msra.mxu0 0.0
    %171 = vmatprep.mubr.f32.mxu0 0.0
    %172 = vmatmul.mubr.f32.gmra.mrb[0].mxu0 %v102
    %v173 = vpop.f32.mrb[0].mxu0
    %v174 = vadd.f32 %v99, %v173
    %v175 = vpop.f32.mrb[0].mxu0
    %176 = vmatprep.mubr.f32.mxu0 0.0
    %177 = vmatmul.mubr.f32.gmra.mrb[0].mxu0 %v105
    %v178 = vpop.f32.mrb[0].mxu0
    %v179 = vadd.f32 %v99, %v178
    %v180 = vpop.f32.mrb[0].mxu0
    %181 = vdwg.mxu0
    %v182 = vlaneseq
    %v183 = vshrl.u32 %v182, 7
    %v184 = vsub.s32 1, %v183
    %v185 = vrot.slane %v22, %v184
    %v187 = vsel %vm100, %v18, 0
    %v190 = vsel %vm100, %v19, 0
    %192 = vmatprep.subr.mxu0 0.0
    %193 = vmatpush1.msra.mxu0 %v74
    %194 = vmatprep.subr.mxu0 0.0
    %195 = vmatpush1.msra.mxu0 %v75
    %196 = vmatprep.subr.mxu0 0.0
    %197 = vmatpush1.msra.mxu0 %v76
    %198 = vmatprep.subr.mxu0 0.0
    %199 = vmatpush1.msra.mxu0 %v77
    %200 = vmatprep.subr.mxu0 0.0
    %201 = vmatpush1.msra.mxu0 0.0
    %202 = vmatprep.subr.mxu0 0.0
    %203 = vmatpush1.msra.mxu0 0.0
    %204 = vmatprep.subr.mxu0 0.0
    %205 = vmatpush1.msra.mxu0 0.0
    %206 = vmatprep.subr.mxu0 0.0
    %207 = vmatpush1.msra.mxu0 0.0
    %208 = vmatprep.subr.mxu0 0.0
    %209 = vmatpush1.msra.mxu0 0.0
    %210 = vmatprep.subr.mxu0 0.0
    %211 = vmatpush1.msra.mxu0 0.0
    %212 = vmatprep.subr.mxu0 0.0
    %213 = vmatpush1.msra.mxu0 0.0
    %214 = vmatprep.subr.mxu0 0.0
    %215 = vmatpush1.msra.mxu0 0.0
    %216 = vmatprep.subr.mxu0 0.0
    %217 = vmatpush1.msra.mxu0 0.0
    %218 = vmatprep.subr.mxu0 0.0
    %219 = vmatpush1.msra.mxu0 0.0
    %220 = vmatprep.subr.mxu0 0.0
    %221 = vmatpush1.msra.mxu0 0.0
    %222 = vmatprep.subr.mxu0 0.0
    %223 = vmatpush1.msra.mxu0 0.0
    %224 = vmatprep.subr.mxu0 0.0
    %225 = vmatpush1.msra.mxu0 0.0
    %226 = vmatprep.subr.mxu0 0.0
    %227 = vmatpush1.msra.mxu0 0.0
    %228 = vmatprep.subr.mxu0 0.0
    %229 = vmatpush1.msra.mxu0 0.0
    %230 = vmatprep.subr.mxu0 0.0
    %231 = vmatpush1.msra.mxu0 0.0
    %232 = vmatprep.subr.mxu0 0.0
    %233 = vmatpush1.msra.mxu0 0.0
    %234 = vmatprep.subr.mxu0 0.0
    %235 = vmatpush1.msra.mxu0 0.0
    %236 = vmatprep.subr.mxu0 0.0
    %237 = vmatpush1.msra.mxu0 0.0
    %238 = vmatprep.subr.mxu0 0.0
    %239 = vmatpush1.msra.mxu0 0.0
    %240 = vmatprep.subr.mxu0 0.0
    %241 = vmatpush1.msra.mxu0 0.0
    %242 = vmatprep.subr.mxu0 0.0
    %243 = vmatpush1.msra.mxu0 0.0
    %244 = vmatprep.subr.mxu0 0.0
    %245 = vmatpush1.msra.mxu0 0.0
    %246 = vmatprep.subr.mxu0 0.0
    %247 = vmatpush1.msra.mxu0 0.0
    %248 = vmatprep.subr.mxu0 0.0
    %249 = vmatpush1.msra.mxu0 0.0
    %250 = vmatprep.subr.mxu0 0.0
    %251 = vmatpush1.msra.mxu0 0.0
    %252 = vmatprep.subr.mxu0 0.0
    %253 = vmatpush1.msra.mxu0 0.0
    %254 = vmatprep.subr.mxu0 0.0
    %255 = vmatpush1.msra.mxu0 0.0
    %256 = vmatprep.mubr.f32.mxu0 0.0
    %257 = vmatmul.mubr.f32.gmra.mrb[0].mxu0 %v187
    %v258 = vpop.f32.mrb[0].mxu0
    %v259 = vadd.f32 %v185, %v258
    %v260 = vpop.f32.mrb[0].mxu0
    %261 = vmatprep.mubr.f32.mxu0 0.0
    %262 = vmatmul.mubr.f32.gmra.mrb[0].mxu0 %v190
    %v263 = vpop.f32.mrb[0].mxu0
    %v264 = vadd.f32 %v185, %v263
    %v265 = vpop.f32.mrb[0].mxu0
    %266 = vdwg.mxu0
    %269 = vrot.lane.b32.xlu0 %v174, 96
    %v270 = vpop.permute.xlu0 %269
    %271 = vrot.lane.b32.xlu0 %v179, 96
    %v272 = vpop.permute.xlu0 %271
    %vm273 = vcmask 64512
    %v274 = vsel %vm273, %v174, 0
    %v276 = vsel %vm273, %v179, 0
    %v278 = vsel %vm273, %v270, 0
    %v280 = vsel %vm273, %v272, 0
    %282 = vmatprep.subr.mxu0 0.0
    %283 = vmatpush1.xpose.msra.mxu0 %v278
    %284 = vmatprep.subr.mxu0 0.0
    %285 = vmatpush1.xpose.msra.mxu0 %v280
    %286 = vmatprep.subr.mxu0 0.0
    %287 = vmatpush1.xpose.msra.mxu0 0.0
    %288 = vmatprep.subr.mxu0 0.0
    %289 = vmatpush1.xpose.msra.mxu0 0.0
    %290 = vmatprep.subr.mxu0 0.0
    %291 = vmatpush1.xpose.msra.mxu0 0.0
    %292 = vmatprep.subr.mxu0 0.0
    %293 = vmatpush1.xpose.msra.mxu0 0.0
    %294 = vmatprep.subr.mxu0 0.0
    %295 = vmatpush1.xpose.msra.mxu0 0.0
    %296 = vmatprep.subr.mxu0 0.0
    %297 = vmatpush1.xpose.msra.mxu0 0.0
    %298 = vmatprep.subr.mxu0 0.0
    %299 = vmatpush1.xpose.msra.mxu0 0.0
    %300 = vmatprep.subr.mxu0 0.0
    %301 = vmatpush1.xpose.msra.mxu0 0.0
    %302 = vmatprep.subr.mxu0 0.0
    %303 = vmatpush1.xpose.msra.mxu0 0.0
    %304 = vmatprep.subr.mxu0 0.0
    %305 = vmatpush1.xpose.msra.mxu0 0.0
    %306 = vmatprep.subr.mxu0 0.0
    %307 = vmatpush1.xpose.msra.mxu0 0.0
    %308 = vmatprep.subr.mxu0 0.0
    %309 = vmatpush1.xpose.msra.mxu0 0.0
    %310 = vmatprep.subr.mxu0 0.0
    %311 = vmatpush1.xpose.msra.mxu0 0.0
    %312 = vmatprep.subr.mxu0 0.0
    %313 = vmatpush1.xpose.msra.mxu0 0.0
    %314 = vmatprep.subr.mxu0 0.0
    %315 = vmatpush1.xpose.msra.mxu0 0.0
    %316 = vmatprep.subr.mxu0 0.0
    %317 = vmatpush1.xpose.msra.mxu0 0.0
    %318 = vmatprep.subr.mxu0 0.0
    %319 = vmatpush1.xpose.msra.mxu0 0.0
    %320 = vmatprep.subr.mxu0 0.0
    %321 = vmatpush1.xpose.msra.mxu0 0.0
    %322 = vmatprep.subr.mxu0 0.0
    %323 = vmatpush1.xpose.msra.mxu0 0.0
    %324 = vmatprep.subr.mxu0 0.0
    %325 = vmatpush1.xpose.msra.mxu0 0.0
    %326 = vmatprep.subr.mxu0 0.0
    %327 = vmatpush1.xpose.msra.mxu0 0.0
    %328 = vmatprep.subr.mxu0 0.0
    %329 = vmatpush1.xpose.msra.mxu0 0.0
    %330 = vmatprep.subr.mxu0 0.0
    %331 = vmatpush1.xpose.msra.mxu0 0.0
    %332 = vmatprep.subr.mxu0 0.0
    %333 = vmatpush1.xpose.msra.mxu0 0.0
    %334 = vmatprep.subr.mxu0 0.0
    %335 = vmatpush1.xpose.msra.mxu0 0.0
    %336 = vmatprep.subr.mxu0 0.0
    %337 = vmatpush1.xpose.msra.mxu0 0.0
    %338 = vmatprep.subr.mxu0 0.0
    %339 = vmatpush1.xpose.msra.mxu0 0.0
    %340 = vmatprep.subr.mxu0 0.0
    %341 = vmatpush1.xpose.msra.mxu0 0.0
    %342 = vmatprep.subr.mxu0 0.0
    %343 = vmatpush1.xpose.msra.mxu0 0.0
    %344 = vmatprep.subr.mxu0 0.0
    %345 = vmatpush1.xpose.msra.mxu0 0.0
    %346 = vmatprep.mubr.f32.mxu0 0.0
    %347 = vmatmul.mubr.f32.gmra.mrb[0].mxu0 %v274
    %v348 = vpop.f32.mrb[0].mxu0
    %v349 = vadd.f32 0.0, %v348
    %v350 = vpop.f32.mrb[0].mxu0
    %351 = vmatprep.mubr.f32.mxu0 0.0
    %352 = vmatmul.mubr.f32.gmra.mrb[0].mxu0 %v276
    %v353 = vpop.f32.mrb[0].mxu0
    %v354 = vadd.f32 0.0, %v353
    %v355 = vpop.f32.mrb[0].mxu0
    %356 = vdwg.mxu0
    %v357 = vmul.f32 %v349, 0.35355338
    %v358 = vmul.f32 %v354, 0.35355338
    %v359 = vadd.f32 %v357, %v68
    %v360 = vadd.f32 %v358, %v69
    %361 = vrot.lane.b32.xlu0 %v174, 120
    %v362 = vpop.permute.xlu0 %361
    %363 = vrot.lane.b32.xlu0 %v179, 120
    %v364 = vpop.permute.xlu0 %363
    %365 = vrot.lane.b32.xlu0 %v174, 88
    %v366 = vpop.permute.xlu0 %365
    %367 = vrot.lane.b32.xlu0 %v179, 88
    %v368 = vpop.permute.xlu0 %367
    %v369 = vsel %vm273, %v362, 0
    %v371 = vsel %vm273, %v364, 0
    %v373 = vsel %vm273, %v366, 0
    %v375 = vsel %vm273, %v368, 0
    %377 = vmatprep.subr.mxu0 0.0
    %378 = vmatpush1.xpose.msra.mxu0 %v373
    %379 = vmatprep.subr.mxu0 0.0
    %380 = vmatpush1.xpose.msra.mxu0 %v375
    %381 = vmatprep.subr.mxu0 0.0
    %382 = vmatpush1.xpose.msra.mxu0 0.0
    %383 = vmatprep.subr.mxu0 0.0
    %384 = vmatpush1.xpose.msra.mxu0 0.0
    %385 = vmatprep.subr.mxu0 0.0
    %386 = vmatpush1.xpose.msra.mxu0 0.0
    %387 = vmatprep.subr.mxu0 0.0
    %388 = vmatpush1.xpose.msra.mxu0 0.0
    %389 = vmatprep.subr.mxu0 0.0
    %390 = vmatpush1.xpose.msra.mxu0 0.0
    %391 = vmatprep.subr.mxu0 0.0
    %392 = vmatpush1.xpose.msra.mxu0 0.0
    %393 = vmatprep.subr.mxu0 0.0
    %394 = vmatpush1.xpose.msra.mxu0 0.0
    %395 = vmatprep.subr.mxu0 0.0
    %396 = vmatpush1.xpose.msra.mxu0 0.0
    %397 = vmatprep.subr.mxu0 0.0
    %398 = vmatpush1.xpose.msra.mxu0 0.0
    %399 = vmatprep.subr.mxu0 0.0
    %400 = vmatpush1.xpose.msra.mxu0 0.0
    %401 = vmatprep.subr.mxu0 0.0
    %402 = vmatpush1.xpose.msra.mxu0 0.0
    %403 = vmatprep.subr.mxu0 0.0
    %404 = vmatpush1.xpose.msra.mxu0 0.0
    %405 = vmatprep.subr.mxu0 0.0
    %406 = vmatpush1.xpose.msra.mxu0 0.0
    %407 = vmatprep.subr.mxu0 0.0
    %408 = vmatpush1.xpose.msra.mxu0 0.0
    %409 = vmatprep.subr.mxu0 0.0
    %410 = vmatpush1.xpose.msra.mxu0 0.0
    %411 = vmatprep.subr.mxu0 0.0
    %412 = vmatpush1.xpose.msra.mxu0 0.0
    %413 = vmatprep.subr.mxu0 0.0
    %414 = vmatpush1.xpose.msra.mxu0 0.0
    %415 = vmatprep.subr.mxu0 0.0
    %416 = vmatpush1.xpose.msra.mxu0 0.0
    %417 = vmatprep.subr.mxu0 0.0
    %418 = vmatpush1.xpose.msra.mxu0 0.0
    %419 = vmatprep.subr.mxu0 0.0
    %420 = vmatpush1.xpose.msra.mxu0 0.0
    %421 = vmatprep.subr.mxu0 0.0
    %422 = vmatpush1.xpose.msra.mxu0 0.0
    %423 = vmatprep.subr.mxu0 0.0
    %424 = vmatpush1.xpose.msra.mxu0 0.0
    %425 = vmatprep.subr.mxu0 0.0
    %426 = vmatpush1.xpose.msra.mxu0 0.0
    %427 = vmatprep.subr.mxu0 0.0
    %428 = vmatpush1.xpose.msra.mxu0 0.0
    %429 = vmatprep.subr.mxu0 0.0
    %430 = vmatpush1.xpose.msra.mxu0 0.0
    %431 = vmatprep.subr.mxu0 0.0
    %432 = vmatpush1.xpose.msra.mxu0 0.0
    %433 = vmatprep.subr.mxu0 0.0
    %434 = vmatpush1.xpose.msra.mxu0 0.0
    %435 = vmatprep.subr.mxu0 0.0
    %436 = vmatpush1.xpose.msra.mxu0 0.0
    %437 = vmatprep.subr.mxu0 0.0
    %438 = vmatpush1.xpose.msra.mxu0 0.0
    %439 = vmatprep.subr.mxu0 0.0
    %440 = vmatpush1.xpose.msra.mxu0 0.0
    %441 = vmatprep.mubr.f32.mxu0 0.0
    %442 = vmatmul.mubr.f32.gmra.mrb[0].mxu0 %v369
    %v443 = vpop.f32.mrb[0].mxu0
    %v444 = vadd.f32 0.0, %v443
    %v445 = vpop.f32.mrb[0].mxu0
    %446 = vmatprep.mubr.f32.mxu0 0.0
    %447 = vmatmul.mubr.f32.gmra.mrb[0].mxu0 %v371
    %v448 = vpop.f32.mrb[0].mxu0
    %v449 = vadd.f32 0.0, %v448
    %v450 = vpop.f32.mrb[0].mxu0
    %451 = vdwg.mxu0
    %v452 = vmul.f32 %v444, 0.35355338
    %v453 = vmul.f32 %v449, 0.35355338
    %v454 = vadd.f32 %v452, %v68
    %v455 = vadd.f32 %v453, %v69
    %456 = vrot.lane.b32.xlu0 %v174, 112
    %v457 = vpop.permute.xlu0 %456
    %458 = vrot.lane.b32.xlu0 %v179, 112
    %v459 = vpop.permute.xlu0 %458
    %460 = vrot.lane.b32.xlu0 %v174, 80
    %v461 = vpop.permute.xlu0 %460
    %462 = vrot.lane.b32.xlu0 %v179, 80
    %v463 = vpop.permute.xlu0 %462
    %v464 = vsel %vm273, %v457, 0
    %v466 = vsel %vm273, %v459, 0
    %v468 = vsel %vm273, %v461, 0
    %v470 = vsel %vm273, %v463, 0
    %472 = vmatprep.subr.mxu0 0.0
    %473 = vmatpush1.xpose.msra.mxu0 %v468
    %474 = vmatprep.subr.mxu0 0.0
    %475 = vmatpush1.xpose.msra.mxu0 %v470
    %476 = vmatprep.subr.mxu0 0.0
    %477 = vmatpush1.xpose.msra.mxu0 0.0
    %478 = vmatprep.subr.mxu0 0.0
    %479 = vmatpush1.xpose.msra.mxu0 0.0
    %480 = vmatprep.subr.mxu0 0.0
    %481 = vmatpush1.xpose.msra.mxu0 0.0
    %482 = vmatprep.subr.mxu0 0.0
    %483 = vmatpush1.xpose.msra.mxu0 0.0
    %484 = vmatprep.subr.mxu0 0.0
    %485 = vmatpush1.xpose.msra.mxu0 0.0
    %486 = vmatprep.subr.mxu0 0.0
    %487 = vmatpush1.xpose.msra.mxu0 0.0
    %488 = vmatprep.subr.mxu0 0.0
    %489 = vmatpush1.xpose.msra.mxu0 0.0
    %490 = vmatprep.subr.mxu0 0.0
    %491 = vmatpush1.xpose.msra.mxu0 0.0
    %492 = vmatprep.subr.mxu0 0.0
    %493 = vmatpush1.xpose.msra.mxu0 0.0
    %494 = vmatprep.subr.mxu0 0.0
    %495 = vmatpush1.xpose.msra.mxu0 0.0
    %496 = vmatprep.subr.mxu0 0.0
    %497 = vmatpush1.xpose.msra.mxu0 0.0
    %498 = vmatprep.subr.mxu0 0.0
    %499 = vmatpush1.xpose.msra.mxu0 0.0
    %500 = vmatprep.subr.mxu0 0.0
    %501 = vmatpush1.xpose.msra.mxu0 0.0
    %502 = vmatprep.subr.mxu0 0.0
    %503 = vmatpush1.xpose.msra.mxu0 0.0
    %504 = vmatprep.subr.mxu0 0.0
    %505 = vmatpush1.xpose.msra.mxu0 0.0
    %506 = vmatprep.subr.mxu0 0.0
    %507 = vmatpush1.xpose.msra.mxu0 0.0
    %508 = vmatprep.subr.mxu0 0.0
    %509 = vmatpush1.xpose.msra.mxu0 0.0
    %510 = vmatprep.subr.mxu0 0.0
    %511 = vmatpush1.xpose.msra.mxu0 0.0
    %512 = vmatprep.subr.mxu0 0.0
    %513 = vmatpush1.xpose.msra.mxu0 0.0
    %514 = vmatprep.subr.mxu0 0.0
    %515 = vmatpush1.xpose.msra.mxu0 0.0
    %516 = vmatprep.subr.mxu0 0.0
    %517 = vmatpush1.xpose.msra.mxu0 0.0
    %518 = vmatprep.subr.mxu0 0.0
    %519 = vmatpush1.xpose.msra.mxu0 0.0
    %520 = vmatprep.subr.mxu0 0.0
    %521 = vmatpush1.xpose.msra.mxu0 0.0
    %522 = vmatprep.subr.mxu0 0.0
    %523 = vmatpush1.xpose.msra.mxu0 0.0
    %524 = vmatprep.subr.mxu0 0.0
    %525 = vmatpush1.xpose.msra.mxu0 0.0
    %526 = vmatprep.subr.mxu0 0.0
    %527 = vmatpush1.xpose.msra.mxu0 0.0
    %528 = vmatprep.subr.mxu0 0.0
    %529 = vmatpush1.xpose.msra.mxu0 0.0
    %530 = vmatprep.subr.mxu0 0.0
    %531 = vmatpush1.xpose.msra.mxu0 0.0
    %532 = vmatprep.subr.mxu0 0.0
    %533 = vmatpush1.xpose.msra.mxu0 0.0
    %534 = vmatprep.subr.mxu0 0.0
    %535 = vmatpush1.xpose.msra.mxu0 0.0
    %536 = vmatprep.mubr.f32.mxu0 0.0
    %537 = vmatmul.mubr.f32.gmra.mrb[0].mxu0 %v464
    %v538 = vpop.f32.mrb[0].mxu0
    %v539 = vadd.f32 0.0, %v538
    %v540 = vpop.f32.mrb[0].mxu0
    %541 = vmatprep.mubr.f32.mxu0 0.0
    %542 = vmatmul.mubr.f32.gmra.mrb[0].mxu0 %v466
    %v543 = vpop.f32.mrb[0].mxu0
    %v544 = vadd.f32 0.0, %v543
    %v545 = vpop.f32.mrb[0].mxu0
    %546 = vdwg.mxu0
    %v547 = vmul.f32 %v539, 0.35355338
    %v548 = vmul.f32 %v544, 0.35355338
    %v549 = vadd.f32 %v547, %v68
    %v550 = vadd.f32 %v548, %v69
    %551 = vrot.lane.b32.xlu0 %v174, 104
    %v552 = vpop.permute.xlu0 %551
    %553 = vrot.lane.b32.xlu0 %v179, 104
    %v554 = vpop.permute.xlu0 %553
    %555 = vrot.lane.b32.xlu0 %v174, 72
    %v556 = vpop.permute.xlu0 %555
    %557 = vrot.lane.b32.xlu0 %v179, 72
    %v558 = vpop.permute.xlu0 %557
    %v559 = vsel %vm273, %v552, 0
    %v561 = vsel %vm273, %v554, 0
    %v563 = vsel %vm273, %v556, 0
    %v565 = vsel %vm273, %v558, 0
    %567 = vmatprep.subr.mxu0 0.0
    %568 = vmatpush1.xpose.msra.mxu0 %v563
    %569 = vmatprep.subr.mxu0 0.0
    %570 = vmatpush1.xpose.msra.mxu0 %v565
    %571 = vmatprep.subr.mxu0 0.0
    %572 = vmatpush1.xpose.msra.mxu0 0.0
    %573 = vmatprep.subr.mxu0 0.0
    %574 = vmatpush1.xpose.msra.mxu0 0.0
    %575 = vmatprep.subr.mxu0 0.0
    %576 = vmatpush1.xpose.msra.mxu0 0.0
    %577 = vmatprep.subr.mxu0 0.0
    %578 = vmatpush1.xpose.msra.mxu0 0.0
    %579 = vmatprep.subr.mxu0 0.0
    %580 = vmatpush1.xpose.msra.mxu0 0.0
    %581 = vmatprep.subr.mxu0 0.0
    %582 = vmatpush1.xpose.msra.mxu0 0.0
    %583 = vmatprep.subr.mxu0 0.0
    %584 = vmatpush1.xpose.msra.mxu0 0.0
    %585 = vmatprep.subr.mxu0 0.0
    %586 = vmatpush1.xpose.msra.mxu0 0.0
    %587 = vmatprep.subr.mxu0 0.0
    %588 = vmatpush1.xpose.msra.mxu0 0.0
    %589 = vmatprep.subr.mxu0 0.0
    %590 = vmatpush1.xpose.msra.mxu0 0.0
    %591 = vmatprep.subr.mxu0 0.0
    %592 = vmatpush1.xpose.msra.mxu0 0.0
    %593 = vmatprep.subr.mxu0 0.0
    %594 = vmatpush1.xpose.msra.mxu0 0.0
    %595 = vmatprep.subr.mxu0 0.0
    %596 = vmatpush1.xpose.msra.mxu0 0.0
    %597 = vmatprep.subr.mxu0 0.0
    %598 = vmatpush1.xpose.msra.mxu0 0.0
    %599 = vmatprep.subr.mxu0 0.0
    %600 = vmatpush1.xpose.msra.mxu0 0.0
    %601 = vmatprep.subr.mxu0 0.0
    %602 = vmatpush1.xpose.msra.mxu0 0.0
    %603 = vmatprep.subr.mxu0 0.0
    %604 = vmatpush1.xpose.msra.mxu0 0.0
    %605 = vmatprep.subr.mxu0 0.0
    %606 = vmatpush1.xpose.msra.mxu0 0.0
    %607 = vmatprep.subr.mxu0 0.0
    %608 = vmatpush1.xpose.msra.mxu0 0.0
    %609 = vmatprep.subr.mxu0 0.0
    %610 = vmatpush1.xpose.msra.mxu0 0.0
    %611 = vmatprep.subr.mxu0 0.0
    %612 = vmatpush1.xpose.msra.mxu0 0.0
    %613 = vmatprep.subr.mxu0 0.0
    %614 = vmatpush1.xpose.msra.mxu0 0.0
    %615 = vmatprep.subr.mxu0 0.0
    %616 = vmatpush1.xpose.msra.mxu0 0.0
    %617 = vmatprep.subr.mxu0 0.0
    %618 = vmatpush1.xpose.msra.mxu0 0.0
    %619 = vmatprep.subr.mxu0 0.0
    %620 = vmatpush1.xpose.msra.mxu0 0.0
    %621 = vmatprep.subr.mxu0 0.0
    %622 = vmatpush1.xpose.msra.mxu0 0.0
    %623 = vmatprep.subr.mxu0 0.0
    %624 = vmatpush1.xpose.msra.mxu0 0.0
    %625 = vmatprep.subr.mxu0 0.0
    %626 = vmatpush1.xpose.msra.mxu0 0.0
    %627 = vmatprep.subr.mxu0 0.0
    %628 = vmatpush1.xpose.msra.mxu0 0.0
    %629 = vmatprep.subr.mxu0 0.0
    %630 = vmatpush1.xpose.msra.mxu0 0.0
    %631 = vmatprep.mubr.f32.mxu0 0.0
    %632 = vmatmul.mubr.f32.gmra.mrb[0].mxu0 %v559
    %v633 = vpop.f32.mrb[0].mxu0
    %v634 = vadd.f32 0.0, %v633
    %v635 = vpop.f32.mrb[0].mxu0
    %636 = vmatprep.mubr.f32.mxu0 0.0
    %637 = vmatmul.mubr.f32.gmra.mrb[0].mxu0 %v561
    %v638 = vpop.f32.mrb[0].mxu0
    %v639 = vadd.f32 0.0, %v638
    %v640 = vpop.f32.mrb[0].mxu0
    %641 = vdwg.mxu0
    %v642 = vmul.f32 %v634, 0.35355338
    %v643 = vmul.f32 %v639, 0.35355338
    %v644 = vadd.f32 %v642, %v68
    %v645 = vadd.f32 %v643, %v69
    %vm646 = vcmask 130048
    %v647 = vsel %vm646, %v359, -inf
    %648 = vmax.xlane.f32.xlu0 %v647
    %v649 = vpop.xlane.xlu0 %648
    %v650 = vsel %vm646, %v360, -inf
    %651 = vmax.xlane.f32.xlu0 %v650
    %v652 = vpop.xlane.xlu0 %651
    %v653 = vsub.f32 %v359, %v649
    %v654 = vsub.f32 %v360, %v652
    %v655 = vmul.f32 %v653, 1.442695
    %v656 = vpow.pop %v655
    %v657 = vmul.f32 %v654, 1.442695
    %v658 = vpow.pop %v657
    %v659 = vsel %vm646, %v656, 0.0
    %660 = vadd.xlane.f32.xlu0 %v659
    %v661 = vpop.xlane.xlu0 %660
    %v662 = vsel %vm646, %v658, 0.0
    %663 = vadd.xlane.f32.xlu0 %v662
    %v664 = vpop.xlane.xlu0 %663
    %v665 = vrcp.pop %v661
    %v666 = vmul.f32 %v656, %v665
    %v667 = vrcp.pop %v664
    %v668 = vmul.f32 %v658, %v667
    %v669 = vsel %vm646, %v454, -inf
    %670 = vmax.xlane.f32.xlu0 %v669
    %v671 = vpop.xlane.xlu0 %670
    %v672 = vsel %vm646, %v455, -inf
    %673 = vmax.xlane.f32.xlu0 %v672
    %v674 = vpop.xlane.xlu0 %673
    %v675 = vsub.f32 %v454, %v671
    %v676 = vsub.f32 %v455, %v674
    %v677 = vmul.f32 %v675, 1.442695
    %v678 = vpow.pop %v677
    %v679 = vmul.f32 %v676, 1.442695
    %v680 = vpow.pop %v679
    %v681 = vsel %vm646, %v678, 0.0
    %682 = vadd.xlane.f32.xlu0 %v681
    %v683 = vpop.xlane.xlu0 %682
    %v684 = vsel %vm646, %v680, 0.0
    %685 = vadd.xlane.f32.xlu0 %v684
    %v686 = vpop.xlane.xlu0 %685
    %v687 = vrcp.pop %v683
    %v688 = vmul.f32 %v678, %v687
    %v689 = vrcp.pop %v686
    %v690 = vmul.f32 %v680, %v689
    %v691 = vsel %vm646, %v549, -inf
    %692 = vmax.xlane.f32.xlu0 %v691
    %v693 = vpop.xlane.xlu0 %692
    %v694 = vsel %vm646, %v550, -inf
    %695 = vmax.xlane.f32.xlu0 %v694
    %v696 = vpop.xlane.xlu0 %695
    %v697 = vsub.f32 %v549, %v693
    %v698 = vsub.f32 %v550, %v696
    %v699 = vmul.f32 %v697, 1.442695
    %v700 = vpow.pop %v699
    %v701 = vmul.f32 %v698, 1.442695
    %v702 = vpow.pop %v701
    %v703 = vsel %vm646, %v700, 0.0
    %704 = vadd.xlane.f32.xlu0 %v703
    %v705 = vpop.xlane.xlu0 %704
    %v706 = vsel %vm646, %v702, 0.0
    %707 = vadd.xlane.f32.xlu0 %v706
    %v708 = vpop.xlane.xlu0 %707
    %v709 = vrcp.pop %v705
    %v710 = vmul.f32 %v700, %v709
    %v711 = vrcp.pop %v708
    %v712 = vmul.f32 %v702, %v711
    %v713 = vsel %vm646, %v644, -inf
    %714 = vmax.xlane.f32.xlu0 %v713
    %v715 = vpop.xlane.xlu0 %714
    %v716 = vsel %vm646, %v645, -inf
    %717 = vmax.xlane.f32.xlu0 %v716
    %v718 = vpop.xlane.xlu0 %717
    %v719 = vsub.f32 %v644, %v715
    %v720 = vsub.f32 %v645, %v718
    %v721 = vmul.f32 %v719, 1.442695
    %v722 = vpow.pop %v721
    %v723 = vmul.f32 %v720, 1.442695
    %v724 = vpow.pop %v723
    %v725 = vsel %vm646, %v722, 0.0
    %726 = vadd.xlane.f32.xlu0 %v725
    %v727 = vpop.xlane.xlu0 %726
    %v728 = vsel %vm646, %v724, 0.0
    %729 = vadd.xlane.f32.xlu0 %v728
    %v730 = vpop.xlane.xlu0 %729
    %v731 = vrcp.pop %v727
    %v732 = vmul.f32 %v722, %v731
    %v733 = vrcp.pop %v730
    %v734 = vmul.f32 %v724, %v733
    %v736 = vsel %vm646, %v666, 0
    %v739 = vsel %vm646, %v668, 0
    %741 = vmatprep.subr.mxu0 0.0
    %742 = vmatpush1.msra.mxu0 %v259
    %743 = vmatprep.subr.mxu0 0.0
    %744 = vmatpush1.msra.mxu0 %v264
    %745 = vmatprep.subr.mxu0 0.0
    %746 = vmatpush1.msra.mxu0 0.0
    %747 = vmatprep.subr.mxu0 0.0
    %748 = vmatpush1.msra.mxu0 0.0
    %749 = vmatprep.subr.mxu0 0.0
    %750 = vmatpush1.msra.mxu0 0.0
    %751 = vmatprep.subr.mxu0 0.0
    %752 = vmatpush1.msra.mxu0 0.0
    %753 = vmatprep.subr.mxu0 0.0
    %754 = vmatpush1.msra.mxu0 0.0
    %755 = vmatprep.subr.mxu0 0.0
    %756 = vmatpush1.msra.mxu0 0.0
    %757 = vmatprep.subr.mxu0 0.0
    %758 = vmatpush1.msra.mxu0 0.0
    %759 = vmatprep.subr.mxu0 0.0
    %760 = vmatpush1.msra.mxu0 0.0
    %761 = vmatprep.subr.mxu0 0.0
    %762 = vmatpush1.msra.mxu0 0.0
    %763 = vmatprep.subr.mxu0 0.0
    %764 = vmatpush1.msra.mxu0 0.0
    %765 = vmatprep.subr.mxu0 0.0
    %766 = vmatpush1.msra.mxu0 0.0
    %767 = vmatprep.subr.mxu0 0.0
    %768 = vmatpush1.msra.mxu0 0.0
    %769 = vmatprep.subr.mxu0 0.0
    %770 = vmatpush1.msra.mxu0 0.0
    %771 = vmatprep.subr.mxu0 0.0
    %772 = vmatpush1.msra.mxu0 0.0
    %773 = vmatprep.subr.mxu0 0.0
    %774 = vmatpush1.msra.mxu0 0.0
    %775 = vmatprep.subr.mxu0 0.0
    %776 = vmatpush1.msra.mxu0 0.0
    %777 = vmatprep.subr.mxu0 0.0
    %778 = vmatpush1.msra.mxu0 0.0
    %779 = vmatprep.subr.mxu0 0.0
    %780 = vmatpush1.msra.mxu0 0.0
    %781 = vmatprep.subr.mxu0 0.0
    %782 = vmatpush1.msra.mxu0 0.0
    %783 = vmatprep.subr.mxu0 0.0
    %784 = vmatpush1.msra.mxu0 0.0
    %785 = vmatprep.subr.mxu0 0.0
    %786 = vmatpush1.msra.mxu0 0.0
    %787 = vmatprep.subr.mxu0 0.0
    %788 = vmatpush1.msra.mxu0 0.0
    %789 = vmatprep.subr.mxu0 0.0
    %790 = vmatpush1.msra.mxu0 0.0
    %791 = vmatprep.subr.mxu0 0.0
    %792 = vmatpush1.msra.mxu0 0.0
    %793 = vmatprep.subr.mxu0 0.0
    %794 = vmatpush1.msra.mxu0 0.0
    %795 = vmatprep.subr.mxu0 0.0
    %796 = vmatpush1.msra.mxu0 0.0
    %797 = vmatprep.subr.mxu0 0.0
    %798 = vmatpush1.msra.mxu0 0.0
    %799 = vmatprep.subr.mxu0 0.0
    %800 = vmatpush1.msra.mxu0 0.0
    %801 = vmatprep.subr.mxu0 0.0
    %802 = vmatpush1.msra.mxu0 0.0
    %803 = vmatprep.subr.mxu0 0.0
    %804 = vmatpush1.msra.mxu0 0.0
    %805 = vmatprep.mubr.f32.mxu0 0.0
    %806 = vmatmul.mubr.f32.gmra.mrb[0].mxu0 %v736
    %v807 = vpop.f32.mrb[0].mxu0
    %v808 = vadd.f32 0.0, %v807
    %v809 = vpop.f32.mrb[0].mxu0
    %810 = vmatprep.mubr.f32.mxu0 0.0
    %811 = vmatmul.mubr.f32.gmra.mrb[0].mxu0 %v739
    %v812 = vpop.f32.mrb[0].mxu0
    %v813 = vadd.f32 0.0, %v812
    %v814 = vpop.f32.mrb[0].mxu0
    %815 = vdwg.mxu0
    %818 = vrot.lane.b32.xlu0 %v259, 120
    %v819 = vpop.permute.xlu0 %818
    %820 = vrot.lane.b32.xlu0 %v264, 120
    %v821 = vpop.permute.xlu0 %820
    %v825 = vsel %vm646, %v688, 0
    %v828 = vsel %vm646, %v690, 0
    %830 = vmatprep.subr.mxu0 0.0
    %831 = vmatpush1.msra.mxu0 %v819
    %832 = vmatprep.subr.mxu0 0.0
    %833 = vmatpush1.msra.mxu0 %v821
    %834 = vmatprep.subr.mxu0 0.0
    %835 = vmatpush1.msra.mxu0 0.0
    %836 = vmatprep.subr.mxu0 0.0
    %837 = vmatpush1.msra.mxu0 0.0
    %838 = vmatprep.subr.mxu0 0.0
    %839 = vmatpush1.msra.mxu0 0.0
    %840 = vmatprep.subr.mxu0 0.0
    %841 = vmatpush1.msra.mxu0 0.0
    %842 = vmatprep.subr.mxu0 0.0
    %843 = vmatpush1.msra.mxu0 0.0
    %844 = vmatprep.subr.mxu0 0.0
    %845 = vmatpush1.msra.mxu0 0.0
    %846 = vmatprep.subr.mxu0 0.0
    %847 = vmatpush1.msra.mxu0 0.0
    %848 = vmatprep.subr.mxu0 0.0
    %849 = vmatpush1.msra.mxu0 0.0
    %850 = vmatprep.subr.mxu0 0.0
    %851 = vmatpush1.msra.mxu0 0.0
    %852 = vmatprep.subr.mxu0 0.0
    %853 = vmatpush1.msra.mxu0 0.0
    %854 = vmatprep.subr.mxu0 0.0
    %855 = vmatpush1.msra.mxu0 0.0
    %856 = vmatprep.subr.mxu0 0.0
    %857 = vmatpush1.msra.mxu0 0.0
    %858 = vmatprep.subr.mxu0 0.0
    %859 = vmatpush1.msra.mxu0 0.0
    %860 = vmatprep.subr.mxu0 0.0
    %861 = vmatpush1.msra.mxu0 0.0
    %862 = vmatprep.subr.mxu0 0.0
    %863 = vmatpush1.msra.mxu0 0.0
    %864 = vmatprep.subr.mxu0 0.0
    %865 = vmatpush1.msra.mxu0 0.0
    %866 = vmatprep.subr.mxu0 0.0
    %867 = vmatpush1.msra.mxu0 0.0
    %868 = vmatprep.subr.mxu0 0.0
    %869 = vmatpush1.msra.mxu0 0.0
    %870 = vmatprep.subr.mxu0 0.0
    %871 = vmatpush1.msra.mxu0 0.0
    %872 = vmatprep.subr.mxu0 0.0
    %873 = vmatpush1.msra.mxu0 0.0
    %874 = vmatprep.subr.mxu0 0.0
    %875 = vmatpush1.msra.mxu0 0.0
    %876 = vmatprep.subr.mxu0 0.0
    %877 = vmatpush1.msra.mxu0 0.0
    %878 = vmatprep.subr.mxu0 0.0
    %879 = vmatpush1.msra.mxu0 0.0
    %880 = vmatprep.subr.mxu0 0.0
    %881 = vmatpush1.msra.mxu0 0.0
    %882 = vmatprep.subr.mxu0 0.0
    %883 = vmatpush1.msra.mxu0 0.0
    %884 = vmatprep.subr.mxu0 0.0
    %885 = vmatpush1.msra.mxu0 0.0
    %886 = vmatprep.subr.mxu0 0.0
    %887 = vmatpush1.msra.mxu0 0.0
    %888 = vmatprep.subr.mxu0 0.0
    %889 = vmatpush1.msra.mxu0 0.0
    %890 = vmatprep.subr.mxu0 0.0
    %891 = vmatpush1.msra.mxu0 0.0
    %892 = vmatprep.subr.mxu0 0.0
    %893 = vmatpush1.msra.mxu0 0.0
    %894 = vmatprep.mubr.f32.mxu0 0.0
    %895 = vmatmul.mubr.f32.gmra.mrb[0].mxu0 %v825
    %v896 = vpop.f32.mrb[0].mxu0
    %v897 = vadd.f32 0.0, %v896
    %v898 = vpop.f32.mrb[0].mxu0
    %899 = vmatprep.mubr.f32.mxu0 0.0
    %900 = vmatmul.mubr.f32.gmra.mrb[0].mxu0 %v828
    %v901 = vpop.f32.mrb[0].mxu0
    %v902 = vadd.f32 0.0, %v901
    %v903 = vpop.f32.mrb[0].mxu0
    %904 = vdwg.mxu0
    %v906 = vsel %vm273, %v897, 0
    %v909 = vsel %vm273, %v902, 0
    %911 = vmatprep.subr.mxu0 0.0
    %912 = vmatpush1.msra.mxu0 %v79
    %913 = vmatprep.subr.mxu0 0.0
    %914 = vmatpush1.msra.mxu0 0.0
    %915 = vmatprep.subr.mxu0 0.0
    %916 = vmatpush1.msra.mxu0 0.0
    %917 = vmatprep.subr.mxu0 0.0
    %918 = vmatpush1.msra.mxu0 0.0
    %919 = vmatprep.subr.mxu0 0.0
    %920 = vmatpush1.msra.mxu0 0.0
    %921 = vmatprep.subr.mxu0 0.0
    %922 = vmatpush1.msra.mxu0 0.0
    %923 = vmatprep.subr.mxu0 0.0
    %924 = vmatpush1.msra.mxu0 0.0
    %925 = vmatprep.subr.mxu0 0.0
    %926 = vmatpush1.msra.mxu0 0.0
    %927 = vmatprep.subr.mxu0 0.0
    %928 = vmatpush1.msra.mxu0 0.0
    %929 = vmatprep.subr.mxu0 0.0
    %930 = vmatpush1.msra.mxu0 0.0
    %931 = vmatprep.subr.mxu0 0.0
    %932 = vmatpush1.msra.mxu0 0.0
    %933 = vmatprep.subr.mxu0 0.0
    %934 = vmatpush1.msra.mxu0 0.0
    %935 = vmatprep.subr.mxu0 0.0
    %936 = vmatpush1.msra.mxu0 0.0
    %937 = vmatprep.subr.mxu0 0.0
    %938 = vmatpush1.msra.mxu0 0.0
    %939 = vmatprep.subr.mxu0 0.0
    %940 = vmatpush1.msra.mxu0 0.0
    %941 = vmatprep.subr.mxu0 0.0
    %942 = vmatpush1.msra.mxu0 0.0
    %943 = vmatprep.subr.mxu0 0.0
    %944 = vmatpush1.msra.mxu0 0.0
    %945 = vmatprep.subr.mxu0 0.0
    %946 = vmatpush1.msra.mxu0 0.0
    %947 = vmatprep.subr.mxu0 0.0
    %948 = vmatpush1.msra.mxu0 0.0
    %949 = vmatprep.subr.mxu0 0.0
    %950 = vmatpush1.msra.mxu0 0.0
    %951 = vmatprep.subr.mxu0 0.0
    %952 = vmatpush1.msra.mxu0 0.0
    %953 = vmatprep.subr.mxu0 0.0
    %954 = vmatpush1.msra.mxu0 0.0
    %955 = vmatprep.subr.mxu0 0.0
    %956 = vmatpush1.msra.mxu0 0.0
    %957 = vmatprep.subr.mxu0 0.0
    %958 = vmatpush1.msra.mxu0 0.0
    %959 = vmatprep.subr.mxu0 0.0
    %960 = vmatpush1.msra.mxu0 0.0
    %961 = vmatprep.subr.mxu0 0.0
    %962 = vmatpush1.msra.mxu0 0.0
    %963 = vmatprep.subr.mxu0 0.0
    %964 = vmatpush1.msra.mxu0 0.0
    %965 = vmatprep.subr.mxu0 0.0
    %966 = vmatpush1.msra.mxu0 0.0
    %967 = vmatprep.subr.mxu0 0.0
    %968 = vmatpush1.msra.mxu0 0.0
    %969 = vmatprep.subr.mxu0 0.0
    %970 = vmatpush1.msra.mxu0 0.0
    %971 = vmatprep.subr.mxu0 0.0
    %972 = vmatpush1.msra.mxu0 0.0
    %973 = vmatprep.subr.mxu0 0.0
    %974 = vmatpush1.msra.mxu0 0.0
    %975 = vmatprep.mubr.f32.mxu0 0.0
    %976 = vmatmul.mubr.f32.gmra.mrb[0].mxu0 %v906
    %v977 = vpop.f32.mrb[0].mxu0
    %v978 = vadd.f32 0.0, %v977
    %v979 = vpop.f32.mrb[0].mxu0
    %980 = vmatprep.mubr.f32.mxu0 0.0
    %981 = vmatmul.mubr.f32.gmra.mrb[0].mxu0 %v909
    %v982 = vpop.f32.mrb[0].mxu0
    %v983 = vadd.f32 0.0, %v982
    %v984 = vpop.f32.mrb[0].mxu0
    %985 = vdwg.mxu0
    %v987 = vsel %vm273, %v808, 0
    %v990 = vsel %vm273, %v813, 0
    %992 = vmatprep.subr.mxu0 0.0
    %993 = vmatpush1.msra.mxu0 %v78
    %994 = vmatprep.subr.mxu0 0.0
    %995 = vmatpush1.msra.mxu0 0.0
    %996 = vmatprep.subr.mxu0 0.0
    %997 = vmatpush1.msra.mxu0 0.0
    %998 = vmatprep.subr.mxu0 0.0
    %999 = vmatpush1.msra.mxu0 0.0
    %1000 = vmatprep.subr.mxu0 0.0
    %1001 = vmatpush1.msra.mxu0 0.0
    %1002 = vmatprep.subr.mxu0 0.0
    %1003 = vmatpush1.msra.mxu0 0.0
    %1004 = vmatprep.subr.mxu0 0.0
    %1005 = vmatpush1.msra.mxu0 0.0
    %1006 = vmatprep.subr.mxu0 0.0
    %1007 = vmatpush1.msra.mxu0 0.0
    %1008 = vmatprep.subr.mxu0 0.0
    %1009 = vmatpush1.msra.mxu0 0.0
    %1010 = vmatprep.subr.mxu0 0.0
    %1011 = vmatpush1.msra.mxu0 0.0
    %1012 = vmatprep.subr.mxu0 0.0
    %1013 = vmatpush1.msra.mxu0 0.0
    %1014 = vmatprep.subr.mxu0 0.0
    %1015 = vmatpush1.msra.mxu0 0.0
    %1016 = vmatprep.subr.mxu0 0.0
    %1017 = vmatpush1.msra.mxu0 0.0
    %1018 = vmatprep.subr.mxu0 0.0
    %1019 = vmatpush1.msra.mxu0 0.0
    %1020 = vmatprep.subr.mxu0 0.0
    %1021 = vmatpush1.msra.mxu0 0.0
    %1022 = vmatprep.subr.mxu0 0.0
    %1023 = vmatpush1.msra.mxu0 0.0
    %1024 = vmatprep.subr.mxu0 0.0
    %1025 = vmatpush1.msra.mxu0 0.0
    %1026 = vmatprep.subr.mxu0 0.0
    %1027 = vmatpush1.msra.mxu0 0.0
    %1028 = vmatprep.subr.mxu0 0.0
    %1029 = vmatpush1.msra.mxu0 0.0
    %1030 = vmatprep.subr.mxu0 0.0
    %1031 = vmatpush1.msra.mxu0 0.0
    %1032 = vmatprep.subr.mxu0 0.0
    %1033 = vmatpush1.msra.mxu0 0.0
    %1034 = vmatprep.subr.mxu0 0.0
    %1035 = vmatpush1.msra.mxu0 0.0
    %1036 = vmatprep.subr.mxu0 0.0
    %1037 = vmatpush1.msra.mxu0 0.0
    %1038 = vmatprep.subr.mxu0 0.0
    %1039 = vmatpush1.msra.mxu0 0.0
    %1040 = vmatprep.subr.mxu0 0.0
    %1041 = vmatpush1.msra.mxu0 0.0
    %1042 = vmatprep.subr.mxu0 0.0
    %1043 = vmatpush1.msra.mxu0 0.0
    %1044 = vmatprep.subr.mxu0 0.0
    %1045 = vmatpush1.msra.mxu0 0.0
    %1046 = vmatprep.subr.mxu0 0.0
    %1047 = vmatpush1.msra.mxu0 0.0
    %1048 = vmatprep.subr.mxu0 0.0
    %1049 = vmatpush1.msra.mxu0 0.0
    %1050 = vmatprep.subr.mxu0 0.0
    %1051 = vmatpush1.msra.mxu0 0.0
    %1052 = vmatprep.subr.mxu0 0.0
    %1053 = vmatpush1.msra.mxu0 0.0
    %1054 = vmatprep.subr.mxu0 0.0
    %1055 = vmatpush1.msra.mxu0 0.0
    %1056 = vmatprep.mubr.f32.mxu0 0.0
    %1057 = vmatmul.mubr.f32.gmra.mrb[0].mxu0 %v987
    %v1058 = vpop.f32.mrb[0].mxu0
    %v1059 = vadd.f32 %v978, %v1058
    %v1060 = vpop.f32.mrb[0].mxu0
    %1061 = vmatprep.mubr.f32.mxu0 0.0
    %1062 = vmatmul.mubr.f32.gmra.mrb[0].mxu0 %v990
    %v1063 = vpop.f32.mrb[0].mxu0
    %v1064 = vadd.f32 %v983, %v1063
    %v1065 = vpop.f32.mrb[0].mxu0
    %1066 = vdwg.mxu0
    %1067 = vrot.lane.b32.xlu0 %v259, 112
    %v1068 = vpop.permute.xlu0 %1067
    %1069 = vrot.lane.b32.xlu0 %v264, 112
    %v1070 = vpop.permute.xlu0 %1069
    %v1074 = vsel %vm646, %v710, 0
    %v1077 = vsel %vm646, %v712, 0
    %1079 = vmatprep.subr.mxu0 0.0
    %1080 = vmatpush1.msra.mxu0 %v1068
    %1081 = vmatprep.subr.mxu0 0.0
    %1082 = vmatpush1.msra.mxu0 %v1070
    %1083 = vmatprep.subr.mxu0 0.0
    %1084 = vmatpush1.msra.mxu0 0.0
    %1085 = vmatprep.subr.mxu0 0.0
    %1086 = vmatpush1.msra.mxu0 0.0
    %1087 = vmatprep.subr.mxu0 0.0
    %1088 = vmatpush1.msra.mxu0 0.0
    %1089 = vmatprep.subr.mxu0 0.0
    %1090 = vmatpush1.msra.mxu0 0.0
    %1091 = vmatprep.subr.mxu0 0.0
    %1092 = vmatpush1.msra.mxu0 0.0
    %1093 = vmatprep.subr.mxu0 0.0
    %1094 = vmatpush1.msra.mxu0 0.0
    %1095 = vmatprep.subr.mxu0 0.0
    %1096 = vmatpush1.msra.mxu0 0.0
    %1097 = vmatprep.subr.mxu0 0.0
    %1098 = vmatpush1.msra.mxu0 0.0
    %1099 = vmatprep.subr.mxu0 0.0
    %1100 = vmatpush1.msra.mxu0 0.0
    %1101 = vmatprep.subr.mxu0 0.0
    %1102 = vmatpush1.msra.mxu0 0.0
    %1103 = vmatprep.subr.mxu0 0.0
    %1104 = vmatpush1.msra.mxu0 0.0
    %1105 = vmatprep.subr.mxu0 0.0
    %1106 = vmatpush1.msra.mxu0 0.0
    %1107 = vmatprep.subr.mxu0 0.0
    %1108 = vmatpush1.msra.mxu0 0.0
    %1109 = vmatprep.subr.mxu0 0.0
    %1110 = vmatpush1.msra.mxu0 0.0
    %1111 = vmatprep.subr.mxu0 0.0
    %1112 = vmatpush1.msra.mxu0 0.0
    %1113 = vmatprep.subr.mxu0 0.0
    %1114 = vmatpush1.msra.mxu0 0.0
    %1115 = vmatprep.subr.mxu0 0.0
    %1116 = vmatpush1.msra.mxu0 0.0
    %1117 = vmatprep.subr.mxu0 0.0
    %1118 = vmatpush1.msra.mxu0 0.0
    %1119 = vmatprep.subr.mxu0 0.0
    %1120 = vmatpush1.msra.mxu0 0.0
    %1121 = vmatprep.subr.mxu0 0.0
    %1122 = vmatpush1.msra.mxu0 0.0
    %1123 = vmatprep.subr.mxu0 0.0
    %1124 = vmatpush1.msra.mxu0 0.0
    %1125 = vmatprep.subr.mxu0 0.0
    %1126 = vmatpush1.msra.mxu0 0.0
    %1127 = vmatprep.subr.mxu0 0.0
    %1128 = vmatpush1.msra.mxu0 0.0
    %1129 = vmatprep.subr.mxu0 0.0
    %1130 = vmatpush1.msra.mxu0 0.0
    %1131 = vmatprep.subr.mxu0 0.0
    %1132 = vmatpush1.msra.mxu0 0.0
    %1133 = vmatprep.subr.mxu0 0.0
    %1134 = vmatpush1.msra.mxu0 0.0
    %1135 = vmatprep.subr.mxu0 0.0
    %1136 = vmatpush1.msra.mxu0 0.0
    %1137 = vmatprep.subr.mxu0 0.0
    %1138 = vmatpush1.msra.mxu0 0.0
    %1139 = vmatprep.subr.mxu0 0.0
    %1140 = vmatpush1.msra.mxu0 0.0
    %1141 = vmatprep.subr.mxu0 0.0
    %1142 = vmatpush1.msra.mxu0 0.0
    %1143 = vmatprep.mubr.f32.mxu0 0.0
    %1144 = vmatmul.mubr.f32.gmra.mrb[0].mxu0 %v1074
    %v1145 = vpop.f32.mrb[0].mxu0
    %v1146 = vadd.f32 0.0, %v1145
    %v1147 = vpop.f32.mrb[0].mxu0
    %1148 = vmatprep.mubr.f32.mxu0 0.0
    %1149 = vmatmul.mubr.f32.gmra.mrb[0].mxu0 %v1077
    %v1150 = vpop.f32.mrb[0].mxu0
    %v1151 = vadd.f32 0.0, %v1150
    %v1152 = vpop.f32.mrb[0].mxu0
    %1153 = vdwg.mxu0
    %v1155 = vsel %vm273, %v1146, 0
    %v1158 = vsel %vm273, %v1151, 0
    %1160 = vmatprep.subr.mxu0 0.0
    %1161 = vmatpush1.msra.mxu0 %v80
    %1162 = vmatprep.subr.mxu0 0.0
    %1163 = vmatpush1.msra.mxu0 0.0
    %1164 = vmatprep.subr.mxu0 0.0
    %1165 = vmatpush1.msra.mxu0 0.0
    %1166 = vmatprep.subr.mxu0 0.0
    %1167 = vmatpush1.msra.mxu0 0.0
    %1168 = vmatprep.subr.mxu0 0.0
    %1169 = vmatpush1.msra.mxu0 0.0
    %1170 = vmatprep.subr.mxu0 0.0
    %1171 = vmatpush1.msra.mxu0 0.0
    %1172 = vmatprep.subr.mxu0 0.0
    %1173 = vmatpush1.msra.mxu0 0.0
    %1174 = vmatprep.subr.mxu0 0.0
    %1175 = vmatpush1.msra.mxu0 0.0
    %1176 = vmatprep.subr.mxu0 0.0
    %1177 = vmatpush1.msra.mxu0 0.0
    %1178 = vmatprep.subr.mxu0 0.0
    %1179 = vmatpush1.msra.mxu0 0.0
    %1180 = vmatprep.subr.mxu0 0.0
    %1181 = vmatpush1.msra.mxu0 0.0
    %1182 = vmatprep.subr.mxu0 0.0
    %1183 = vmatpush1.msra.mxu0 0.0
    %1184 = vmatprep.subr.mxu0 0.0
    %1185 = vmatpush1.msra.mxu0 0.0
    %1186 = vmatprep.subr.mxu0 0.0
    %1187 = vmatpush1.msra.mxu0 0.0
    %1188 = vmatprep.subr.mxu0 0.0
    %1189 = vmatpush1.msra.mxu0 0.0
    %1190 = vmatprep.subr.mxu0 0.0
    %1191 = vmatpush1.msra.mxu0 0.0
    %1192 = vmatprep.subr.mxu0 0.0
    %1193 = vmatpush1.msra.mxu0 0.0
    %1194 = vmatprep.subr.mxu0 0.0
    %1195 = vmatpush1.msra.mxu0 0.0
    %1196 = vmatprep.subr.mxu0 0.0
    %1197 = vmatpush1.msra.mxu0 0.0
    %1198 = vmatprep.subr.mxu0 0.0
    %1199 = vmatpush1.msra.mxu0 0.0
    %1200 = vmatprep.subr.mxu0 0.0
    %1201 = vmatpush1.msra.mxu0 0.0
    %1202 = vmatprep.subr.mxu0 0.0
    %1203 = vmatpush1.msra.mxu0 0.0
    %1204 = vmatprep.subr.mxu0 0.0
    %1205 = vmatpush1.msra.mxu0 0.0
    %1206 = vmatprep.subr.mxu0 0.0
    %1207 = vmatpush1.msra.mxu0 0.0
    %1208 = vmatprep.subr.mxu0 0.0
    %1209 = vmatpush1.msra.mxu0 0.0
    %1210 = vmatprep.subr.mxu0 0.0
    %1211 = vmatpush1.msra.mxu0 0.0
    %1212 = vmatprep.subr.mxu0 0.0
    %1213 = vmatpush1.msra.mxu0 0.0
    %1214 = vmatprep.subr.mxu0 0.0
    %1215 = vmatpush1.msra.mxu0 0.0
    %1216 = vmatprep.subr.mxu0 0.0
    %1217 = vmatpush1.msra.mxu0 0.0
    %1218 = vmatprep.subr.mxu0 0.0
    %1219 = vmatpush1.msra.mxu0 0.0
    %1220 = vmatprep.subr.mxu0 0.0
    %1221 = vmatpush1.msra.mxu0 0.0
    %1222 = vmatprep.subr.mxu0 0.0
    %1223 = vmatpush1.msra.mxu0 0.0
    %1224 = vmatprep.mubr.f32.mxu0 0.0
    %1225 = vmatmul.mubr.f32.gmra.mrb[0].mxu0 %v1155
    %v1226 = vpop.f32.mrb[0].mxu0
    %v1227 = vadd.f32 0.0, %v1226
    %v1228 = vpop.f32.mrb[0].mxu0
    %1229 = vmatprep.mubr.f32.mxu0 0.0
    %1230 = vmatmul.mubr.f32.gmra.mrb[0].mxu0 %v1158
    %v1231 = vpop.f32.mrb[0].mxu0
    %v1232 = vadd.f32 0.0, %v1231
    %v1233 = vpop.f32.mrb[0].mxu0
    %1234 = vdwg.mxu0
    %v1235 = vadd.f32 %v1059, %v1227
    %v1236 = vadd.f32 %v1064, %v1232
    %1237 = vrot.lane.b32.xlu0 %v259, 104
    %v1238 = vpop.permute.xlu0 %1237
    %1239 = vrot.lane.b32.xlu0 %v264, 104
    %v1240 = vpop.permute.xlu0 %1239
    %v1244 = vsel %vm646, %v732, 0
    %v1247 = vsel %vm646, %v734, 0
    %1249 = vmatprep.subr.mxu0 0.0
    %1250 = vmatpush1.msra.mxu0 %v1238
    %1251 = vmatprep.subr.mxu0 0.0
    %1252 = vmatpush1.msra.mxu0 %v1240
    %1253 = vmatprep.subr.mxu0 0.0
    %1254 = vmatpush1.msra.mxu0 0.0
    %1255 = vmatprep.subr.mxu0 0.0
    %1256 = vmatpush1.msra.mxu0 0.0
    %1257 = vmatprep.subr.mxu0 0.0
    %1258 = vmatpush1.msra.mxu0 0.0
    %1259 = vmatprep.subr.mxu0 0.0
    %1260 = vmatpush1.msra.mxu0 0.0
    %1261 = vmatprep.subr.mxu0 0.0
    %1262 = vmatpush1.msra.mxu0 0.0
    %1263 = vmatprep.subr.mxu0 0.0
    %1264 = vmatpush1.msra.mxu0 0.0
    %1265 = vmatprep.subr.mxu0 0.0
    %1266 = vmatpush1.msra.mxu0 0.0
    %1267 = vmatprep.subr.mxu0 0.0
    %1268 = vmatpush1.msra.mxu0 0.0
    %1269 = vmatprep.subr.mxu0 0.0
    %1270 = vmatpush1.msra.mxu0 0.0
    %1271 = vmatprep.subr.mxu0 0.0
    %1272 = vmatpush1.msra.mxu0 0.0
    %1273 = vmatprep.subr.mxu0 0.0
    %1274 = vmatpush1.msra.mxu0 0.0
    %1275 = vmatprep.subr.mxu0 0.0
    %1276 = vmatpush1.msra.mxu0 0.0
    %1277 = vmatprep.subr.mxu0 0.0
    %1278 = vmatpush1.msra.mxu0 0.0
    %1279 = vmatprep.subr.mxu0 0.0
    %1280 = vmatpush1.msra.mxu0 0.0
    %1281 = vmatprep.subr.mxu0 0.0
    %1282 = vmatpush1.msra.mxu0 0.0
    %1283 = vmatprep.subr.mxu0 0.0
    %1284 = vmatpush1.msra.mxu0 0.0
    %1285 = vmatprep.subr.mxu0 0.0
    %1286 = vmatpush1.msra.mxu0 0.0
    %1287 = vmatprep.subr.mxu0 0.0
    %1288 = vmatpush1.msra.mxu0 0.0
    %1289 = vmatprep.subr.mxu0 0.0
    %1290 = vmatpush1.msra.mxu0 0.0
    %1291 = vmatprep.subr.mxu0 0.0
    %1292 = vmatpush1.msra.mxu0 0.0
    %1293 = vmatprep.subr.mxu0 0.0
    %1294 = vmatpush1.msra.mxu0 0.0
    %1295 = vmatprep.subr.mxu0 0.0
    %1296 = vmatpush1.msra.mxu0 0.0
    %1297 = vmatprep.subr.mxu0 0.0
    %1298 = vmatpush1.msra.mxu0 0.0
    %1299 = vmatprep.subr.mxu0 0.0
    %1300 = vmatpush1.msra.mxu0 0.0
    %1301 = vmatprep.subr.mxu0 0.0
    %1302 = vmatpush1.msra.mxu0 0.0
    %1303 = vmatprep.subr.mxu0 0.0
    %1304 = vmatpush1.msra.mxu0 0.0
    %1305 = vmatprep.subr.mxu0 0.0
    %1306 = vmatpush1.msra.mxu0 0.0
    %1307 = vmatprep.subr.mxu0 0.0
    %1308 = vmatpush1.msra.mxu0 0.0
    %1309 = vmatprep.subr.mxu0 0.0
    %1310 = vmatpush1.msra.mxu0 0.0
    %1311 = vmatprep.subr.mxu0 0.0
    %1312 = vmatpush1.msra.mxu0 0.0
    %1313 = vmatprep.mubr.f32.mxu0 0.0
    %1314 = vmatmul.mubr.f32.gmra.mrb[0].mxu0 %v1244
    %v1315 = vpop.f32.mrb[0].mxu0
    %v1316 = vadd.f32 0.0, %v1315
    %v1317 = vpop.f32.mrb[0].mxu0
    %1318 = vmatprep.mubr.f32.mxu0 0.0
    %1319 = vmatmul.mubr.f32.gmra.mrb[0].mxu0 %v1247
    %v1320 = vpop.f32.mrb[0].mxu0
    %v1321 = vadd.f32 0.0, %v1320
    %v1322 = vpop.f32.mrb[0].mxu0
    %1323 = vdwg.mxu0
    %v1325 = vsel %vm273, %v1316, 0
    %v1328 = vsel %vm273, %v1321, 0
    %1330 = vmatprep.subr.mxu0 0.0
    %1331 = vmatpush1.msra.mxu0 %v81
    %1332 = vmatprep.subr.mxu0 0.0
    %1333 = vmatpush1.msra.mxu0 0.0
    %1334 = vmatprep.subr.mxu0 0.0
    %1335 = vmatpush1.msra.mxu0 0.0
    %1336 = vmatprep.subr.mxu0 0.0
    %1337 = vmatpush1.msra.mxu0 0.0
    %1338 = vmatprep.subr.mxu0 0.0
    %1339 = vmatpush1.msra.mxu0 0.0
    %1340 = vmatprep.subr.mxu0 0.0
    %1341 = vmatpush1.msra.mxu0 0.0
    %1342 = vmatprep.subr.mxu0 0.0
    %1343 = vmatpush1.msra.mxu0 0.0
    %1344 = vmatprep.subr.mxu0 0.0
    %1345 = vmatpush1.msra.mxu0 0.0
    %1346 = vmatprep.subr.mxu0 0.0
    %1347 = vmatpush1.msra.mxu0 0.0
    %1348 = vmatprep.subr.mxu0 0.0
    %1349 = vmatpush1.msra.mxu0 0.0
    %1350 = vmatprep.subr.mxu0 0.0
    %1351 = vmatpush1.msra.mxu0 0.0
    %1352 = vmatprep.subr.mxu0 0.0
    %1353 = vmatpush1.msra.mxu0 0.0
    %1354 = vmatprep.subr.mxu0 0.0
    %1355 = vmatpush1.msra.mxu0 0.0
    %1356 = vmatprep.subr.mxu0 0.0
    %1357 = vmatpush1.msra.mxu0 0.0
    %1358 = vmatprep.subr.mxu0 0.0
    %1359 = vmatpush1.msra.mxu0 0.0
    %1360 = vmatprep.subr.mxu0 0.0
    %1361 = vmatpush1.msra.mxu0 0.0
    %1362 = vmatprep.subr.mxu0 0.0
    %1363 = vmatpush1.msra.mxu0 0.0
    %1364 = vmatprep.subr.mxu0 0.0
    %1365 = vmatpush1.msra.mxu0 0.0
    %1366 = vmatprep.subr.mxu0 0.0
    %1367 = vmatpush1.msra.mxu0 0.0
    %1368 = vmatprep.subr.mxu0 0.0
    %1369 = vmatpush1.msra.mxu0 0.0
    %1370 = vmatprep.subr.mxu0 0.0
    %1371 = vmatpush1.msra.mxu0 0.0
    %1372 = vmatprep.subr.mxu0 0.0
    %1373 = vmatpush1.msra.mxu0 0.0
    %1374 = vmatprep.subr.mxu0 0.0
    %1375 = vmatpush1.msra.mxu0 0.0
    %1376 = vmatprep.subr.mxu0 0.0
    %1377 = vmatpush1.msra.mxu0 0.0
    %1378 = vmatprep.subr.mxu0 0.0
    %1379 = vmatpush1.msra.mxu0 0.0
    %1380 = vmatprep.subr.mxu0 0.0
    %1381 = vmatpush1.msra.mxu0 0.0
    %1382 = vmatprep.subr.mxu0 0.0
    %1383 = vmatpush1.msra.mxu0 0.0
    %1384 = vmatprep.subr.mxu0 0.0
    %1385 = vmatpush1.msra.mxu0 0.0
    %1386 = vmatprep.subr.mxu0 0.0
    %1387 = vmatpush1.msra.mxu0 0.0
    %1388 = vmatprep.subr.mxu0 0.0
    %1389 = vmatpush1.msra.mxu0 0.0
    %1390 = vmatprep.subr.mxu0 0.0
    %1391 = vmatpush1.msra.mxu0 0.0
    %1392 = vmatprep.subr.mxu0 0.0
    %1393 = vmatpush1.msra.mxu0 0.0
    %1394 = vmatprep.mubr.f32.mxu0 0.0
    %1395 = vmatmul.mubr.f32.gmra.mrb[0].mxu0 %v1325
    %v1396 = vpop.f32.mrb[0].mxu0
    %v1397 = vadd.f32 0.0, %v1396
    %v1398 = vpop.f32.mrb[0].mxu0
    %1399 = vmatprep.mubr.f32.mxu0 0.0
    %1400 = vmatmul.mubr.f32.gmra.mrb[0].mxu0 %v1328
    %v1401 = vpop.f32.mrb[0].mxu0
    %v1402 = vadd.f32 0.0, %v1401
    %v1403 = vpop.f32.mrb[0].mxu0
    %1404 = vdwg.mxu0
    %v1405 = vadd.f32 %v1235, %v1397
    %v1406 = vadd.f32 %v1236, %v1402
    %v1407 = vlaneseq
    %v1408 = vshrl.u32 %v1407, 7
    %v1409 = vsub.s32 2, %v1408
    %v1410 = vrot.slane %v22, %v1409
    %v1411 = vadd.f32 %v1405, %v1410
    %v1412 = vadd.f32 %v1406, %v1410
    %v1413 = vadd.f32 %v18, %v1411
    %v1414 = vadd.f32 %v19, %v1412
    %v1415 = vsel %vm100, %v1413, 0.0
    %1416 = vadd.xlane.f32.xlu0 %v1415
    %v1417 = vpop.xlane.xlu0 %1416
    %v1418 = vsel %vm100, %v1414, 0.0
    %1419 = vadd.xlane.f32.xlu0 %v1418
    %v1420 = vpop.xlane.xlu0 %1419
    %v1421 = vrcp.pop 32.0
    %v1422 = vmul.f32 %v1417, %v1421
    %v1423 = vmul.f32 %v1420, %v1421
    %v1424 = vsub.f32 %v1413, %v1422
    %v1425 = vsub.f32 %v1414, %v1423
    %v1426 = vmul.f32 %v1424, %v1424
    %v1427 = vmul.f32 %v1425, %v1425
    %v1428 = vsel %vm100, %v1426, 0.0
    %1429 = vadd.xlane.f32.xlu0 %v1428
    %v1430 = vpop.xlane.xlu0 %1429
    %v1431 = vsel %vm100, %v1427, 0.0
    %1432 = vadd.xlane.f32.xlu0 %v1431
    %v1433 = vpop.xlane.xlu0 %1432
    %v1434 = vmul.f32 %v1430, %v1421
    %v1435 = vmul.f32 %v1433, %v1421
    %v1436 = vadd.f32 %v1434, 1e-05
    %v1437 = vadd.f32 %v1435, 1e-05
    %v1438 = vrsqrt.pop %v1436
    %v1439 = vrsqrt.pop %v1437
    %v1440 = vmul.f32 %v1424, %v1438
    %v1441 = vmul.f32 %v1425, %v1439
    %v1442 = vlaneseq
    %v1443 = vshrl.u32 %v1442, 7
    %v1444 = vsub.s32 5, %v1443
    %v1445 = vrot.slane %v22, %v1444
    %v1446 = vmul.f32 %v1440, %v1445
    %v1447 = vmul.f32 %v1441, %v1445
    %v1448 = vlaneseq
    %v1449 = vshrl.u32 %v1448, 7
    %v1450 = vsub.s32 6, %v1449
    %v1451 = vrot.slane %v22, %v1450
    %v1452 = vadd.f32 %v1446, %v1451
    %v1453 = vadd.f32 %v1447, %v1451
    %v1454 = vlaneseq
    %v1455 = vshrl.u32 %v1454, 7
    %v1456 = vsub.s32 3, %v1455
    %v1457 = vrot.slane %v22, %v1456
    %v1459 = vsel %vm100, %v1452, 0
    %v1462 = vsel %vm100, %v1453, 0
    %1464 = vmatprep.subr.mxu0 0.0
    %1465 = vmatpush1.msra.mxu0 %v82
    %1466 = vmatprep.subr.mxu0 0.0
    %1467 = vmatpush1.msra.mxu0 %v83
    %1468 = vmatprep.subr.mxu0 0.0
    %1469 = vmatpush1.msra.mxu0 %v84
    %1470 = vmatprep.subr.mxu0 0.0
    %1471 = vmatpush1.msra.mxu0 %v85
    %1472 = vmatprep.subr.mxu0 0.0
    %1473 = vmatpush1.msra.mxu0 0.0
    %1474 = vmatprep.subr.mxu0 0.0
    %1475 = vmatpush1.msra.mxu0 0.0
    %1476 = vmatprep.subr.mxu0 0.0
    %1477 = vmatpush1.msra.mxu0 0.0
    %1478 = vmatprep.subr.mxu0 0.0
    %1479 = vmatpush1.msra.mxu0 0.0
    %1480 = vmatprep.subr.mxu0 0.0
    %1481 = vmatpush1.msra.mxu0 0.0
    %1482 = vmatprep.subr.mxu0 0.0
    %1483 = vmatpush1.msra.mxu0 0.0
    %1484 = vmatprep.subr.mxu0 0.0
    %1485 = vmatpush1.msra.mxu0 0.0
    %1486 = vmatprep.subr.mxu0 0.0
    %1487 = vmatpush1.msra.mxu0 0.0
    %1488 = vmatprep.subr.mxu0 0.0
    %1489 = vmatpush1.msra.mxu0 0.0
    %1490 = vmatprep.subr.mxu0 0.0
    %1491 = vmatpush1.msra.mxu0 0.0
    %1492 = vmatprep.subr.mxu0 0.0
    %1493 = vmatpush1.msra.mxu0 0.0
    %1494 = vmatprep.subr.mxu0 0.0
    %1495 = vmatpush1.msra.mxu0 0.0
    %1496 = vmatprep.subr.mxu0 0.0
    %1497 = vmatpush1.msra.mxu0 0.0
    %1498 = vmatprep.subr.mxu0 0.0
    %1499 = vmatpush1.msra.mxu0 0.0
    %1500 = vmatprep.subr.mxu0 0.0
    %1501 = vmatpush1.msra.mxu0 0.0
    %1502 = vmatprep.subr.mxu0 0.0
    %1503 = vmatpush1.msra.mxu0 0.0
    %1504 = vmatprep.subr.mxu0 0.0
    %1505 = vmatpush1.msra.mxu0 0.0
    %1506 = vmatprep.subr.mxu0 0.0
    %1507 = vmatpush1.msra.mxu0 0.0
    %1508 = vmatprep.subr.mxu0 0.0
    %1509 = vmatpush1.msra.mxu0 0.0
    %1510 = vmatprep.subr.mxu0 0.0
    %1511 = vmatpush1.msra.mxu0 0.0
    %1512 = vmatprep.subr.mxu0 0.0
    %1513 = vmatpush1.msra.mxu0 0.0
    %1514 = vmatprep.subr.mxu0 0.0
    %1515 = vmatpush1.msra.mxu0 0.0
    %1516 = vmatprep.subr.mxu0 0.0
    %1517 = vmatpush1.msra.mxu0 0.0
    %1518 = vmatprep.subr.mxu0 0.0
    %1519 = vmatpush1.msra.mxu0 0.0
    %1520 = vmatprep.subr.mxu0 0.0
    %1521 = vmatpush1.msra.mxu0 0.0
    %1522 = vmatprep.subr.mxu0 0.0
    %1523 = vmatpush1.msra.mxu0 0.0
    %1524 = vmatprep.subr.mxu0 0.0
    %1525 = vmatpush1.msra.mxu0 0.0
    %1526 = vmatprep.subr.mxu0 0.0
    %1527 = vmatpush1.msra.mxu0 0.0
    %1528 = vmatprep.mubr.f32.mxu0 0.0
    %1529 = vmatmul.mubr.f32.gmra.mrb[0].mxu0 %v1459
    %v1530 = vpop.f32.mrb[0].mxu0
    %v1531 = vadd.f32 %v1457, %v1530
    %v1532 = vpop.f32.mrb[0].mxu0
    %1533 = vmatprep.mubr.f32.mxu0 0.0
    %1534 = vmatmul.mubr.f32.gmra.mrb[0].mxu0 %v1462
    %v1535 = vpop.f32.mrb[0].mxu0
    %v1536 = vadd.f32 %v1457, %v1535
    %v1537 = vpop.f32.mrb[0].mxu0
    %1538 = vdwg.mxu0
    %v1539 = vmax.f32 %v1531, 0.0
    %v1540 = vmax.f32 %v1536, 0.0
    %v1541 = vlaneseq
    %v1542 = vshrl.u32 %v1541, 7
    %v1543 = vsub.s32 4, %v1542
    %v1544 = vrot.slane %v22, %v1543
    %vm1545 = vcmask 523264
    %v1547 = vsel %vm1545, %v1539, 0
    %v1550 = vsel %vm1545, %v1540, 0
    %1552 = vmatprep.subr.mxu0 0.0
    %1553 = vmatpush1.msra.mxu0 %v86
    %1554 = vmatprep.subr.mxu0 0.0
    %1555 = vmatpush1.msra.mxu0 %v87
    %1556 = vmatprep.subr.mxu0 0.0
    %1557 = vmatpush1.msra.mxu0 %v88
    %1558 = vmatprep.subr.mxu0 0.0
    %1559 = vmatpush1.msra.mxu0 %v89
    %1560 = vmatprep.subr.mxu0 0.0
    %1561 = vmatpush1.msra.mxu0 %v90
    %1562 = vmatprep.subr.mxu0 0.0
    %1563 = vmatpush1.msra.mxu0 %v91
    %1564 = vmatprep.subr.mxu0 0.0
    %1565 = vmatpush1.msra.mxu0 %v92
    %1566 = vmatprep.subr.mxu0 0.0
    %1567 = vmatpush1.msra.mxu0 %v93
    %1568 = vmatprep.subr.mxu0 0.0
    %1569 = vmatpush1.msra.mxu0 0.0
    %1570 = vmatprep.subr.mxu0 0.0
    %1571 = vmatpush1.msra.mxu0 0.0
    %1572 = vmatprep.subr.mxu0 0.0
    %1573 = vmatpush1.msra.mxu0 0.0
    %1574 = vmatprep.subr.mxu0 0.0
    %1575 = vmatpush1.msra.mxu0 0.0
    %1576 = vmatprep.subr.mxu0 0.0
    %1577 = vmatpush1.msra.mxu0 0.0
    %1578 = vmatprep.subr.mxu0 0.0
    %1579 = vmatpush1.msra.mxu0 0.0
    %1580 = vmatprep.subr.mxu0 0.0
    %1581 = vmatpush1.msra.mxu0 0.0
    %1582 = vmatprep.subr.mxu0 0.0
    %1583 = vmatpush1.msra.mxu0 0.0
    %1584 = vmatprep.subr.mxu0 0.0
    %1585 = vmatpush1.msra.mxu0 0.0
    %1586 = vmatprep.subr.mxu0 0.0
    %1587 = vmatpush1.msra.mxu0 0.0
    %1588 = vmatprep.subr.mxu0 0.0
    %1589 = vmatpush1.msra.mxu0 0.0
    %1590 = vmatprep.subr.mxu0 0.0
    %1591 = vmatpush1.msra.mxu0 0.0
    %1592 = vmatprep.subr.mxu0 0.0
    %1593 = vmatpush1.msra.mxu0 0.0
    %1594 = vmatprep.subr.mxu0 0.0
    %1595 = vmatpush1.msra.mxu0 0.0
    %1596 = vmatprep.subr.mxu0 0.0
    %1597 = vmatpush1.msra.mxu0 0.0
    %1598 = vmatprep.subr.mxu0 0.0
    %1599 = vmatpush1.msra.mxu0 0.0
    %1600 = vmatprep.subr.mxu0 0.0
    %1601 = vmatpush1.msra.mxu0 0.0
    %1602 = vmatprep.subr.mxu0 0.0
    %1603 = vmatpush1.msra.mxu0 0.0
    %1604 = vmatprep.subr.mxu0 0.0
    %1605 = vmatpush1.msra.mxu0 0.0
    %1606 = vmatprep.subr.mxu0 0.0
    %1607 = vmatpush1.msra.mxu0 0.0
    %1608 = vmatprep.subr.mxu0 0.0
    %1609 = vmatpush1.msra.mxu0 0.0
    %1610 = vmatprep.subr.mxu0 0.0
    %1611 = vmatpush1.msra.mxu0 0.0
    %1612 = vmatprep.subr.mxu0 0.0
    %1613 = vmatpush1.msra.mxu0 0.0
    %1614 = vmatprep.subr.mxu0 0.0
    %1615 = vmatpush1.msra.mxu0 0.0
    %1616 = vmatprep.mubr.f32.mxu0 0.0
    %1617 = vmatmul.mubr.f32.gmra.mrb[0].mxu0 %v1547
    %v1618 = vpop.f32.mrb[0].mxu0
    %v1619 = vadd.f32 %v1544, %v1618
    %v1620 = vpop.f32.mrb[0].mxu0
    %1621 = vmatprep.mubr.f32.mxu0 0.0
    %1622 = vmatmul.mubr.f32.gmra.mrb[0].mxu0 %v1550
    %v1623 = vpop.f32.mrb[0].mxu0
    %v1624 = vadd.f32 %v1544, %v1623
    %v1625 = vpop.f32.mrb[0].mxu0
    %1626 = vdwg.mxu0
    %v1627 = vadd.f32 %v1452, %v1619
    %v1628 = vadd.f32 %v1453, %v1624
    %v1629 = vsel %vm100, %v1627, 0.0
    %1630 = vadd.xlane.f32.xlu0 %v1629
    %v1631 = vpop.xlane.xlu0 %1630
    %v1632 = vsel %vm100, %v1628, 0.0
    %1633 = vadd.xlane.f32.xlu0 %v1632
    %v1634 = vpop.xlane.xlu0 %1633
    %v1635 = vmul.f32 %v1631, %v1421
    %v1636 = vmul.f32 %v1634, %v1421
    %v1637 = vsub.f32 %v1627, %v1635
    %v1638 = vsub.f32 %v1628, %v1636
    %v1639 = vmul.f32 %v1637, %v1637
    %v1640 = vmul.f32 %v1638, %v1638
    %v1641 = vsel %vm100, %v1639, 0.0
    %1642 = vadd.xlane.f32.xlu0 %v1641
    %v1643 = vpop.xlane.xlu0 %1642
    %v1644 = vsel %vm100, %v1640, 0.0
    %1645 = vadd.xlane.f32.xlu0 %v1644
    %v1646 = vpop.xlane.xlu0 %1645
    %v1647 = vmul.f32 %v1643, %v1421
    %v1648 = vmul.f32 %v1646, %v1421
    %v1649 = vadd.f32 %v1647, 1e-05
    %v1650 = vadd.f32 %v1648, 1e-05
    %v1651 = vrsqrt.pop %v1649
    %v1652 = vrsqrt.pop %v1650
    %v1653 = vmul.f32 %v1637, %v1651
    %v1654 = vmul.f32 %v1638, %v1652
    %v1655 = vlaneseq
    %v1656 = vshrl.u32 %v1655, 7
    %v1657 = vsub.s32 7, %v1656
    %v1658 = vrot.slane %v22, %v1657
    %v1659 = vmul.f32 %v1653, %v1658
    %v1660 = vmul.f32 %v1654, %v1658
    %v1661 = vlaneseq
    %v1662 = vshrl.u32 %v1661, 7
    %v1663 = vsub.s32 0, %v1662
    %v1664 = vrot.slane %v23, %v1663
    %v1665 = vadd.f32 %v1659, %v1664
    %v1666 = vadd.f32 %v1660, %v1664
    %s1667 = scalar_lea.vmem %s2, 192
    %v1668 = vld [vmem:[%s1667] sm:$0xff]
    %v1669 = vld [vmem:[%s1667 + $0x8] sm:$0xff]
    %v1670 = vld [vmem:[%s1667 + $0x10] sm:$0xff]
    %v1671 = vld [vmem:[%s1667 + $0x18] sm:$0xff]
    %v1672 = vld [vmem:[%s1667 + $0x20] sm:$0xff]
    %v1673 = vld [vmem:[%s1667 + $0x28] sm:$0xff]
    %v1674 = vld [vmem:[%s1667 + $0x30] sm:$0xff]
    %v1675 = vld [vmem:[%s1667 + $0x38] sm:$0xff]
    %v1676 = vld [vmem:[%s1667 + $0x40] sm:$0xff]
    %v1677 = vld [vmem:[%s1667 + $0x48] sm:$0xff]
    %v1678 = vld [vmem:[%s1667 + $0x50] sm:$0xff]
    %v1679 = vld [vmem:[%s1667 + $0x58] sm:$0xff]
    %v1680 = vld [vmem:[%s1667 + $0x60] sm:$0xff]
    %v1681 = vld [vmem:[%s1667 + $0x68] sm:$0xff]
    %v1682 = vld [vmem:[%s1667 + $0x70] sm:$0xff]
    %v1683 = vld [vmem:[%s1667 + $0x78] sm:$0xff]
    %v1684 = vld [vmem:[%s1667 + $0x80] sm:$0xff]
    %v1685 = vld [vmem:[%s1667 + $0x88] sm:$0xff]
    %v1686 = vld [vmem:[%s1667 + $0x90] sm:$0xff]
    %v1687 = vld [vmem:[%s1667 + $0x98] sm:$0xff]
    %v1688 = vld [vmem:[%s1667 + $0xa0] sm:$0xff]
    %v1689 = vld [vmem:[%s1667 + $0xa8] sm:$0xff]
    %v1690 = vld [vmem:[%s1667 + $0xb0] sm:$0xff]
    %v1691 = vld [vmem:[%s1667 + $0xb8] sm:$0xff]
    %v1692 = vadd.f32 %v1665, %v20
    %v1693 = vadd.f32 %v1666, %v21
    %v1694 = vlaneseq
    %v1695 = vshrl.u32 %v1694, 7
    %v1696 = vsub.s32 1, %v1695
    %v1697 = vrot.slane %v23, %v1696
    %v1699 = vsel %vm100, %v1692, 0
    %v1702 = vsel %vm100, %v1693, 0
    %1704 = vmatprep.subr.mxu0 0.0
    %1705 = vmatpush1.msra.mxu0 %v1668
    %1706 = vmatprep.subr.mxu0 0.0
    %1707 = vmatpush1.msra.mxu0 %v1669
    %1708 = vmatprep.subr.mxu0 0.0
    %1709 = vmatpush1.msra.mxu0 %v1670
    %1710 = vmatprep.subr.mxu0 0.0
    %1711 = vmatpush1.msra.mxu0 %v1671
    %1712 = vmatprep.subr.mxu0 0.0
    %1713 = vmatpush1.msra.mxu0 0.0
    %1714 = vmatprep.subr.mxu0 0.0
    %1715 = vmatpush1.msra.mxu0 0.0
    %1716 = vmatprep.subr.mxu0 0.0
    %1717 = vmatpush1.msra.mxu0 0.0
    %1718 = vmatprep.subr.mxu0 0.0
    %1719 = vmatpush1.msra.mxu0 0.0
    %1720 = vmatprep.subr.mxu0 0.0
    %1721 = vmatpush1.msra.mxu0 0.0
    %1722 = vmatprep.subr.mxu0 0.0
    %1723 = vmatpush1.msra.mxu0 0.0
    %1724 = vmatprep.subr.mxu0 0.0
    %1725 = vmatpush1.msra.mxu0 0.0
    %1726 = vmatprep.subr.mxu0 0.0
    %1727 = vmatpush1.msra.mxu0 0.0
    %1728 = vmatprep.subr.mxu0 0.0
    %1729 = vmatpush1.msra.mxu0 0.0
    %1730 = vmatprep.subr.mxu0 0.0
    %1731 = vmatpush1.msra.mxu0 0.0
    %1732 = vmatprep.subr.mxu0 0.0
    %1733 = vmatpush1.msra.mxu0 0.0
    %1734 = vmatprep.subr.mxu0 0.0
    %1735 = vmatpush1.msra.mxu0 0.0
    %1736 = vmatprep.subr.mxu0 0.0
    %1737 = vmatpush1.msra.mxu0 0.0
    %1738 = vmatprep.subr.mxu0 0.0
    %1739 = vmatpush1.msra.mxu0 0.0
    %1740 = vmatprep.subr.mxu0 0.0
    %1741 = vmatpush1.msra.mxu0 0.0
    %1742 = vmatprep.subr.mxu0 0.0
    %1743 = vmatpush1.msra.mxu0 0.0
    %1744 = vmatprep.subr.mxu0 0.0
    %1745 = vmatpush1.msra.mxu0 0.0
    %1746 = vmatprep.subr.mxu0 0.0
    %1747 = vmatpush1.msra.mxu0 0.0
    %1748 = vmatprep.subr.mxu0 0.0
    %1749 = vmatpush1.msra.mxu0 0.0
    %1750 = vmatprep.subr.mxu0 0.0
    %1751 = vmatpush1.msra.mxu0 0.0
    %1752 = vmatprep.subr.mxu0 0.0
    %1753 = vmatpush1.msra.mxu0 0.0
    %1754 = vmatprep.subr.mxu0 0.0
    %1755 = vmatpush1.msra.mxu0 0.0
    %1756 = vmatprep.subr.mxu0 0.0
    %1757 = vmatpush1.msra.mxu0 0.0
    %1758 = vmatprep.subr.mxu0 0.0
    %1759 = vmatpush1.msra.mxu0 0.0
    %1760 = vmatprep.subr.mxu0 0.0
    %1761 = vmatpush1.msra.mxu0 0.0
    %1762 = vmatprep.subr.mxu0 0.0
    %1763 = vmatpush1.msra.mxu0 0.0
    %1764 = vmatprep.subr.mxu0 0.0
    %1765 = vmatpush1.msra.mxu0 0.0
    %1766 = vmatprep.subr.mxu0 0.0
    %1767 = vmatpush1.msra.mxu0 0.0
    %1768 = vmatprep.mubr.f32.mxu0 0.0
    %1769 = vmatmul.mubr.f32.gmra.mrb[0].mxu0 %v1699
    %v1770 = vpop.f32.mrb[0].mxu0
    %v1771 = vadd.f32 %v1697, %v1770
    %v1772 = vpop.f32.mrb[0].mxu0
    %1773 = vmatprep.mubr.f32.mxu0 0.0
    %1774 = vmatmul.mubr.f32.gmra.mrb[0].mxu0 %v1702
    %v1775 = vpop.f32.mrb[0].mxu0
    %v1776 = vadd.f32 %v1697, %v1775
    %v1777 = vpop.f32.mrb[0].mxu0
    %1778 = vdwg.mxu0
    %v1779 = vlaneseq
    %v1780 = vshrl.u32 %v1779, 7
    %v1781 = vsub.s32 2, %v1780
    %v1782 = vrot.slane %v23, %v1781
    %v1784 = vsel %vm100, %v1665, 0
    %v1787 = vsel %vm100, %v1666, 0
    %1789 = vmatprep.subr.mxu0 0.0
    %1790 = vmatpush1.msra.mxu0 %v1672
    %1791 = vmatprep.subr.mxu0 0.0
    %1792 = vmatpush1.msra.mxu0 %v1673
    %1793 = vmatprep.subr.mxu0 0.0
    %1794 = vmatpush1.msra.mxu0 %v1674
    %1795 = vmatprep.subr.mxu0 0.0
    %1796 = vmatpush1.msra.mxu0 %v1675
    %1797 = vmatprep.subr.mxu0 0.0
    %1798 = vmatpush1.msra.mxu0 0.0
    %1799 = vmatprep.subr.mxu0 0.0
    %1800 = vmatpush1.msra.mxu0 0.0
    %1801 = vmatprep.subr.mxu0 0.0
    %1802 = vmatpush1.msra.mxu0 0.0
    %1803 = vmatprep.subr.mxu0 0.0
    %1804 = vmatpush1.msra.mxu0 0.0
    %1805 = vmatprep.subr.mxu0 0.0
    %1806 = vmatpush1.msra.mxu0 0.0
    %1807 = vmatprep.subr.mxu0 0.0
    %1808 = vmatpush1.msra.mxu0 0.0
    %1809 = vmatprep.subr.mxu0 0.0
    %1810 = vmatpush1.msra.mxu0 0.0
    %1811 = vmatprep.subr.mxu0 0.0
    %1812 = vmatpush1.msra.mxu0 0.0
    %1813 = vmatprep.subr.mxu0 0.0
    %1814 = vmatpush1.msra.mxu0 0.0
    %1815 = vmatprep.subr.mxu0 0.0
    %1816 = vmatpush1.msra.mxu0 0.0
    %1817 = vmatprep.subr.mxu0 0.0
    %1818 = vmatpush1.msra.mxu0 0.0
    %1819 = vmatprep.subr.mxu0 0.0
    %1820 = vmatpush1.msra.mxu0 0.0
    %1821 = vmatprep.subr.mxu0 0.0
    %1822 = vmatpush1.msra.mxu0 0.0
    %1823 = vmatprep.subr.mxu0 0.0
    %1824 = vmatpush1.msra.mxu0 0.0
    %1825 = vmatprep.subr.mxu0 0.0
    %1826 = vmatpush1.msra.mxu0 0.0
    %1827 = vmatprep.subr.mxu0 0.0
    %1828 = vmatpush1.msra.mxu0 0.0
    %1829 = vmatprep.subr.mxu0 0.0
    %1830 = vmatpush1.msra.mxu0 0.0
    %1831 = vmatprep.subr.mxu0 0.0
    %1832 = vmatpush1.msra.mxu0 0.0
    %1833 = vmatprep.subr.mxu0 0.0
    %1834 = vmatpush1.msra.mxu0 0.0
    %1835 = vmatprep.subr.mxu0 0.0
    %1836 = vmatpush1.msra.mxu0 0.0
    %1837 = vmatprep.subr.mxu0 0.0
    %1838 = vmatpush1.msra.mxu0 0.0
    %1839 = vmatprep.subr.mxu0 0.0
    %1840 = vmatpush1.msra.mxu0 0.0
    %1841 = vmatprep.subr.mxu0 0.0
    %1842 = vmatpush1.msra.mxu0 0.0
    %1843 = vmatprep.subr.mxu0 0.0
    %1844 = vmatpush1.msra.mxu0 0.0
    %1845 = vmatprep.subr.mxu0 0.0
    %1846 = vmatpush1.msra.mxu0 0.0
    %1847 = vmatprep.subr.mxu0 0.0
    %1848 = vmatpush1.msra.mxu0 0.0
    %1849 = vmatprep.subr.mxu0 0.0
    %1850 = vmatpush1.msra.mxu0 0.0
    %1851 = vmatprep.subr.mxu0 0.0
    %1852 = vmatpush1.msra.mxu0 0.0
    %1853 = vmatprep.mubr.f32.mxu0 0.0
    %1854 = vmatmul.mubr.f32.gmra.mrb[0].mxu0 %v1784
    %v1855 = vpop.f32.mrb[0].mxu0
    %v1856 = vadd.f32 %v1782, %v1855
    %v1857 = vpop.f32.mrb[0].mxu0
    %1858 = vmatprep.mubr.f32.mxu0 0.0
    %1859 = vmatmul.mubr.f32.gmra.mrb[0].mxu0 %v1787
    %v1860 = vpop.f32.mrb[0].mxu0
    %v1861 = vadd.f32 %v1782, %v1860
    %v1862 = vpop.f32.mrb[0].mxu0
    %1863 = vdwg.mxu0
    %1866 = vrot.lane.b32.xlu0 %v1771, 96
    %v1867 = vpop.permute.xlu0 %1866
    %1868 = vrot.lane.b32.xlu0 %v1776, 96
    %v1869 = vpop.permute.xlu0 %1868
    %v1870 = vsel %vm273, %v1771, 0
    %v1872 = vsel %vm273, %v1776, 0
    %v1874 = vsel %vm273, %v1867, 0
    %v1876 = vsel %vm273, %v1869, 0
    %1878 = vmatprep.subr.mxu0 0.0
    %1879 = vmatpush1.xpose.msra.mxu0 %v1874
    %1880 = vmatprep.subr.mxu0 0.0
    %1881 = vmatpush1.xpose.msra.mxu0 %v1876
    %1882 = vmatprep.subr.mxu0 0.0
    %1883 = vmatpush1.xpose.msra.mxu0 0.0
    %1884 = vmatprep.subr.mxu0 0.0
    %1885 = vmatpush1.xpose.msra.mxu0 0.0
    %1886 = vmatprep.subr.mxu0 0.0
    %1887 = vmatpush1.xpose.msra.mxu0 0.0
    %1888 = vmatprep.subr.mxu0 0.0
    %1889 = vmatpush1.xpose.msra.mxu0 0.0
    %1890 = vmatprep.subr.mxu0 0.0
    %1891 = vmatpush1.xpose.msra.mxu0 0.0
    %1892 = vmatprep.subr.mxu0 0.0
    %1893 = vmatpush1.xpose.msra.mxu0 0.0
    %1894 = vmatprep.subr.mxu0 0.0
    %1895 = vmatpush1.xpose.msra.mxu0 0.0
    %1896 = vmatprep.subr.mxu0 0.0
    %1897 = vmatpush1.xpose.msra.mxu0 0.0
    %1898 = vmatprep.subr.mxu0 0.0
    %1899 = vmatpush1.xpose.msra.mxu0 0.0
    %1900 = vmatprep.subr.mxu0 0.0
    %1901 = vmatpush1.xpose.msra.mxu0 0.0
    %1902 = vmatprep.subr.mxu0 0.0
    %1903 = vmatpush1.xpose.msra.mxu0 0.0
    %1904 = vmatprep.subr.mxu0 0.0
    %1905 = vmatpush1.xpose.msra.mxu0 0.0
    %1906 = vmatprep.subr.mxu0 0.0
    %1907 = vmatpush1.xpose.msra.mxu0 0.0
    %1908 = vmatprep.subr.mxu0 0.0
    %1909 = vmatpush1.xpose.msra.mxu0 0.0
    %1910 = vmatprep.subr.mxu0 0.0
    %1911 = vmatpush1.xpose.msra.mxu0 0.0
    %1912 = vmatprep.subr.mxu0 0.0
    %1913 = vmatpush1.xpose.msra.mxu0 0.0
    %1914 = vmatprep.subr.mxu0 0.0
    %1915 = vmatpush1.xpose.msra.mxu0 0.0
    %1916 = vmatprep.subr.mxu0 0.0
    %1917 = vmatpush1.xpose.msra.mxu0 0.0
    %1918 = vmatprep.subr.mxu0 0.0
    %1919 = vmatpush1.xpose.msra.mxu0 0.0
    %1920 = vmatprep.subr.mxu0 0.0
    %1921 = vmatpush1.xpose.msra.mxu0 0.0
    %1922 = vmatprep.subr.mxu0 0.0
    %1923 = vmatpush1.xpose.msra.mxu0 0.0
    %1924 = vmatprep.subr.mxu0 0.0
    %1925 = vmatpush1.xpose.msra.mxu0 0.0
    %1926 = vmatprep.subr.mxu0 0.0
    %1927 = vmatpush1.xpose.msra.mxu0 0.0
    %1928 = vmatprep.subr.mxu0 0.0
    %1929 = vmatpush1.xpose.msra.mxu0 0.0
    %1930 = vmatprep.subr.mxu0 0.0
    %1931 = vmatpush1.xpose.msra.mxu0 0.0
    %1932 = vmatprep.subr.mxu0 0.0
    %1933 = vmatpush1.xpose.msra.mxu0 0.0
    %1934 = vmatprep.subr.mxu0 0.0
    %1935 = vmatpush1.xpose.msra.mxu0 0.0
    %1936 = vmatprep.subr.mxu0 0.0
    %1937 = vmatpush1.xpose.msra.mxu0 0.0
    %1938 = vmatprep.subr.mxu0 0.0
    %1939 = vmatpush1.xpose.msra.mxu0 0.0
    %1940 = vmatprep.subr.mxu0 0.0
    %1941 = vmatpush1.xpose.msra.mxu0 0.0
    %1942 = vmatprep.mubr.f32.mxu0 0.0
    %1943 = vmatmul.mubr.f32.gmra.mrb[0].mxu0 %v1870
    %v1944 = vpop.f32.mrb[0].mxu0
    %v1945 = vadd.f32 0.0, %v1944
    %v1946 = vpop.f32.mrb[0].mxu0
    %1947 = vmatprep.mubr.f32.mxu0 0.0
    %1948 = vmatmul.mubr.f32.gmra.mrb[0].mxu0 %v1872
    %v1949 = vpop.f32.mrb[0].mxu0
    %v1950 = vadd.f32 0.0, %v1949
    %v1951 = vpop.f32.mrb[0].mxu0
    %1952 = vdwg.mxu0
    %v1953 = vmul.f32 %v1945, 0.35355338
    %v1954 = vmul.f32 %v1950, 0.35355338
    %v1955 = vadd.f32 %v1953, %v68
    %v1956 = vadd.f32 %v1954, %v69
    %1957 = vrot.lane.b32.xlu0 %v1771, 120
    %v1958 = vpop.permute.xlu0 %1957
    %1959 = vrot.lane.b32.xlu0 %v1776, 120
    %v1960 = vpop.permute.xlu0 %1959
    %1961 = vrot.lane.b32.xlu0 %v1771, 88
    %v1962 = vpop.permute.xlu0 %1961
    %1963 = vrot.lane.b32.xlu0 %v1776, 88
    %v1964 = vpop.permute.xlu0 %1963
    %v1965 = vsel %vm273, %v1958, 0
    %v1967 = vsel %vm273, %v1960, 0
    %v1969 = vsel %vm273, %v1962, 0
    %v1971 = vsel %vm273, %v1964, 0
    %1973 = vmatprep.subr.mxu0 0.0
    %1974 = vmatpush1.xpose.msra.mxu0 %v1969
    %1975 = vmatprep.subr.mxu0 0.0
    %1976 = vmatpush1.xpose.msra.mxu0 %v1971
    %1977 = vmatprep.subr.mxu0 0.0
    %1978 = vmatpush1.xpose.msra.mxu0 0.0
    %1979 = vmatprep.subr.mxu0 0.0
    %1980 = vmatpush1.xpose.msra.mxu0 0.0
    %1981 = vmatprep.subr.mxu0 0.0
    %1982 = vmatpush1.xpose.msra.mxu0 0.0
    %1983 = vmatprep.subr.mxu0 0.0
    %1984 = vmatpush1.xpose.msra.mxu0 0.0
    %1985 = vmatprep.subr.mxu0 0.0
    %1986 = vmatpush1.xpose.msra.mxu0 0.0
    %1987 = vmatprep.subr.mxu0 0.0
    %1988 = vmatpush1.xpose.msra.mxu0 0.0
    %1989 = vmatprep.subr.mxu0 0.0
    %1990 = vmatpush1.xpose.msra.mxu0 0.0
    %1991 = vmatprep.subr.mxu0 0.0
    %1992 = vmatpush1.xpose.msra.mxu0 0.0
    %1993 = vmatprep.subr.mxu0 0.0
    %1994 = vmatpush1.xpose.msra.mxu0 0.0
    %1995 = vmatprep.subr.mxu0 0.0
    %1996 = vmatpush1.xpose.msra.mxu0 0.0
    %1997 = vmatprep.subr.mxu0 0.0
    %1998 = vmatpush1.xpose.msra.mxu0 0.0
    %1999 = vmatprep.subr.mxu0 0.0
    %2000 = vmatpush1.xpose.msra.mxu0 0.0
    %2001 = vmatprep.subr.mxu0 0.0
    %2002 = vmatpush1.xpose.msra.mxu0 0.0
    %2003 = vmatprep.subr.mxu0 0.0
    %2004 = vmatpush1.xpose.msra.mxu0 0.0
    %2005 = vmatprep.subr.mxu0 0.0
    %2006 = vmatpush1.xpose.msra.mxu0 0.0
    %2007 = vmatprep.subr.mxu0 0.0
    %2008 = vmatpush1.xpose.msra.mxu0 0.0
    %2009 = vmatprep.subr.mxu0 0.0
    %2010 = vmatpush1.xpose.msra.mxu0 0.0
    %2011 = vmatprep.subr.mxu0 0.0
    %2012 = vmatpush1.xpose.msra.mxu0 0.0
    %2013 = vmatprep.subr.mxu0 0.0
    %2014 = vmatpush1.xpose.msra.mxu0 0.0
    %2015 = vmatprep.subr.mxu0 0.0
    %2016 = vmatpush1.xpose.msra.mxu0 0.0
    %2017 = vmatprep.subr.mxu0 0.0
    %2018 = vmatpush1.xpose.msra.mxu0 0.0
    %2019 = vmatprep.subr.mxu0 0.0
    %2020 = vmatpush1.xpose.msra.mxu0 0.0
    %2021 = vmatprep.subr.mxu0 0.0
    %2022 = vmatpush1.xpose.msra.mxu0 0.0
    %2023 = vmatprep.subr.mxu0 0.0
    %2024 = vmatpush1.xpose.msra.mxu0 0.0
    %2025 = vmatprep.subr.mxu0 0.0
    %2026 = vmatpush1.xpose.msra.mxu0 0.0
    %2027 = vmatprep.subr.mxu0 0.0
    %2028 = vmatpush1.xpose.msra.mxu0 0.0
    %2029 = vmatprep.subr.mxu0 0.0
    %2030 = vmatpush1.xpose.msra.mxu0 0.0
    %2031 = vmatprep.subr.mxu0 0.0
    %2032 = vmatpush1.xpose.msra.mxu0 0.0
    %2033 = vmatprep.subr.mxu0 0.0
    %2034 = vmatpush1.xpose.msra.mxu0 0.0
    %2035 = vmatprep.subr.mxu0 0.0
    %2036 = vmatpush1.xpose.msra.mxu0 0.0
    %2037 = vmatprep.mubr.f32.mxu0 0.0
    %2038 = vmatmul.mubr.f32.gmra.mrb[0].mxu0 %v1965
    %v2039 = vpop.f32.mrb[0].mxu0
    %v2040 = vadd.f32 0.0, %v2039
    %v2041 = vpop.f32.mrb[0].mxu0
    %2042 = vmatprep.mubr.f32.mxu0 0.0
    %2043 = vmatmul.mubr.f32.gmra.mrb[0].mxu0 %v1967
    %v2044 = vpop.f32.mrb[0].mxu0
    %v2045 = vadd.f32 0.0, %v2044
    %v2046 = vpop.f32.mrb[0].mxu0
    %2047 = vdwg.mxu0
    %v2048 = vmul.f32 %v2040, 0.35355338
    %v2049 = vmul.f32 %v2045, 0.35355338
    %v2050 = vadd.f32 %v2048, %v68
    %v2051 = vadd.f32 %v2049, %v69
    %2052 = vrot.lane.b32.xlu0 %v1771, 112
    %v2053 = vpop.permute.xlu0 %2052
    %2054 = vrot.lane.b32.xlu0 %v1776, 112
    %v2055 = vpop.permute.xlu0 %2054
    %2056 = vrot.lane.b32.xlu0 %v1771, 80
    %v2057 = vpop.permute.xlu0 %2056
    %2058 = vrot.lane.b32.xlu0 %v1776, 80
    %v2059 = vpop.permute.xlu0 %2058
    %v2060 = vsel %vm273, %v2053, 0
    %v2062 = vsel %vm273, %v2055, 0
    %v2064 = vsel %vm273, %v2057, 0
    %v2066 = vsel %vm273, %v2059, 0
    %2068 = vmatprep.subr.mxu0 0.0
    %2069 = vmatpush1.xpose.msra.mxu0 %v2064
    %2070 = vmatprep.subr.mxu0 0.0
    %2071 = vmatpush1.xpose.msra.mxu0 %v2066
    %2072 = vmatprep.subr.mxu0 0.0
    %2073 = vmatpush1.xpose.msra.mxu0 0.0
    %2074 = vmatprep.subr.mxu0 0.0
    %2075 = vmatpush1.xpose.msra.mxu0 0.0
    %2076 = vmatprep.subr.mxu0 0.0
    %2077 = vmatpush1.xpose.msra.mxu0 0.0
    %2078 = vmatprep.subr.mxu0 0.0
    %2079 = vmatpush1.xpose.msra.mxu0 0.0
    %2080 = vmatprep.subr.mxu0 0.0
    %2081 = vmatpush1.xpose.msra.mxu0 0.0
    %2082 = vmatprep.subr.mxu0 0.0
    %2083 = vmatpush1.xpose.msra.mxu0 0.0
    %2084 = vmatprep.subr.mxu0 0.0
    %2085 = vmatpush1.xpose.msra.mxu0 0.0
    %2086 = vmatprep.subr.mxu0 0.0
    %2087 = vmatpush1.xpose.msra.mxu0 0.0
    %2088 = vmatprep.subr.mxu0 0.0
    %2089 = vmatpush1.xpose.msra.mxu0 0.0
    %2090 = vmatprep.subr.mxu0 0.0
    %2091 = vmatpush1.xpose.msra.mxu0 0.0
    %2092 = vmatprep.subr.mxu0 0.0
    %2093 = vmatpush1.xpose.msra.mxu0 0.0
    %2094 = vmatprep.subr.mxu0 0.0
    %2095 = vmatpush1.xpose.msra.mxu0 0.0
    %2096 = vmatprep.subr.mxu0 0.0
    %2097 = vmatpush1.xpose.msra.mxu0 0.0
    %2098 = vmatprep.subr.mxu0 0.0
    %2099 = vmatpush1.xpose.msra.mxu0 0.0
    %2100 = vmatprep.subr.mxu0 0.0
    %2101 = vmatpush1.xpose.msra.mxu0 0.0
    %2102 = vmatprep.subr.mxu0 0.0
    %2103 = vmatpush1.xpose.msra.mxu0 0.0
    %2104 = vmatprep.subr.mxu0 0.0
    %2105 = vmatpush1.xpose.msra.mxu0 0.0
    %2106 = vmatprep.subr.mxu0 0.0
    %2107 = vmatpush1.xpose.msra.mxu0 0.0
    %2108 = vmatprep.subr.mxu0 0.0
    %2109 = vmatpush1.xpose.msra.mxu0 0.0
    %2110 = vmatprep.subr.mxu0 0.0
    %2111 = vmatpush1.xpose.msra.mxu0 0.0
    %2112 = vmatprep.subr.mxu0 0.0
    %2113 = vmatpush1.xpose.msra.mxu0 0.0
    %2114 = vmatprep.subr.mxu0 0.0
    %2115 = vmatpush1.xpose.msra.mxu0 0.0
    %2116 = vmatprep.subr.mxu0 0.0
    %2117 = vmatpush1.xpose.msra.mxu0 0.0
    %2118 = vmatprep.subr.mxu0 0.0
    %2119 = vmatpush1.xpose.msra.mxu0 0.0
    %2120 = vmatprep.subr.mxu0 0.0
    %2121 = vmatpush1.xpose.msra.mxu0 0.0
    %2122 = vmatprep.subr.mxu0 0.0
    %2123 = vmatpush1.xpose.msra.mxu0 0.0
    %2124 = vmatprep.subr.mxu0 0.0
    %2125 = vmatpush1.xpose.msra.mxu0 0.0
    %2126 = vmatprep.subr.mxu0 0.0
    %2127 = vmatpush1.xpose.msra.mxu0 0.0
    %2128 = vmatprep.subr.mxu0 0.0
    %2129 = vmatpush1.xpose.msra.mxu0 0.0
    %2130 = vmatprep.subr.mxu0 0.0
    %2131 = vmatpush1.xpose.msra.mxu0 0.0
    %2132 = vmatprep.mubr.f32.mxu0 0.0
    %2133 = vmatmul.mubr.f32.gmra.mrb[0].mxu0 %v2060
    %v2134 = vpop.f32.mrb[0].mxu0
    %v2135 = vadd.f32 0.0, %v2134
    %v2136 = vpop.f32.mrb[0].mxu0
    %2137 = vmatprep.mubr.f32.mxu0 0.0
    %2138 = vmatmul.mubr.f32.gmra.mrb[0].mxu0 %v2062
    %v2139 = vpop.f32.mrb[0].mxu0
    %v2140 = vadd.f32 0.0, %v2139
    %v2141 = vpop.f32.mrb[0].mxu0
    %2142 = vdwg.mxu0
    %v2143 = vmul.f32 %v2135, 0.35355338
    %v2144 = vmul.f32 %v2140, 0.35355338
    %v2145 = vadd.f32 %v2143, %v68
    %v2146 = vadd.f32 %v2144, %v69
    %2147 = vrot.lane.b32.xlu0 %v1771, 104
    %v2148 = vpop.permute.xlu0 %2147
    %2149 = vrot.lane.b32.xlu0 %v1776, 104
    %v2150 = vpop.permute.xlu0 %2149
    %2151 = vrot.lane.b32.xlu0 %v1771, 72
    %v2152 = vpop.permute.xlu0 %2151
    %2153 = vrot.lane.b32.xlu0 %v1776, 72
    %v2154 = vpop.permute.xlu0 %2153
    %v2155 = vsel %vm273, %v2148, 0
    %v2157 = vsel %vm273, %v2150, 0
    %v2159 = vsel %vm273, %v2152, 0
    %v2161 = vsel %vm273, %v2154, 0
    %2163 = vmatprep.subr.mxu0 0.0
    %2164 = vmatpush1.xpose.msra.mxu0 %v2159
    %2165 = vmatprep.subr.mxu0 0.0
    %2166 = vmatpush1.xpose.msra.mxu0 %v2161
    %2167 = vmatprep.subr.mxu0 0.0
    %2168 = vmatpush1.xpose.msra.mxu0 0.0
    %2169 = vmatprep.subr.mxu0 0.0
    %2170 = vmatpush1.xpose.msra.mxu0 0.0
    %2171 = vmatprep.subr.mxu0 0.0
    %2172 = vmatpush1.xpose.msra.mxu0 0.0
    %2173 = vmatprep.subr.mxu0 0.0
    %2174 = vmatpush1.xpose.msra.mxu0 0.0
    %2175 = vmatprep.subr.mxu0 0.0
    %2176 = vmatpush1.xpose.msra.mxu0 0.0
    %2177 = vmatprep.subr.mxu0 0.0
    %2178 = vmatpush1.xpose.msra.mxu0 0.0
    %2179 = vmatprep.subr.mxu0 0.0
    %2180 = vmatpush1.xpose.msra.mxu0 0.0
    %2181 = vmatprep.subr.mxu0 0.0
    %2182 = vmatpush1.xpose.msra.mxu0 0.0
    %2183 = vmatprep.subr.mxu0 0.0
    %2184 = vmatpush1.xpose.msra.mxu0 0.0
    %2185 = vmatprep.subr.mxu0 0.0
    %2186 = vmatpush1.xpose.msra.mxu0 0.0
    %2187 = vmatprep.subr.mxu0 0.0
    %2188 = vmatpush1.xpose.msra.mxu0 0.0
    %2189 = vmatprep.subr.mxu0 0.0
    %2190 = vmatpush1.xpose.msra.mxu0 0.0
    %2191 = vmatprep.subr.mxu0 0.0
    %2192 = vmatpush1.xpose.msra.mxu0 0.0
    %2193 = vmatprep.subr.mxu0 0.0
    %2194 = vmatpush1.xpose.msra.mxu0 0.0
    %2195 = vmatprep.subr.mxu0 0.0
    %2196 = vmatpush1.xpose.msra.mxu0 0.0
    %2197 = vmatprep.subr.mxu0 0.0
    %2198 = vmatpush1.xpose.msra.mxu0 0.0
    %2199 = vmatprep.subr.mxu0 0.0
    %2200 = vmatpush1.xpose.msra.mxu0 0.0
    %2201 = vmatprep.subr.mxu0 0.0
    %2202 = vmatpush1.xpose.msra.mxu0 0.0
    %2203 = vmatprep.subr.mxu0 0.0
    %2204 = vmatpush1.xpose.msra.mxu0 0.0
    %2205 = vmatprep.subr.mxu0 0.0
    %2206 = vmatpush1.xpose.msra.mxu0 0.0
    %2207 = vmatprep.subr.mxu0 0.0
    %2208 = vmatpush1.xpose.msra.mxu0 0.0
    %2209 = vmatprep.subr.mxu0 0.0
    %2210 = vmatpush1.xpose.msra.mxu0 0.0
    %2211 = vmatprep.subr.mxu0 0.0
    %2212 = vmatpush1.xpose.msra.mxu0 0.0
    %2213 = vmatprep.subr.mxu0 0.0
    %2214 = vmatpush1.xpose.msra.mxu0 0.0
    %2215 = vmatprep.subr.mxu0 0.0
    %2216 = vmatpush1.xpose.msra.mxu0 0.0
    %2217 = vmatprep.subr.mxu0 0.0
    %2218 = vmatpush1.xpose.msra.mxu0 0.0
    %2219 = vmatprep.subr.mxu0 0.0
    %2220 = vmatpush1.xpose.msra.mxu0 0.0
    %2221 = vmatprep.subr.mxu0 0.0
    %2222 = vmatpush1.xpose.msra.mxu0 0.0
    %2223 = vmatprep.subr.mxu0 0.0
    %2224 = vmatpush1.xpose.msra.mxu0 0.0
    %2225 = vmatprep.subr.mxu0 0.0
    %2226 = vmatpush1.xpose.msra.mxu0 0.0
    %2227 = vmatprep.mubr.f32.mxu0 0.0
    %2228 = vmatmul.mubr.f32.gmra.mrb[0].mxu0 %v2155
    %v2229 = vpop.f32.mrb[0].mxu0
    %v2230 = vadd.f32 0.0, %v2229
    %v2231 = vpop.f32.mrb[0].mxu0
    %2232 = vmatprep.mubr.f32.mxu0 0.0
    %2233 = vmatmul.mubr.f32.gmra.mrb[0].mxu0 %v2157
    %v2234 = vpop.f32.mrb[0].mxu0
    %v2235 = vadd.f32 0.0, %v2234
    %v2236 = vpop.f32.mrb[0].mxu0
    %2237 = vdwg.mxu0
    %v2238 = vmul.f32 %v2230, 0.35355338
    %v2239 = vmul.f32 %v2235, 0.35355338
    %v2240 = vadd.f32 %v2238, %v68
    %v2241 = vadd.f32 %v2239, %v69
    %v2242 = vsel %vm646, %v1955, -inf
    %2243 = vmax.xlane.f32.xlu0 %v2242
    %v2244 = vpop.xlane.xlu0 %2243
    %v2245 = vsel %vm646, %v1956, -inf
    %2246 = vmax.xlane.f32.xlu0 %v2245
    %v2247 = vpop.xlane.xlu0 %2246
    %v2248 = vsub.f32 %v1955, %v2244
    %v2249 = vsub.f32 %v1956, %v2247
    %v2250 = vmul.f32 %v2248, 1.442695
    %v2251 = vpow.pop %v2250
    %v2252 = vmul.f32 %v2249, 1.442695
    %v2253 = vpow.pop %v2252
    %v2254 = vsel %vm646, %v2251, 0.0
    %2255 = vadd.xlane.f32.xlu0 %v2254
    %v2256 = vpop.xlane.xlu0 %2255
    %v2257 = vsel %vm646, %v2253, 0.0
    %2258 = vadd.xlane.f32.xlu0 %v2257
    %v2259 = vpop.xlane.xlu0 %2258
    %v2260 = vrcp.pop %v2256
    %v2261 = vmul.f32 %v2251, %v2260
    %v2262 = vrcp.pop %v2259
    %v2263 = vmul.f32 %v2253, %v2262
    %v2264 = vsel %vm646, %v2050, -inf
    %2265 = vmax.xlane.f32.xlu0 %v2264
    %v2266 = vpop.xlane.xlu0 %2265
    %v2267 = vsel %vm646, %v2051, -inf
    %2268 = vmax.xlane.f32.xlu0 %v2267
    %v2269 = vpop.xlane.xlu0 %2268
    %v2270 = vsub.f32 %v2050, %v2266
    %v2271 = vsub.f32 %v2051, %v2269
    %v2272 = vmul.f32 %v2270, 1.442695
    %v2273 = vpow.pop %v2272
    %v2274 = vmul.f32 %v2271, 1.442695
    %v2275 = vpow.pop %v2274
    %v2276 = vsel %vm646, %v2273, 0.0
    %2277 = vadd.xlane.f32.xlu0 %v2276
    %v2278 = vpop.xlane.xlu0 %2277
    %v2279 = vsel %vm646, %v2275, 0.0
    %2280 = vadd.xlane.f32.xlu0 %v2279
    %v2281 = vpop.xlane.xlu0 %2280
    %v2282 = vrcp.pop %v2278
    %v2283 = vmul.f32 %v2273, %v2282
    %v2284 = vrcp.pop %v2281
    %v2285 = vmul.f32 %v2275, %v2284
    %v2286 = vsel %vm646, %v2145, -inf
    %2287 = vmax.xlane.f32.xlu0 %v2286
    %v2288 = vpop.xlane.xlu0 %2287
    %v2289 = vsel %vm646, %v2146, -inf
    %2290 = vmax.xlane.f32.xlu0 %v2289
    %v2291 = vpop.xlane.xlu0 %2290
    %v2292 = vsub.f32 %v2145, %v2288
    %v2293 = vsub.f32 %v2146, %v2291
    %v2294 = vmul.f32 %v2292, 1.442695
    %v2295 = vpow.pop %v2294
    %v2296 = vmul.f32 %v2293, 1.442695
    %v2297 = vpow.pop %v2296
    %v2298 = vsel %vm646, %v2295, 0.0
    %2299 = vadd.xlane.f32.xlu0 %v2298
    %v2300 = vpop.xlane.xlu0 %2299
    %v2301 = vsel %vm646, %v2297, 0.0
    %2302 = vadd.xlane.f32.xlu0 %v2301
    %v2303 = vpop.xlane.xlu0 %2302
    %v2304 = vrcp.pop %v2300
    %v2305 = vmul.f32 %v2295, %v2304
    %v2306 = vrcp.pop %v2303
    %v2307 = vmul.f32 %v2297, %v2306
    %v2308 = vsel %vm646, %v2240, -inf
    %2309 = vmax.xlane.f32.xlu0 %v2308
    %v2310 = vpop.xlane.xlu0 %2309
    %v2311 = vsel %vm646, %v2241, -inf
    %2312 = vmax.xlane.f32.xlu0 %v2311
    %v2313 = vpop.xlane.xlu0 %2312
    %v2314 = vsub.f32 %v2240, %v2310
    %v2315 = vsub.f32 %v2241, %v2313
    %v2316 = vmul.f32 %v2314, 1.442695
    %v2317 = vpow.pop %v2316
    %v2318 = vmul.f32 %v2315, 1.442695
    %v2319 = vpow.pop %v2318
    %v2320 = vsel %vm646, %v2317, 0.0
    %2321 = vadd.xlane.f32.xlu0 %v2320
    %v2322 = vpop.xlane.xlu0 %2321
    %v2323 = vsel %vm646, %v2319, 0.0
    %2324 = vadd.xlane.f32.xlu0 %v2323
    %v2325 = vpop.xlane.xlu0 %2324
    %v2326 = vrcp.pop %v2322
    %v2327 = vmul.f32 %v2317, %v2326
    %v2328 = vrcp.pop %v2325
    %v2329 = vmul.f32 %v2319, %v2328
    %v2331 = vsel %vm646, %v2261, 0
    %v2334 = vsel %vm646, %v2263, 0
    %2336 = vmatprep.subr.mxu0 0.0
    %2337 = vmatpush1.msra.mxu0 %v1856
    %2338 = vmatprep.subr.mxu0 0.0
    %2339 = vmatpush1.msra.mxu0 %v1861
    %2340 = vmatprep.subr.mxu0 0.0
    %2341 = vmatpush1.msra.mxu0 0.0
    %2342 = vmatprep.subr.mxu0 0.0
    %2343 = vmatpush1.msra.mxu0 0.0
    %2344 = vmatprep.subr.mxu0 0.0
    %2345 = vmatpush1.msra.mxu0 0.0
    %2346 = vmatprep.subr.mxu0 0.0
    %2347 = vmatpush1.msra.mxu0 0.0
    %2348 = vmatprep.subr.mxu0 0.0
    %2349 = vmatpush1.msra.mxu0 0.0
    %2350 = vmatprep.subr.mxu0 0.0
    %2351 = vmatpush1.msra.mxu0 0.0
    %2352 = vmatprep.subr.mxu0 0.0
    %2353 = vmatpush1.msra.mxu0 0.0
    %2354 = vmatprep.subr.mxu0 0.0
    %2355 = vmatpush1.msra.mxu0 0.0
    %2356 = vmatprep.subr.mxu0 0.0
    %2357 = vmatpush1.msra.mxu0 0.0
    %2358 = vmatprep.subr.mxu0 0.0
    %2359 = vmatpush1.msra.mxu0 0.0
    %2360 = vmatprep.subr.mxu0 0.0
    %2361 = vmatpush1.msra.mxu0 0.0
    %2362 = vmatprep.subr.mxu0 0.0
    %2363 = vmatpush1.msra.mxu0 0.0
    %2364 = vmatprep.subr.mxu0 0.0
    %2365 = vmatpush1.msra.mxu0 0.0
    %2366 = vmatprep.subr.mxu0 0.0
    %2367 = vmatpush1.msra.mxu0 0.0
    %2368 = vmatprep.subr.mxu0 0.0
    %2369 = vmatpush1.msra.mxu0 0.0
    %2370 = vmatprep.subr.mxu0 0.0
    %2371 = vmatpush1.msra.mxu0 0.0
    %2372 = vmatprep.subr.mxu0 0.0
    %2373 = vmatpush1.msra.mxu0 0.0
    %2374 = vmatprep.subr.mxu0 0.0
    %2375 = vmatpush1.msra.mxu0 0.0
    %2376 = vmatprep.subr.mxu0 0.0
    %2377 = vmatpush1.msra.mxu0 0.0
    %2378 = vmatprep.subr.mxu0 0.0
    %2379 = vmatpush1.msra.mxu0 0.0
    %2380 = vmatprep.subr.mxu0 0.0
    %2381 = vmatpush1.msra.mxu0 0.0
    %2382 = vmatprep.subr.mxu0 0.0
    %2383 = vmatpush1.msra.mxu0 0.0
    %2384 = vmatprep.subr.mxu0 0.0
    %2385 = vmatpush1.msra.mxu0 0.0
    %2386 = vmatprep.subr.mxu0 0.0
    %2387 = vmatpush1.msra.mxu0 0.0
    %2388 = vmatprep.subr.mxu0 0.0
    %2389 = vmatpush1.msra.mxu0 0.0
    %2390 = vmatprep.subr.mxu0 0.0
    %2391 = vmatpush1.msra.mxu0 0.0
    %2392 = vmatprep.subr.mxu0 0.0
    %2393 = vmatpush1.msra.mxu0 0.0
    %2394 = vmatprep.subr.mxu0 0.0
    %2395 = vmatpush1.msra.mxu0 0.0
    %2396 = vmatprep.subr.mxu0 0.0
    %2397 = vmatpush1.msra.mxu0 0.0
    %2398 = vmatprep.subr.mxu0 0.0
    %2399 = vmatpush1.msra.mxu0 0.0
    %2400 = vmatprep.mubr.f32.mxu0 0.0
    %2401 = vmatmul.mubr.f32.gmra.mrb[0].mxu0 %v2331
    %v2402 = vpop.f32.mrb[0].mxu0
    %v2403 = vadd.f32 0.0, %v2402
    %v2404 = vpop.f32.mrb[0].mxu0
    %2405 = vmatprep.mubr.f32.mxu0 0.0
    %2406 = vmatmul.mubr.f32.gmra.mrb[0].mxu0 %v2334
    %v2407 = vpop.f32.mrb[0].mxu0
    %v2408 = vadd.f32 0.0, %v2407
    %v2409 = vpop.f32.mrb[0].mxu0
    %2410 = vdwg.mxu0
    %2413 = vrot.lane.b32.xlu0 %v1856, 120
    %v2414 = vpop.permute.xlu0 %2413
    %2415 = vrot.lane.b32.xlu0 %v1861, 120
    %v2416 = vpop.permute.xlu0 %2415
    %v2420 = vsel %vm646, %v2283, 0
    %v2423 = vsel %vm646, %v2285, 0
    %2425 = vmatprep.subr.mxu0 0.0
    %2426 = vmatpush1.msra.mxu0 %v2414
    %2427 = vmatprep.subr.mxu0 0.0
    %2428 = vmatpush1.msra.mxu0 %v2416
    %2429 = vmatprep.subr.mxu0 0.0
    %2430 = vmatpush1.msra.mxu0 0.0
    %2431 = vmatprep.subr.mxu0 0.0
    %2432 = vmatpush1.msra.mxu0 0.0
    %2433 = vmatprep.subr.mxu0 0.0
    %2434 = vmatpush1.msra.mxu0 0.0
    %2435 = vmatprep.subr.mxu0 0.0
    %2436 = vmatpush1.msra.mxu0 0.0
    %2437 = vmatprep.subr.mxu0 0.0
    %2438 = vmatpush1.msra.mxu0 0.0
    %2439 = vmatprep.subr.mxu0 0.0
    %2440 = vmatpush1.msra.mxu0 0.0
    %2441 = vmatprep.subr.mxu0 0.0
    %2442 = vmatpush1.msra.mxu0 0.0
    %2443 = vmatprep.subr.mxu0 0.0
    %2444 = vmatpush1.msra.mxu0 0.0
    %2445 = vmatprep.subr.mxu0 0.0
    %2446 = vmatpush1.msra.mxu0 0.0
    %2447 = vmatprep.subr.mxu0 0.0
    %2448 = vmatpush1.msra.mxu0 0.0
    %2449 = vmatprep.subr.mxu0 0.0
    %2450 = vmatpush1.msra.mxu0 0.0
    %2451 = vmatprep.subr.mxu0 0.0
    %2452 = vmatpush1.msra.mxu0 0.0
    %2453 = vmatprep.subr.mxu0 0.0
    %2454 = vmatpush1.msra.mxu0 0.0
    %2455 = vmatprep.subr.mxu0 0.0
    %2456 = vmatpush1.msra.mxu0 0.0
    %2457 = vmatprep.subr.mxu0 0.0
    %2458 = vmatpush1.msra.mxu0 0.0
    %2459 = vmatprep.subr.mxu0 0.0
    %2460 = vmatpush1.msra.mxu0 0.0
    %2461 = vmatprep.subr.mxu0 0.0
    %2462 = vmatpush1.msra.mxu0 0.0
    %2463 = vmatprep.subr.mxu0 0.0
    %2464 = vmatpush1.msra.mxu0 0.0
    %2465 = vmatprep.subr.mxu0 0.0
    %2466 = vmatpush1.msra.mxu0 0.0
    %2467 = vmatprep.subr.mxu0 0.0
    %2468 = vmatpush1.msra.mxu0 0.0
    %2469 = vmatprep.subr.mxu0 0.0
    %2470 = vmatpush1.msra.mxu0 0.0
    %2471 = vmatprep.subr.mxu0 0.0
    %2472 = vmatpush1.msra.mxu0 0.0
    %2473 = vmatprep.subr.mxu0 0.0
    %2474 = vmatpush1.msra.mxu0 0.0
    %2475 = vmatprep.subr.mxu0 0.0
    %2476 = vmatpush1.msra.mxu0 0.0
    %2477 = vmatprep.subr.mxu0 0.0
    %2478 = vmatpush1.msra.mxu0 0.0
    %2479 = vmatprep.subr.mxu0 0.0
    %2480 = vmatpush1.msra.mxu0 0.0
    %2481 = vmatprep.subr.mxu0 0.0
    %2482 = vmatpush1.msra.mxu0 0.0
    %2483 = vmatprep.subr.mxu0 0.0
    %2484 = vmatpush1.msra.mxu0 0.0
    %2485 = vmatprep.subr.mxu0 0.0
    %2486 = vmatpush1.msra.mxu0 0.0
    %2487 = vmatprep.subr.mxu0 0.0
    %2488 = vmatpush1.msra.mxu0 0.0
    %2489 = vmatprep.mubr.f32.mxu0 0.0
    %2490 = vmatmul.mubr.f32.gmra.mrb[0].mxu0 %v2420
    %v2491 = vpop.f32.mrb[0].mxu0
    %v2492 = vadd.f32 0.0, %v2491
    %v2493 = vpop.f32.mrb[0].mxu0
    %2494 = vmatprep.mubr.f32.mxu0 0.0
    %2495 = vmatmul.mubr.f32.gmra.mrb[0].mxu0 %v2423
    %v2496 = vpop.f32.mrb[0].mxu0
    %v2497 = vadd.f32 0.0, %v2496
    %v2498 = vpop.f32.mrb[0].mxu0
    %2499 = vdwg.mxu0
    %v2501 = vsel %vm273, %v2492, 0
    %v2504 = vsel %vm273, %v2497, 0
    %2506 = vmatprep.subr.mxu0 0.0
    %2507 = vmatpush1.msra.mxu0 %v1677
    %2508 = vmatprep.subr.mxu0 0.0
    %2509 = vmatpush1.msra.mxu0 0.0
    %2510 = vmatprep.subr.mxu0 0.0
    %2511 = vmatpush1.msra.mxu0 0.0
    %2512 = vmatprep.subr.mxu0 0.0
    %2513 = vmatpush1.msra.mxu0 0.0
    %2514 = vmatprep.subr.mxu0 0.0
    %2515 = vmatpush1.msra.mxu0 0.0
    %2516 = vmatprep.subr.mxu0 0.0
    %2517 = vmatpush1.msra.mxu0 0.0
    %2518 = vmatprep.subr.mxu0 0.0
    %2519 = vmatpush1.msra.mxu0 0.0
    %2520 = vmatprep.subr.mxu0 0.0
    %2521 = vmatpush1.msra.mxu0 0.0
    %2522 = vmatprep.subr.mxu0 0.0
    %2523 = vmatpush1.msra.mxu0 0.0
    %2524 = vmatprep.subr.mxu0 0.0
    %2525 = vmatpush1.msra.mxu0 0.0
    %2526 = vmatprep.subr.mxu0 0.0
    %2527 = vmatpush1.msra.mxu0 0.0
    %2528 = vmatprep.subr.mxu0 0.0
    %2529 = vmatpush1.msra.mxu0 0.0
    %2530 = vmatprep.subr.mxu0 0.0
    %2531 = vmatpush1.msra.mxu0 0.0
    %2532 = vmatprep.subr.mxu0 0.0
    %2533 = vmatpush1.msra.mxu0 0.0
    %2534 = vmatprep.subr.mxu0 0.0
    %2535 = vmatpush1.msra.mxu0 0.0
    %2536 = vmatprep.subr.mxu0 0.0
    %2537 = vmatpush1.msra.mxu0 0.0
    %2538 = vmatprep.subr.mxu0 0.0
    %2539 = vmatpush1.msra.mxu0 0.0
    %2540 = vmatprep.subr.mxu0 0.0
    %2541 = vmatpush1.msra.mxu0 0.0
    %2542 = vmatprep.subr.mxu0 0.0
    %2543 = vmatpush1.msra.mxu0 0.0
    %2544 = vmatprep.subr.mxu0 0.0
    %2545 = vmatpush1.msra.mxu0 0.0
    %2546 = vmatprep.subr.mxu0 0.0
    %2547 = vmatpush1.msra.mxu0 0.0
    %2548 = vmatprep.subr.mxu0 0.0
    %2549 = vmatpush1.msra.mxu0 0.0
    %2550 = vmatprep.subr.mxu0 0.0
    %2551 = vmatpush1.msra.mxu0 0.0
    %2552 = vmatprep.subr.mxu0 0.0
    %2553 = vmatpush1.msra.mxu0 0.0
    %2554 = vmatprep.subr.mxu0 0.0
    %2555 = vmatpush1.msra.mxu0 0.0
    %2556 = vmatprep.subr.mxu0 0.0
    %2557 = vmatpush1.msra.mxu0 0.0
    %2558 = vmatprep.subr.mxu0 0.0
    %2559 = vmatpush1.msra.mxu0 0.0
    %2560 = vmatprep.subr.mxu0 0.0
    %2561 = vmatpush1.msra.mxu0 0.0
    %2562 = vmatprep.subr.mxu0 0.0
    %2563 = vmatpush1.msra.mxu0 0.0
    %2564 = vmatprep.subr.mxu0 0.0
    %2565 = vmatpush1.msra.mxu0 0.0
    %2566 = vmatprep.subr.mxu0 0.0
    %2567 = vmatpush1.msra.mxu0 0.0
    %2568 = vmatprep.subr.mxu0 0.0
    %2569 = vmatpush1.msra.mxu0 0.0
    %2570 = vmatprep.mubr.f32.mxu0 0.0
    %2571 = vmatmul.mubr.f32.gmra.mrb[0].mxu0 %v2501
    %v2572 = vpop.f32.mrb[0].mxu0
    %v2573 = vadd.f32 0.0, %v2572
    %v2574 = vpop.f32.mrb[0].mxu0
    %2575 = vmatprep.mubr.f32.mxu0 0.0
    %2576 = vmatmul.mubr.f32.gmra.mrb[0].mxu0 %v2504
    %v2577 = vpop.f32.mrb[0].mxu0
    %v2578 = vadd.f32 0.0, %v2577
    %v2579 = vpop.f32.mrb[0].mxu0
    %2580 = vdwg.mxu0
    %v2582 = vsel %vm273, %v2403, 0
    %v2585 = vsel %vm273, %v2408, 0
    %2587 = vmatprep.subr.mxu0 0.0
    %2588 = vmatpush1.msra.mxu0 %v1676
    %2589 = vmatprep.subr.mxu0 0.0
    %2590 = vmatpush1.msra.mxu0 0.0
    %2591 = vmatprep.subr.mxu0 0.0
    %2592 = vmatpush1.msra.mxu0 0.0
    %2593 = vmatprep.subr.mxu0 0.0
    %2594 = vmatpush1.msra.mxu0 0.0
    %2595 = vmatprep.subr.mxu0 0.0
    %2596 = vmatpush1.msra.mxu0 0.0
    %2597 = vmatprep.subr.mxu0 0.0
    %2598 = vmatpush1.msra.mxu0 0.0
    %2599 = vmatprep.subr.mxu0 0.0
    %2600 = vmatpush1.msra.mxu0 0.0
    %2601 = vmatprep.subr.mxu0 0.0
    %2602 = vmatpush1.msra.mxu0 0.0
    %2603 = vmatprep.subr.mxu0 0.0
    %2604 = vmatpush1.msra.mxu0 0.0
    %2605 = vmatprep.subr.mxu0 0.0
    %2606 = vmatpush1.msra.mxu0 0.0
    %2607 = vmatprep.subr.mxu0 0.0
    %2608 = vmatpush1.msra.mxu0 0.0
    %2609 = vmatprep.subr.mxu0 0.0
    %2610 = vmatpush1.msra.mxu0 0.0
    %2611 = vmatprep.subr.mxu0 0.0
    %2612 = vmatpush1.msra.mxu0 0.0
    %2613 = vmatprep.subr.mxu0 0.0
    %2614 = vmatpush1.msra.mxu0 0.0
    %2615 = vmatprep.subr.mxu0 0.0
    %2616 = vmatpush1.msra.mxu0 0.0
    %2617 = vmatprep.subr.mxu0 0.0
    %2618 = vmatpush1.msra.mxu0 0.0
    %2619 = vmatprep.subr.mxu0 0.0
    %2620 = vmatpush1.msra.mxu0 0.0
    %2621 = vmatprep.subr.mxu0 0.0
    %2622 = vmatpush1.msra.mxu0 0.0
    %2623 = vmatprep.subr.mxu0 0.0
    %2624 = vmatpush1.msra.mxu0 0.0
    %2625 = vmatprep.subr.mxu0 0.0
    %2626 = vmatpush1.msra.mxu0 0.0
    %2627 = vmatprep.subr.mxu0 0.0
    %2628 = vmatpush1.msra.mxu0 0.0
    %2629 = vmatprep.subr.mxu0 0.0
    %2630 = vmatpush1.msra.mxu0 0.0
    %2631 = vmatprep.subr.mxu0 0.0
    %2632 = vmatpush1.msra.mxu0 0.0
    %2633 = vmatprep.subr.mxu0 0.0
    %2634 = vmatpush1.msra.mxu0 0.0
    %2635 = vmatprep.subr.mxu0 0.0
    %2636 = vmatpush1.msra.mxu0 0.0
    %2637 = vmatprep.subr.mxu0 0.0
    %2638 = vmatpush1.msra.mxu0 0.0
    %2639 = vmatprep.subr.mxu0 0.0
    %2640 = vmatpush1.msra.mxu0 0.0
    %2641 = vmatprep.subr.mxu0 0.0
    %2642 = vmatpush1.msra.mxu0 0.0
    %2643 = vmatprep.subr.mxu0 0.0
    %2644 = vmatpush1.msra.mxu0 0.0
    %2645 = vmatprep.subr.mxu0 0.0
    %2646 = vmatpush1.msra.mxu0 0.0
    %2647 = vmatprep.subr.mxu0 0.0
    %2648 = vmatpush1.msra.mxu0 0.0
    %2649 = vmatprep.subr.mxu0 0.0
    %2650 = vmatpush1.msra.mxu0 0.0
    %2651 = vmatprep.mubr.f32.mxu0 0.0
    %2652 = vmatmul.mubr.f32.gmra.mrb[0].mxu0 %v2582
    %v2653 = vpop.f32.mrb[0].mxu0
    %v2654 = vadd.f32 %v2573, %v2653
    %v2655 = vpop.f32.mrb[0].mxu0
    %2656 = vmatprep.mubr.f32.mxu0 0.0
    %2657 = vmatmul.mubr.f32.gmra.mrb[0].mxu0 %v2585
    %v2658 = vpop.f32.mrb[0].mxu0
    %v2659 = vadd.f32 %v2578, %v2658
    %v2660 = vpop.f32.mrb[0].mxu0
    %2661 = vdwg.mxu0
    %2662 = vrot.lane.b32.xlu0 %v1856, 112
    %v2663 = vpop.permute.xlu0 %2662
    %2664 = vrot.lane.b32.xlu0 %v1861, 112
    %v2665 = vpop.permute.xlu0 %2664
    %v2669 = vsel %vm646, %v2305, 0
    %v2672 = vsel %vm646, %v2307, 0
    %2674 = vmatprep.subr.mxu0 0.0
    %2675 = vmatpush1.msra.mxu0 %v2663
    %2676 = vmatprep.subr.mxu0 0.0
    %2677 = vmatpush1.msra.mxu0 %v2665
    %2678 = vmatprep.subr.mxu0 0.0
    %2679 = vmatpush1.msra.mxu0 0.0
    %2680 = vmatprep.subr.mxu0 0.0
    %2681 = vmatpush1.msra.mxu0 0.0
    %2682 = vmatprep.subr.mxu0 0.0
    %2683 = vmatpush1.msra.mxu0 0.0
    %2684 = vmatprep.subr.mxu0 0.0
    %2685 = vmatpush1.msra.mxu0 0.0
    %2686 = vmatprep.subr.mxu0 0.0
    %2687 = vmatpush1.msra.mxu0 0.0
    %2688 = vmatprep.subr.mxu0 0.0
    %2689 = vmatpush1.msra.mxu0 0.0
    %2690 = vmatprep.subr.mxu0 0.0
    %2691 = vmatpush1.msra.mxu0 0.0
    %2692 = vmatprep.subr.mxu0 0.0
    %2693 = vmatpush1.msra.mxu0 0.0
    %2694 = vmatprep.subr.mxu0 0.0
    %2695 = vmatpush1.msra.mxu0 0.0
    %2696 = vmatprep.subr.mxu0 0.0
    %2697 = vmatpush1.msra.mxu0 0.0
    %2698 = vmatprep.subr.mxu0 0.0
    %2699 = vmatpush1.msra.mxu0 0.0
    %2700 = vmatprep.subr.mxu0 0.0
    %2701 = vmatpush1.msra.mxu0 0.0
    %2702 = vmatprep.subr.mxu0 0.0
    %2703 = vmatpush1.msra.mxu0 0.0
    %2704 = vmatprep.subr.mxu0 0.0
    %2705 = vmatpush1.msra.mxu0 0.0
    %2706 = vmatprep.subr.mxu0 0.0
    %2707 = vmatpush1.msra.mxu0 0.0
    %2708 = vmatprep.subr.mxu0 0.0
    %2709 = vmatpush1.msra.mxu0 0.0
    %2710 = vmatprep.subr.mxu0 0.0
    %2711 = vmatpush1.msra.mxu0 0.0
    %2712 = vmatprep.subr.mxu0 0.0
    %2713 = vmatpush1.msra.mxu0 0.0
    %2714 = vmatprep.subr.mxu0 0.0
    %2715 = vmatpush1.msra.mxu0 0.0
    %2716 = vmatprep.subr.mxu0 0.0
    %2717 = vmatpush1.msra.mxu0 0.0
    %2718 = vmatprep.subr.mxu0 0.0
    %2719 = vmatpush1.msra.mxu0 0.0
    %2720 = vmatprep.subr.mxu0 0.0
    %2721 = vmatpush1.msra.mxu0 0.0
    %2722 = vmatprep.subr.mxu0 0.0
    %2723 = vmatpush1.msra.mxu0 0.0
    %2724 = vmatprep.subr.mxu0 0.0
    %2725 = vmatpush1.msra.mxu0 0.0
    %2726 = vmatprep.subr.mxu0 0.0
    %2727 = vmatpush1.msra.mxu0 0.0
    %2728 = vmatprep.subr.mxu0 0.0
    %2729 = vmatpush1.msra.mxu0 0.0
    %2730 = vmatprep.subr.mxu0 0.0
    %2731 = vmatpush1.msra.mxu0 0.0
    %2732 = vmatprep.subr.mxu0 0.0
    %2733 = vmatpush1.msra.mxu0 0.0
    %2734 = vmatprep.subr.mxu0 0.0
    %2735 = vmatpush1.msra.mxu0 0.0
    %2736 = vmatprep.subr.mxu0 0.0
    %2737 = vmatpush1.msra.mxu0 0.0
    %2738 = vmatprep.mubr.f32.mxu0 0.0
    %2739 = vmatmul.mubr.f32.gmra.mrb[0].mxu0 %v2669
    %v2740 = vpop.f32.mrb[0].mxu0
    %v2741 = vadd.f32 0.0, %v2740
    %v2742 = vpop.f32.mrb[0].mxu0
    %2743 = vmatprep.mubr.f32.mxu0 0.0
    %2744 = vmatmul.mubr.f32.gmra.mrb[0].mxu0 %v2672
    %v2745 = vpop.f32.mrb[0].mxu0
    %v2746 = vadd.f32 0.0, %v2745
    %v2747 = vpop.f32.mrb[0].mxu0
    %2748 = vdwg.mxu0
    %v2750 = vsel %vm273, %v2741, 0
    %v2753 = vsel %vm273, %v2746, 0
    %2755 = vmatprep.subr.mxu0 0.0
    %2756 = vmatpush1.msra.mxu0 %v1678
    %2757 = vmatprep.subr.mxu0 0.0
    %2758 = vmatpush1.msra.mxu0 0.0
    %2759 = vmatprep.subr.mxu0 0.0
    %2760 = vmatpush1.msra.mxu0 0.0
    %2761 = vmatprep.subr.mxu0 0.0
    %2762 = vmatpush1.msra.mxu0 0.0
    %2763 = vmatprep.subr.mxu0 0.0
    %2764 = vmatpush1.msra.mxu0 0.0
    %2765 = vmatprep.subr.mxu0 0.0
    %2766 = vmatpush1.msra.mxu0 0.0
    %2767 = vmatprep.subr.mxu0 0.0
    %2768 = vmatpush1.msra.mxu0 0.0
    %2769 = vmatprep.subr.mxu0 0.0
    %2770 = vmatpush1.msra.mxu0 0.0
    %2771 = vmatprep.subr.mxu0 0.0
    %2772 = vmatpush1.msra.mxu0 0.0
    %2773 = vmatprep.subr.mxu0 0.0
    %2774 = vmatpush1.msra.mxu0 0.0
    %2775 = vmatprep.subr.mxu0 0.0
    %2776 = vmatpush1.msra.mxu0 0.0
    %2777 = vmatprep.subr.mxu0 0.0
    %2778 = vmatpush1.msra.mxu0 0.0
    %2779 = vmatprep.subr.mxu0 0.0
    %2780 = vmatpush1.msra.mxu0 0.0
    %2781 = vmatprep.subr.mxu0 0.0
    %2782 = vmatpush1.msra.mxu0 0.0
    %2783 = vmatprep.subr.mxu0 0.0
    %2784 = vmatpush1.msra.mxu0 0.0
    %2785 = vmatprep.subr.mxu0 0.0
    %2786 = vmatpush1.msra.mxu0 0.0
    %2787 = vmatprep.subr.mxu0 0.0
    %2788 = vmatpush1.msra.mxu0 0.0
    %2789 = vmatprep.subr.mxu0 0.0
    %2790 = vmatpush1.msra.mxu0 0.0
    %2791 = vmatprep.subr.mxu0 0.0
    %2792 = vmatpush1.msra.mxu0 0.0
    %2793 = vmatprep.subr.mxu0 0.0
    %2794 = vmatpush1.msra.mxu0 0.0
    %2795 = vmatprep.subr.mxu0 0.0
    %2796 = vmatpush1.msra.mxu0 0.0
    %2797 = vmatprep.subr.mxu0 0.0
    %2798 = vmatpush1.msra.mxu0 0.0
    %2799 = vmatprep.subr.mxu0 0.0
    %2800 = vmatpush1.msra.mxu0 0.0
    %2801 = vmatprep.subr.mxu0 0.0
    %2802 = vmatpush1.msra.mxu0 0.0
    %2803 = vmatprep.subr.mxu0 0.0
    %2804 = vmatpush1.msra.mxu0 0.0
    %2805 = vmatprep.subr.mxu0 0.0
    %2806 = vmatpush1.msra.mxu0 0.0
    %2807 = vmatprep.subr.mxu0 0.0
    %2808 = vmatpush1.msra.mxu0 0.0
    %2809 = vmatprep.subr.mxu0 0.0
    %2810 = vmatpush1.msra.mxu0 0.0
    %2811 = vmatprep.subr.mxu0 0.0
    %2812 = vmatpush1.msra.mxu0 0.0
    %2813 = vmatprep.subr.mxu0 0.0
    %2814 = vmatpush1.msra.mxu0 0.0
    %2815 = vmatprep.subr.mxu0 0.0
    %2816 = vmatpush1.msra.mxu0 0.0
    %2817 = vmatprep.subr.mxu0 0.0
    %2818 = vmatpush1.msra.mxu0 0.0
    %2819 = vmatprep.mubr.f32.mxu0 0.0
    %2820 = vmatmul.mubr.f32.gmra.mrb[0].mxu0 %v2750
    %v2821 = vpop.f32.mrb[0].mxu0
    %v2822 = vadd.f32 0.0, %v2821
    %v2823 = vpop.f32.mrb[0].mxu0
    %2824 = vmatprep.mubr.f32.mxu0 0.0
    %2825 = vmatmul.mubr.f32.gmra.mrb[0].mxu0 %v2753
    %v2826 = vpop.f32.mrb[0].mxu0
    %v2827 = vadd.f32 0.0, %v2826
    %v2828 = vpop.f32.mrb[0].mxu0
    %2829 = vdwg.mxu0
    %v2830 = vadd.f32 %v2654, %v2822
    %v2831 = vadd.f32 %v2659, %v2827
    %2832 = vrot.lane.b32.xlu0 %v1856, 104
    %v2833 = vpop.permute.xlu0 %2832
    %2834 = vrot.lane.b32.xlu0 %v1861, 104
    %v2835 = vpop.permute.xlu0 %2834
    %v2839 = vsel %vm646, %v2327, 0
    %v2842 = vsel %vm646, %v2329, 0
    %2844 = vmatprep.subr.mxu0 0.0
    %2845 = vmatpush1.msra.mxu0 %v2833
    %2846 = vmatprep.subr.mxu0 0.0
    %2847 = vmatpush1.msra.mxu0 %v2835
    %2848 = vmatprep.subr.mxu0 0.0
    %2849 = vmatpush1.msra.mxu0 0.0
    %2850 = vmatprep.subr.mxu0 0.0
    %2851 = vmatpush1.msra.mxu0 0.0
    %2852 = vmatprep.subr.mxu0 0.0
    %2853 = vmatpush1.msra.mxu0 0.0
    %2854 = vmatprep.subr.mxu0 0.0
    %2855 = vmatpush1.msra.mxu0 0.0
    %2856 = vmatprep.subr.mxu0 0.0
    %2857 = vmatpush1.msra.mxu0 0.0
    %2858 = vmatprep.subr.mxu0 0.0
    %2859 = vmatpush1.msra.mxu0 0.0
    %2860 = vmatprep.subr.mxu0 0.0
    %2861 = vmatpush1.msra.mxu0 0.0
    %2862 = vmatprep.subr.mxu0 0.0
    %2863 = vmatpush1.msra.mxu0 0.0
    %2864 = vmatprep.subr.mxu0 0.0
    %2865 = vmatpush1.msra.mxu0 0.0
    %2866 = vmatprep.subr.mxu0 0.0
    %2867 = vmatpush1.msra.mxu0 0.0
    %2868 = vmatprep.subr.mxu0 0.0
    %2869 = vmatpush1.msra.mxu0 0.0
    %2870 = vmatprep.subr.mxu0 0.0
    %2871 = vmatpush1.msra.mxu0 0.0
    %2872 = vmatprep.subr.mxu0 0.0
    %2873 = vmatpush1.msra.mxu0 0.0
    %2874 = vmatprep.subr.mxu0 0.0
    %2875 = vmatpush1.msra.mxu0 0.0
    %2876 = vmatprep.subr.mxu0 0.0
    %2877 = vmatpush1.msra.mxu0 0.0
    %2878 = vmatprep.subr.mxu0 0.0
    %2879 = vmatpush1.msra.mxu0 0.0
    %2880 = vmatprep.subr.mxu0 0.0
    %2881 = vmatpush1.msra.mxu0 0.0
    %2882 = vmatprep.subr.mxu0 0.0
    %2883 = vmatpush1.msra.mxu0 0.0
    %2884 = vmatprep.subr.mxu0 0.0
    %2885 = vmatpush1.msra.mxu0 0.0
    %2886 = vmatprep.subr.mxu0 0.0
    %2887 = vmatpush1.msra.mxu0 0.0
    %2888 = vmatprep.subr.mxu0 0.0
    %2889 = vmatpush1.msra.mxu0 0.0
    %2890 = vmatprep.subr.mxu0 0.0
    %2891 = vmatpush1.msra.mxu0 0.0
    %2892 = vmatprep.subr.mxu0 0.0
    %2893 = vmatpush1.msra.mxu0 0.0
    %2894 = vmatprep.subr.mxu0 0.0
    %2895 = vmatpush1.msra.mxu0 0.0
    %2896 = vmatprep.subr.mxu0 0.0
    %2897 = vmatpush1.msra.mxu0 0.0
    %2898 = vmatprep.subr.mxu0 0.0
    %2899 = vmatpush1.msra.mxu0 0.0
    %2900 = vmatprep.subr.mxu0 0.0
    %2901 = vmatpush1.msra.mxu0 0.0
    %2902 = vmatprep.subr.mxu0 0.0
    %2903 = vmatpush1.msra.mxu0 0.0
    %2904 = vmatprep.subr.mxu0 0.0
    %2905 = vmatpush1.msra.mxu0 0.0
    %2906 = vmatprep.subr.mxu0 0.0
    %2907 = vmatpush1.msra.mxu0 0.0
    %2908 = vmatprep.mubr.f32.mxu0 0.0
    %2909 = vmatmul.mubr.f32.gmra.mrb[0].mxu0 %v2839
    %v2910 = vpop.f32.mrb[0].mxu0
    %v2911 = vadd.f32 0.0, %v2910
    %v2912 = vpop.f32.mrb[0].mxu0
    %2913 = vmatprep.mubr.f32.mxu0 0.0
    %2914 = vmatmul.mubr.f32.gmra.mrb[0].mxu0 %v2842
    %v2915 = vpop.f32.mrb[0].mxu0
    %v2916 = vadd.f32 0.0, %v2915
    %v2917 = vpop.f32.mrb[0].mxu0
    %2918 = vdwg.mxu0
    %v2920 = vsel %vm273, %v2911, 0
    %v2923 = vsel %vm273, %v2916, 0
    %2925 = vmatprep.subr.mxu0 0.0
    %2926 = vmatpush1.msra.mxu0 %v1679
    %2927 = vmatprep.subr.mxu0 0.0
    %2928 = vmatpush1.msra.mxu0 0.0
    %2929 = vmatprep.subr.mxu0 0.0
    %2930 = vmatpush1.msra.mxu0 0.0
    %2931 = vmatprep.subr.mxu0 0.0
    %2932 = vmatpush1.msra.mxu0 0.0
    %2933 = vmatprep.subr.mxu0 0.0
    %2934 = vmatpush1.msra.mxu0 0.0
    %2935 = vmatprep.subr.mxu0 0.0
    %2936 = vmatpush1.msra.mxu0 0.0
    %2937 = vmatprep.subr.mxu0 0.0
    %2938 = vmatpush1.msra.mxu0 0.0
    %2939 = vmatprep.subr.mxu0 0.0
    %2940 = vmatpush1.msra.mxu0 0.0
    %2941 = vmatprep.subr.mxu0 0.0
    %2942 = vmatpush1.msra.mxu0 0.0
    %2943 = vmatprep.subr.mxu0 0.0
    %2944 = vmatpush1.msra.mxu0 0.0
    %2945 = vmatprep.subr.mxu0 0.0
    %2946 = vmatpush1.msra.mxu0 0.0
    %2947 = vmatprep.subr.mxu0 0.0
    %2948 = vmatpush1.msra.mxu0 0.0
    %2949 = vmatprep.subr.mxu0 0.0
    %2950 = vmatpush1.msra.mxu0 0.0
    %2951 = vmatprep.subr.mxu0 0.0
    %2952 = vmatpush1.msra.mxu0 0.0
    %2953 = vmatprep.subr.mxu0 0.0
    %2954 = vmatpush1.msra.mxu0 0.0
    %2955 = vmatprep.subr.mxu0 0.0
    %2956 = vmatpush1.msra.mxu0 0.0
    %2957 = vmatprep.subr.mxu0 0.0
    %2958 = vmatpush1.msra.mxu0 0.0
    %2959 = vmatprep.subr.mxu0 0.0
    %2960 = vmatpush1.msra.mxu0 0.0
    %2961 = vmatprep.subr.mxu0 0.0
    %2962 = vmatpush1.msra.mxu0 0.0
    %2963 = vmatprep.subr.mxu0 0.0
    %2964 = vmatpush1.msra.mxu0 0.0
    %2965 = vmatprep.subr.mxu0 0.0
    %2966 = vmatpush1.msra.mxu0 0.0
    %2967 = vmatprep.subr.mxu0 0.0
    %2968 = vmatpush1.msra.mxu0 0.0
    %2969 = vmatprep.subr.mxu0 0.0
    %2970 = vmatpush1.msra.mxu0 0.0
    %2971 = vmatprep.subr.mxu0 0.0
    %2972 = vmatpush1.msra.mxu0 0.0
    %2973 = vmatprep.subr.mxu0 0.0
    %2974 = vmatpush1.msra.mxu0 0.0
    %2975 = vmatprep.subr.mxu0 0.0
    %2976 = vmatpush1.msra.mxu0 0.0
    %2977 = vmatprep.subr.mxu0 0.0
    %2978 = vmatpush1.msra.mxu0 0.0
    %2979 = vmatprep.subr.mxu0 0.0
    %2980 = vmatpush1.msra.mxu0 0.0
    %2981 = vmatprep.subr.mxu0 0.0
    %2982 = vmatpush1.msra.mxu0 0.0
    %2983 = vmatprep.subr.mxu0 0.0
    %2984 = vmatpush1.msra.mxu0 0.0
    %2985 = vmatprep.subr.mxu0 0.0
    %2986 = vmatpush1.msra.mxu0 0.0
    %2987 = vmatprep.subr.mxu0 0.0
    %2988 = vmatpush1.msra.mxu0 0.0
    %2989 = vmatprep.mubr.f32.mxu0 0.0
    %2990 = vmatmul.mubr.f32.gmra.mrb[0].mxu0 %v2920
    %v2991 = vpop.f32.mrb[0].mxu0
    %v2992 = vadd.f32 0.0, %v2991
    %v2993 = vpop.f32.mrb[0].mxu0
    %2994 = vmatprep.mubr.f32.mxu0 0.0
    %2995 = vmatmul.mubr.f32.gmra.mrb[0].mxu0 %v2923
    %v2996 = vpop.f32.mrb[0].mxu0
    %v2997 = vadd.f32 0.0, %v2996
    %v2998 = vpop.f32.mrb[0].mxu0
    %2999 = vdwg.mxu0
    %v3000 = vadd.f32 %v2830, %v2992
    %v3001 = vadd.f32 %v2831, %v2997
    %v3002 = vlaneseq
    %v3003 = vshrl.u32 %v3002, 7
    %v3004 = vsub.s32 3, %v3003
    %v3005 = vrot.slane %v23, %v3004
    %v3006 = vadd.f32 %v3000, %v3005
    %v3007 = vadd.f32 %v3001, %v3005
    %v3008 = vadd.f32 %v1665, %v3006
    %v3009 = vadd.f32 %v1666, %v3007
    %v3010 = vsel %vm100, %v3008, 0.0
    %3011 = vadd.xlane.f32.xlu0 %v3010
    %v3012 = vpop.xlane.xlu0 %3011
    %v3013 = vsel %vm100, %v3009, 0.0
    %3014 = vadd.xlane.f32.xlu0 %v3013
    %v3015 = vpop.xlane.xlu0 %3014
    %v3016 = vmul.f32 %v3012, %v1421
    %v3017 = vmul.f32 %v3015, %v1421
    %v3018 = vsub.f32 %v3008, %v3016
    %v3019 = vsub.f32 %v3009, %v3017
    %v3020 = vmul.f32 %v3018, %v3018
    %v3021 = vmul.f32 %v3019, %v3019
    %v3022 = vsel %vm100, %v3020, 0.0
    %3023 = vadd.xlane.f32.xlu0 %v3022
    %v3024 = vpop.xlane.xlu0 %3023
    %v3025 = vsel %vm100, %v3021, 0.0
    %3026 = vadd.xlane.f32.xlu0 %v3025
    %v3027 = vpop.xlane.xlu0 %3026
    %v3028 = vmul.f32 %v3024, %v1421
    %v3029 = vmul.f32 %v3027, %v1421
    %v3030 = vadd.f32 %v3028, 1e-05
    %v3031 = vadd.f32 %v3029, 1e-05
    %v3032 = vrsqrt.pop %v3030
    %v3033 = vrsqrt.pop %v3031
    %v3034 = vmul.f32 %v3018, %v3032
    %v3035 = vmul.f32 %v3019, %v3033
    %v3036 = vlaneseq
    %v3037 = vshrl.u32 %v3036, 7
    %v3038 = vsub.s32 6, %v3037
    %v3039 = vrot.slane %v23, %v3038
    %v3040 = vmul.f32 %v3034, %v3039
    %v3041 = vmul.f32 %v3035, %v3039
    %v3042 = vlaneseq
    %v3043 = vshrl.u32 %v3042, 7
    %v3044 = vsub.s32 7, %v3043
    %v3045 = vrot.slane %v23, %v3044
    %v3046 = vadd.f32 %v3040, %v3045
    %v3047 = vadd.f32 %v3041, %v3045
    %v3048 = vlaneseq
    %v3049 = vshrl.u32 %v3048, 7
    %v3050 = vsub.s32 4, %v3049
    %v3051 = vrot.slane %v23, %v3050
    %v3053 = vsel %vm100, %v3046, 0
    %v3056 = vsel %vm100, %v3047, 0
    %3058 = vmatprep.subr.mxu0 0.0
    %3059 = vmatpush1.msra.mxu0 %v1680
    %3060 = vmatprep.subr.mxu0 0.0
    %3061 = vmatpush1.msra.mxu0 %v1681
    %3062 = vmatprep.subr.mxu0 0.0
    %3063 = vmatpush1.msra.mxu0 %v1682
    %3064 = vmatprep.subr.mxu0 0.0
    %3065 = vmatpush1.msra.mxu0 %v1683
    %3066 = vmatprep.subr.mxu0 0.0
    %3067 = vmatpush1.msra.mxu0 0.0
    %3068 = vmatprep.subr.mxu0 0.0
    %3069 = vmatpush1.msra.mxu0 0.0
    %3070 = vmatprep.subr.mxu0 0.0
    %3071 = vmatpush1.msra.mxu0 0.0
    %3072 = vmatprep.subr.mxu0 0.0
    %3073 = vmatpush1.msra.mxu0 0.0
    %3074 = vmatprep.subr.mxu0 0.0
    %3075 = vmatpush1.msra.mxu0 0.0
    %3076 = vmatprep.subr.mxu0 0.0
    %3077 = vmatpush1.msra.mxu0 0.0
    %3078 = vmatprep.subr.mxu0 0.0
    %3079 = vmatpush1.msra.mxu0 0.0
    %3080 = vmatprep.subr.mxu0 0.0
    %3081 = vmatpush1.msra.mxu0 0.0
    %3082 = vmatprep.subr.mxu0 0.0
    %3083 = vmatpush1.msra.mxu0 0.0
    %3084 = vmatprep.subr.mxu0 0.0
    %3085 = vmatpush1.msra.mxu0 0.0
    %3086 = vmatprep.subr.mxu0 0.0
    %3087 = vmatpush1.msra.mxu0 0.0
    %3088 = vmatprep.subr.mxu0 0.0
    %3089 = vmatpush1.msra.mxu0 0.0
    %3090 = vmatprep.subr.mxu0 0.0
    %3091 = vmatpush1.msra.mxu0 0.0
    %3092 = vmatprep.subr.mxu0 0.0
    %3093 = vmatpush1.msra.mxu0 0.0
    %3094 = vmatprep.subr.mxu0 0.0
    %3095 = vmatpush1.msra.mxu0 0.0
    %3096 = vmatprep.subr.mxu0 0.0
    %3097 = vmatpush1.msra.mxu0 0.0
    %3098 = vmatprep.subr.mxu0 0.0
    %3099 = vmatpush1.msra.mxu0 0.0
    %3100 = vmatprep.subr.mxu0 0.0
    %3101 = vmatpush1.msra.mxu0 0.0
    %3102 = vmatprep.subr.mxu0 0.0
    %3103 = vmatpush1.msra.mxu0 0.0
    %3104 = vmatprep.subr.mxu0 0.0
    %3105 = vmatpush1.msra.mxu0 0.0
    %3106 = vmatprep.subr.mxu0 0.0
    %3107 = vmatpush1.msra.mxu0 0.0
    %3108 = vmatprep.subr.mxu0 0.0
    %3109 = vmatpush1.msra.mxu0 0.0
    %3110 = vmatprep.subr.mxu0 0.0
    %3111 = vmatpush1.msra.mxu0 0.0
    %3112 = vmatprep.subr.mxu0 0.0
    %3113 = vmatpush1.msra.mxu0 0.0
    %3114 = vmatprep.subr.mxu0 0.0
    %3115 = vmatpush1.msra.mxu0 0.0
    %3116 = vmatprep.subr.mxu0 0.0
    %3117 = vmatpush1.msra.mxu0 0.0
    %3118 = vmatprep.subr.mxu0 0.0
    %3119 = vmatpush1.msra.mxu0 0.0
    %3120 = vmatprep.subr.mxu0 0.0
    %3121 = vmatpush1.msra.mxu0 0.0
    %3122 = vmatprep.mubr.f32.mxu0 0.0
    %3123 = vmatmul.mubr.f32.gmra.mrb[0].mxu0 %v3053
    %v3124 = vpop.f32.mrb[0].mxu0
    %v3125 = vadd.f32 %v3051, %v3124
    %v3126 = vpop.f32.mrb[0].mxu0
    %3127 = vmatprep.mubr.f32.mxu0 0.0
    %3128 = vmatmul.mubr.f32.gmra.mrb[0].mxu0 %v3056
    %v3129 = vpop.f32.mrb[0].mxu0
    %v3130 = vadd.f32 %v3051, %v3129
    %v3131 = vpop.f32.mrb[0].mxu0
    %3132 = vdwg.mxu0
    %v3133 = vmax.f32 %v3125, 0.0
    %v3134 = vmax.f32 %v3130, 0.0
    %v3135 = vlaneseq
    %v3136 = vshrl.u32 %v3135, 7
    %v3137 = vsub.s32 5, %v3136
    %v3138 = vrot.slane %v23, %v3137
    %v3140 = vsel %vm1545, %v3133, 0
    %v3143 = vsel %vm1545, %v3134, 0
    %3145 = vmatprep.subr.mxu0 0.0
    %3146 = vmatpush1.msra.mxu0 %v1684
    %3147 = vmatprep.subr.mxu0 0.0
    %3148 = vmatpush1.msra.mxu0 %v1685
    %3149 = vmatprep.subr.mxu0 0.0
    %3150 = vmatpush1.msra.mxu0 %v1686
    %3151 = vmatprep.subr.mxu0 0.0
    %3152 = vmatpush1.msra.mxu0 %v1687
    %3153 = vmatprep.subr.mxu0 0.0
    %3154 = vmatpush1.msra.mxu0 %v1688
    %3155 = vmatprep.subr.mxu0 0.0
    %3156 = vmatpush1.msra.mxu0 %v1689
    %3157 = vmatprep.subr.mxu0 0.0
    %3158 = vmatpush1.msra.mxu0 %v1690
    %3159 = vmatprep.subr.mxu0 0.0
    %3160 = vmatpush1.msra.mxu0 %v1691
    %3161 = vmatprep.subr.mxu0 0.0
    %3162 = vmatpush1.msra.mxu0 0.0
    %3163 = vmatprep.subr.mxu0 0.0
    %3164 = vmatpush1.msra.mxu0 0.0
    %3165 = vmatprep.subr.mxu0 0.0
    %3166 = vmatpush1.msra.mxu0 0.0
    %3167 = vmatprep.subr.mxu0 0.0
    %3168 = vmatpush1.msra.mxu0 0.0
    %3169 = vmatprep.subr.mxu0 0.0
    %3170 = vmatpush1.msra.mxu0 0.0
    %3171 = vmatprep.subr.mxu0 0.0
    %3172 = vmatpush1.msra.mxu0 0.0
    %3173 = vmatprep.subr.mxu0 0.0
    %3174 = vmatpush1.msra.mxu0 0.0
    %3175 = vmatprep.subr.mxu0 0.0
    %3176 = vmatpush1.msra.mxu0 0.0
    %3177 = vmatprep.subr.mxu0 0.0
    %3178 = vmatpush1.msra.mxu0 0.0
    %3179 = vmatprep.subr.mxu0 0.0
    %3180 = vmatpush1.msra.mxu0 0.0
    %3181 = vmatprep.subr.mxu0 0.0
    %3182 = vmatpush1.msra.mxu0 0.0
    %3183 = vmatprep.subr.mxu0 0.0
    %3184 = vmatpush1.msra.mxu0 0.0
    %3185 = vmatprep.subr.mxu0 0.0
    %3186 = vmatpush1.msra.mxu0 0.0
    %3187 = vmatprep.subr.mxu0 0.0
    %3188 = vmatpush1.msra.mxu0 0.0
    %3189 = vmatprep.subr.mxu0 0.0
    %3190 = vmatpush1.msra.mxu0 0.0
    %3191 = vmatprep.subr.mxu0 0.0
    %3192 = vmatpush1.msra.mxu0 0.0
    %3193 = vmatprep.subr.mxu0 0.0
    %3194 = vmatpush1.msra.mxu0 0.0
    %3195 = vmatprep.subr.mxu0 0.0
    %3196 = vmatpush1.msra.mxu0 0.0
    %3197 = vmatprep.subr.mxu0 0.0
    %3198 = vmatpush1.msra.mxu0 0.0
    %3199 = vmatprep.subr.mxu0 0.0
    %3200 = vmatpush1.msra.mxu0 0.0
    %3201 = vmatprep.subr.mxu0 0.0
    %3202 = vmatpush1.msra.mxu0 0.0
    %3203 = vmatprep.subr.mxu0 0.0
    %3204 = vmatpush1.msra.mxu0 0.0
    %3205 = vmatprep.subr.mxu0 0.0
    %3206 = vmatpush1.msra.mxu0 0.0
    %3207 = vmatprep.subr.mxu0 0.0
    %3208 = vmatpush1.msra.mxu0 0.0
    %3209 = vmatprep.mubr.f32.mxu0 0.0
    %3210 = vmatmul.mubr.f32.gmra.mrb[0].mxu0 %v3140
    %v3211 = vpop.f32.mrb[0].mxu0
    %v3212 = vadd.f32 %v3138, %v3211
    %v3213 = vpop.f32.mrb[0].mxu0
    %3214 = vmatprep.mubr.f32.mxu0 0.0
    %3215 = vmatmul.mubr.f32.gmra.mrb[0].mxu0 %v3143
    %v3216 = vpop.f32.mrb[0].mxu0
    %v3217 = vadd.f32 %v3138, %v3216
    %v3218 = vpop.f32.mrb[0].mxu0
    %3219 = vdwg.mxu0
    %v3220 = vadd.f32 %v3046, %v3212
    %v3221 = vadd.f32 %v3047, %v3217
    %v3222 = vsel %vm100, %v3220, 0.0
    %3223 = vadd.xlane.f32.xlu0 %v3222
    %v3224 = vpop.xlane.xlu0 %3223
    %v3225 = vsel %vm100, %v3221, 0.0
    %3226 = vadd.xlane.f32.xlu0 %v3225
    %v3227 = vpop.xlane.xlu0 %3226
    %v3228 = vmul.f32 %v3224, %v1421
    %v3229 = vmul.f32 %v3227, %v1421
    %v3230 = vsub.f32 %v3220, %v3228
    %v3231 = vsub.f32 %v3221, %v3229
    %v3232 = vmul.f32 %v3230, %v3230
    %v3233 = vmul.f32 %v3231, %v3231
    %v3234 = vsel %vm100, %v3232, 0.0
    %3235 = vadd.xlane.f32.xlu0 %v3234
    %v3236 = vpop.xlane.xlu0 %3235
    %v3237 = vsel %vm100, %v3233, 0.0
    %3238 = vadd.xlane.f32.xlu0 %v3237
    %v3239 = vpop.xlane.xlu0 %3238
    %v3240 = vmul.f32 %v3236, %v1421
    %v3241 = vmul.f32 %v3239, %v1421
    %v3242 = vadd.f32 %v3240, 1e-05
    %v3243 = vadd.f32 %v3241, 1e-05
    %v3244 = vrsqrt.pop %v3242
    %v3245 = vrsqrt.pop %v3243
    %v3246 = vmul.f32 %v3230, %v3244
    %v3247 = vmul.f32 %v3231, %v3245
    %v3248 = vlaneseq
    %v3249 = vshrl.u32 %v3248, 7
    %v3250 = vsub.s32 0, %v3249
    %v3251 = vrot.slane %v24, %v3250
    %v3252 = vmul.f32 %v3246, %v3251
    %v3253 = vmul.f32 %v3247, %v3251
    %v3254 = vlaneseq
    %v3255 = vshrl.u32 %v3254, 7
    %v3256 = vsub.s32 1, %v3255
    %v3257 = vrot.slane %v24, %v3256
    %v3258 = vadd.f32 %v3252, %v3257
    %v3259 = vadd.f32 %v3253, %v3257
    %v3260 = vsel %vm100, %v3258, 0.0
    %3261 = vadd.xlane.f32.xlu0 %v3260
    %v3262 = vpop.xlane.xlu0 %3261
    %v3263 = vsel %vm100, %v3259, 0.0
    %3264 = vadd.xlane.f32.xlu0 %v3263
    %v3265 = vpop.xlane.xlu0 %3264
    %v3266 = vmul.f32 %v3262, %v1421
    %v3267 = vmul.f32 %v3265, %v1421
    %v3268 = vsub.f32 %v3258, %v3266
    %v3269 = vsub.f32 %v3259, %v3267
    %v3270 = vmul.f32 %v3268, %v3268
    %v3271 = vmul.f32 %v3269, %v3269
    %v3272 = vsel %vm100, %v3270, 0.0
    %3273 = vadd.xlane.f32.xlu0 %v3272
    %v3274 = vpop.xlane.xlu0 %3273
    %v3275 = vsel %vm100, %v3271, 0.0
    %3276 = vadd.xlane.f32.xlu0 %v3275
    %v3277 = vpop.xlane.xlu0 %3276
    %v3278 = vmul.f32 %v3274, %v1421
    %v3279 = vmul.f32 %v3277, %v1421
    %v3280 = vadd.f32 %v3278, 1e-05
    %v3281 = vadd.f32 %v3279, 1e-05
    %v3282 = vrsqrt.pop %v3280
    %v3283 = vrsqrt.pop %v3281
    %v3284 = vmul.f32 %v3268, %v3282
    %v3285 = vmul.f32 %v3269, %v3283
    %v3286 = vlaneseq
    %v3287 = vshrl.u32 %v3286, 7
    %v3288 = vsub.s32 2, %v3287
    %v3289 = vrot.slane %v24, %v3288
    %v3290 = vmul.f32 %v3284, %v3289
    %v3291 = vmul.f32 %v3285, %v3289
    %v3292 = vlaneseq
    %v3293 = vshrl.u32 %v3292, 7
    %v3294 = vsub.s32 3, %v3293
    %v3295 = vrot.slane %v24, %v3294
    %v3296 = vadd.f32 %v3290, %v3295
    %v3297 = vadd.f32 %v3291, %v3295
    %3298 = vst.msk [vmem:[#allocation2] sm:$0xff] %vm100, %v3296
    %3299 = vst.msk [vmem:[#allocation2 + $0x8] sm:$0xff] %vm100, %v3297
    // Predicated region
    $region18: #{tpu_custom_call.1} parent=1 // pred_check
      _
    $region19: #{tpu_custom_call.1} parent=1 // pred_check_branch
      %3301 = sbr.rel (0) target = $region21
    $region20: #{tpu_custom_call.1} parent=1 // pred_region
      %s3303 = ssub.s32 256, 256
      %3304 = vsyncadd [#allocation3], %s3303
      %s3305 = sshll.u32 [#allocation2], 4
      %s3306 = int_to_ptr.vmem [resolvable:$true] %s3305
      %3311 = dma.vmem_to_hbm [thread:$0]  %s3306, 256, %s4, [#allocation3], 128, 128, 8
    $region21: #{tpu_custom_call.1} parent=1 // pred_fallthru
      _
    // Predicated region
    $region22: #{tpu_custom_call.1} parent=1 // pred_check
      _
    $region23: #{tpu_custom_call.1} parent=1 // pred_check_branch
      %3313 = sbr.rel (0) target = $region25
    $region24: #{tpu_custom_call.1} parent=1 // pred_region
      %3314 = dma.done [#allocation3], 256
    $region25: #{tpu_custom_call.1} parent=1 // pred_fallthru
      _
    %3315 = vsyncpa [#allocation3], 1

</llo_original>
